<compile_context>
chip_gen: v5e
topology: v5e:2x2
jax: 0.10.0
libtpu: 0.0.40
codegen_flags: <defaults>
</compile_context>

<pallas_src>
import math
from functools import partial

import jax
import jax.numpy as jnp
from jax.experimental import pallas as pl
from jax.experimental.pallas import tpu as pltpu

EPS = 1e-5
NEG_SLOPE = 0.1
BIG = 1e30
LANE = 128


def _vmem():
    return pl.BlockSpec(memory_space=pltpu.MemorySpace.VMEM)


def _round_up(v, m):
    return -(-v // m) * m


# ----------------------------- fused Pallas kernel -----------------------------

def fused_forward_kernel(*refs, batch, node_num, heads, cp_hidden, cp_embed):
    """refs: [x, a_int, mask, gcn1(4), gcn2(4), tc1(10), tc2(10), tc3(10),
    pred_w, pred_b, out]."""
    o_ref = refs[-1]
    it = iter(refs[:-1])
    x_ref = next(it)            # [N, Fp]   f32 (zero-padded node features)
    a_ref = next(it)            # [N, N]    bf16 block-diag normalized adjacency
    mask_ref = next(it)         # [N, N]    int8, mask[i, j] = 1 iff edge j -> i
    gcn1 = [next(it) for _ in range(4)]
    gcn2 = [next(it) for _ in range(4)]
    tc1 = [next(it) for _ in range(10)]
    tc2 = [next(it) for _ in range(10)]
    tc3 = [next(it) for _ in range(10)]
    wpred_ref = next(it)
    bpred_ref = next(it)

    B, n, H = batch, node_num, heads
    N = B * n
    bf16 = jnp.bfloat16
    f32 = jnp.float32

    x = x_ref[...]
    a_bf = a_ref[...]                                    # bf16 [N, N]

    # Hoisted once (graph structure only), reused by all 3 transformer layers.
    m = mask_ref[...].astype(f32)                        # {0, 1}
    bias = (m - 1.0) * f32(BIG)                          # 0 where edge, -1e30 otherwise (f32)
    row_has = jnp.max(m, axis=-1, keepdims=True)         # [N, 1]: 1 if node has any in-edge

    def bn_leaky(h, g_ref, be_ref):
        # BatchNorm1d training mode (biased batch stats over all nodes), one-pass
        # sum / sum-of-squares, then LeakyReLU(0.1).  All f32.
        inv_n = f32(1.0 / h.shape[0])
        mean = jnp.sum(h, axis=0, keepdims=True) * inv_n
        ex2 = jnp.sum(h * h, axis=0, keepdims=True) * inv_n
        var = jnp.maximum(ex2 - mean * mean, 0.0)
        hn = (h - mean) * jax.lax.rsqrt(var + EPS) * g_ref[...] + be_ref[...]
        return jnp.where(hn > 0, hn, NEG_SLOPE * hn)

    def gcn_layer(h, w_ref, b_ref, g_ref, be_ref):
        # LeakyReLU(BN( A_norm @ (h W + b) )), A_norm flattened block-diagonal [N, N].
        t = jnp.dot(h.astype(bf16), w_ref[...], preferred_element_type=f32) + b_ref[...]
        t = jnp.dot(a_bf, t.astype(bf16), preferred_element_type=f32)
        return bn_leaky(t, g_ref, be_ref)

    def transformer_layer(h, p, cp):
        # TransformerConv (concat=True, beta=False, root_weight=True) + BN + LeakyReLU.
        # Wq/bq already pre-scaled by 1/sqrt(out_ch).  Per-head weights: [H, Fin_p, cp].
        wq, bq, wk, bk, wv, bv, ws, bs, g_ref, be_ref = p
        hb = h.astype(bf16)
        skip = jnp.dot(hb, ws[...], preferred_element_type=f32) + bs[...]     # [N, H*cp]
        head_outs = []
        for hh in range(H):                      # static unroll; head = leading-axis ref index
            q = jnp.dot(hb, wq[hh], preferred_element_type=f32) + bq[hh]      # [N, cp]
            k = jnp.dot(hb, wk[hh], preferred_element_type=f32) + bk[hh]
            v = jnp.dot(hb, wv[hh], preferred_element_type=f32) + bv[hh]
            s = jnp.einsum('ic,jc->ij', q.astype(bf16), k.astype(bf16),
                           preferred_element_type=f32) + bias                 # [N, N] f32
            rowmax = jnp.max(s, axis=-1, keepdims=True)
            es = jnp.exp(s - rowmax)             # masked entries underflow to exactly 0
            denom = jnp.sum(es, axis=-1, keepdims=True)   # >= 1 always
            alpha = es * (pl.reciprocal(denom, approx=True) * row_has)
            head_outs.append(jnp.dot(alpha.astype(bf16), v.astype(bf16),
                                     preferred_element_type=f32))             # [N, cp]
        attn = jnp.concatenate(head_outs, axis=1)        # [N, H*cp], cp-aligned concat
        return bn_leaky(attn + skip, g_ref, be_ref)

    h = gcn_layer(x, *gcn1)
    h = gcn_layer(h, *gcn2)
    h = transformer_layer(h, tc1, cp_hidden)
    h = transformer_layer(h, tc2, cp_hidden)
    h = transformer_layer(h, tc3, cp_embed)

    # PowerMeanAggregation(learn=True, p=1.0): clamp(0,100) -> mean over nodes ->
    # clamp(0,100) (pow(1)/pow(1) are identity), then graph-prediction Linear.
    d = H * cp_embed
    hb3 = jnp.clip(h.reshape(B, n, d), 0.0, 100.0)
    pooled = jnp.clip(jnp.mean(hb3, axis=1), 0.0, 100.0)                      # [B, d]
    o_ref[...] = (jnp.dot(pooled.astype(bf16), wpred_ref[...],
                          preferred_element_type=f32) + bpred_ref[...])


# ----------------------------- graph preprocessing (plain JAX glue) -----------------------------

def attn_mask_flat(edge_index, N):
    # mask[i, j] = 1 iff edge j -> i exists (PyG flow: source_to_target).
    src, dst = edge_index[0], edge_index[1]
    m = jnp.zeros((N, N), jnp.float32).at[dst, src].set(1.0)
    return m.astype(jnp.int8)


def gcn_norm_adj_flat(edge_index, N):
    # add_self_loops + symmetric deg^-1/2 (in-degree) normalization, as a dense
    # [N, N] block-diagonal matrix (edges never cross graph boundaries).
    loop = jnp.arange(N, dtype=edge_index.dtype)
    src = jnp.concatenate([edge_index[0], loop])
    dst = jnp.concatenate([edge_index[1], loop])
    deg = jnp.zeros((N,), jnp.float32).at[dst].add(1.0)
    dinv = jax.lax.rsqrt(deg)                     # deg >= 1 because of self loops
    vals = dinv[src] * dinv[dst]
    return jnp.zeros((N, N), jnp.float32).at[dst, src].add(vals)


# ----------------------------- parameter padding (lane-dense layout) -----------------------------

def _pad2(a, rows, cols):
    return jnp.zeros((rows, cols), jnp.float32).at[:a.shape[0], :a.shape[1]].set(a)


def _headed_cols(a, H, C, Cp):
    # [..., H*C] -> [..., H*Cp]: head block h placed at columns [h*Cp, h*Cp+C).
    out = jnp.zeros(a.shape[:-1] + (H * Cp,), jnp.float32)
    for h in range(H):
        out = out.at[..., h * Cp:h * Cp + C].set(a[..., h * C:(h + 1) * C])
    return out


def _headed_rows(a, H, C, Cp):
    # [H*C, F] -> [H*Cp, F]: head block h placed at rows [h*Cp, h*Cp+C).
    out = jnp.zeros((H * Cp, a.shape[1]), jnp.float32)
    for h in range(H):
        out = out.at[h * Cp:h * Cp + C, :].set(a[h * C:(h + 1) * C, :])
    return out


def _prep_gcn(p, fin, fout, fin_p, fout_p):
    w, b, g, be = p
    return (_pad2(w, fin_p, fout_p).astype(jnp.bfloat16),
            _pad2(b, 1, fout_p), _pad2(g, 1, fout_p), _pad2(be, 1, fout_p))


def _prep_tc(p, H, out_c, cp, pad_rows_fn):
    wq, bq, wk, bk, wv, bv, ws, bs, g, be = p
    scale = jnp.float32(1.0 / math.sqrt(out_c))     # fold 1/sqrt(d) into Wq/bq
    wq, bq = wq * scale, bq * scale

    def per_head(w, b):
        w = pad_rows_fn(w)                           # [Fin_p, H*out_c]
        fin_p = w.shape[0]
        wh = jnp.zeros((H, fin_p, cp), jnp.float32)
        bh = jnp.zeros((H, 1, cp), jnp.float32)
        for h in range(H):
            wh = wh.at[h, :, :out_c].set(w[:, h * out_c:(h + 1) * out_c])
            bh = bh.at[h, :, :out_c].set(b[:, h * out_c:(h + 1) * out_c])
        return wh.astype(jnp.bfloat16), bh

    wqh, bqh = per_head(wq, bq)
    wkh, bkh = per_head(wk, bk)
    wvh, bvh = per_head(wv, bv)
    ws_p = _headed_cols(pad_rows_fn(ws), H, out_c, cp).astype(jnp.bfloat16)
    bs_p = _headed_cols(bs, H, out_c, cp)
    g_p = _headed_cols(g, H, out_c, cp)
    be_p = _headed_cols(be, H, out_c, cp)
    return (wqh, bqh, wkh, bkh, wvh, bvh, ws_p, bs_p, g_p, be_p)


# ----------------------------- forward wrapper -----------------------------

def graphformer_decoder_forward(params, x, edge_index, internal_edge_index, *,
                                node_num, num_head, hidden_dim, embedding_dim, num_class):
    N = x.shape[0]
    batch = N // node_num
    H = num_head
    fin = x.shape[1]

    assert LANE % H == 0, "num_head must divide 128 for the padded per-head layout"
    fin_p = _round_up(fin, LANE)
    cp_hidden = _round_up(H * hidden_dim, LANE) // H
    cp_embed = _round_up(H * embedding_dim, LANE) // H
    ncls_p = _round_up(num_class, LANE)

    a_flat = gcn_norm_adj_flat(internal_edge_index, N).astype(jnp.bfloat16)
    mask = attn_mask_flat(edge_index, N)
    x_p = _pad2(x, N, fin_p)

    gcn1_p = _prep_gcn(params["gcn1"], fin, fin, fin_p, fin_p)
    gcn2_p = _prep_gcn(params["gcn2"], fin, fin, fin_p, fin_p)

    pad_plain = lambda w: _pad2(w, fin_p, w.shape[1])
    pad_headed_hidden = lambda w: _headed_rows(w, H, hidden_dim, cp_hidden)

    tc1_p = _prep_tc(params["tc1"], H, hidden_dim, cp_hidden, pad_plain)
    tc2_p = _prep_tc(params["tc2"], H, hidden_dim, cp_hidden, pad_headed_hidden)
    tc3_p = _prep_tc(params["tc3"], H, embedding_dim, cp_embed, pad_headed_hidden)

    wpred, bpred = params["pred"]
    wpred_p = _pad2(_headed_rows(wpred, H, embedding_dim, cp_embed),
                    H * cp_embed, ncls_p).astype(jnp.bfloat16)
    bpred_p = _pad2(bpred, 1, ncls_p)

    inputs = (x_p, a_flat, mask,
              *gcn1_p, *gcn2_p, *tc1_p, *tc2_p, *tc3_p,
              wpred_p, bpred_p)

    kernel = partial(fused_forward_kernel, batch=batch, node_num=node_num,
                     heads=H, cp_hidden=cp_hidden, cp_embed=cp_embed)

    # Advisory cost hint so XLA schedules around the custom call.
    flops = 2 * 2 * (N * fin_p * fin_p + N * N * fin_p)
    for f_in, cp in ((fin_p, cp_hidden), (H * cp_hidden, cp_hidden), (H * cp_hidden, cp_embed)):
        flops += 2 * (H * (3 * N * f_in * cp + 2 * N * N * cp) + N * f_in * H * cp)
    flops += 2 * batch * (H * cp_embed) * ncls_p
    bytes_accessed = sum(int(a.size) * a.dtype.itemsize for a in inputs) + batch * ncls_p * 4
    cost = pl.CostEstimate(flops=int(flops), transcendentals=int(3 * H * N * N),
                           bytes_accessed=int(bytes_accessed))

    out_p = pl.pallas_call(
        kernel,
        out_shape=jax.ShapeDtypeStruct((batch, ncls_p), jnp.float32),
        in_specs=[_vmem()] * len(inputs),
        out_specs=_vmem(),
        compiler_params=pltpu.CompilerParams(vmem_limit_bytes=32 * 1024 * 1024),
        cost_estimate=cost,
    )(*inputs)

    logits = out_p[:, :num_class]
    ypred = jnp.argmax(logits, axis=1)
    return logits, ypred


# ----------------------------- deterministic params / inputs -----------------------------

def linear_params(key, fan_in, fan_out):
    kw, kb = jax.random.split(key)
    bound = 1.0 / math.sqrt(fan_in)
    w = jax.random.uniform(kw, (fan_in, fan_out), jnp.float32, -bound, bound)
    b = jax.random.uniform(kb, (1, fan_out), jnp.float32, -bound, bound)
    return w, b


def build_ring_edges(batch, node_num):
    edges = []
    for bi in range(batch):
        off = bi * node_num
        for i in range(node_num):
            j = (i + 1) % node_num
            edges.append((off + i, off + j))
            edges.append((off + j, off + i))
    return jnp.array(edges, dtype=jnp.int32).T  # [2, E] (row0=src, row1=dst)


def build_star_edges(batch, node_num):
    edges = []
    for bi in range(batch):
        off = bi * node_num
        for i in range(1, node_num):
            edges.append((off, off + i))
            edges.append((off + i, off))
    return jnp.array(edges, dtype=jnp.int32).T


if __name__ == "__main__":
    B, node_num = 2, 8
    input_dim, hidden_dim, embedding_dim = 16, 16, 16
    num_head, num_class = 2, 4
    N = B * node_num

    key = jax.random.PRNGKey(0)
    keys = jax.random.split(key, 8)
    x = jax.random.normal(keys[0], (N, input_dim), jnp.float32)

    params = {}
    # GCN inside the decoder is GCN(input_dim, input_dim, input_dim)
    w, b = linear_params(keys[1], input_dim, input_dim)
    params["gcn1"] = (w, b, jnp.ones((1, input_dim), jnp.float32),
                      jnp.zeros((1, input_dim), jnp.float32))
    w, b = linear_params(keys[2], input_dim, input_dim)
    params["gcn2"] = (w, b, jnp.ones((1, input_dim), jnp.float32),
                      jnp.zeros((1, input_dim), jnp.float32))

    def tc_params(k, fin, out_ch):
        ks = jax.random.split(k, 4)
        hw = num_head * out_ch
        wq, bq = linear_params(ks[0], fin, hw)
        wk, bk = linear_params(ks[1], fin, hw)
        wv, bv = linear_params(ks[2], fin, hw)
        ws, bs = linear_params(ks[3], fin, hw)
        return (wq, bq, wk, bk, wv, bv, ws, bs,
                jnp.ones((1, hw), jnp.float32), jnp.zeros((1, hw), jnp.float32))

    params["tc1"] = tc_params(keys[3], input_dim, hidden_dim)
    params["tc2"] = tc_params(keys[4], hidden_dim * num_head, hidden_dim)
    params["tc3"] = tc_params(keys[5], hidden_dim * num_head, embedding_dim)
    params["pred"] = linear_params(keys[6], embedding_dim * num_head, num_class)

    edge_index = build_ring_edges(B, node_num)           # [2, 32]
    internal_edge_index = build_star_edges(B, node_num)  # [2, 28]

    fwd = jax.jit(partial(graphformer_decoder_forward,
                          node_num=node_num, num_head=num_head,
                          hidden_dim=hidden_dim, embedding_dim=embedding_dim,
                          num_class=num_class))
    logits, ypred = fwd(params, x, edge_index, internal_edge_index)
    jax.block_until_ready((logits, ypred))
    assert logits.shape == (B, num_class) and ypred.shape == (B,)
    print("KERNEL_OK")
</pallas_src>

<mosaic_0001>
module attributes {stable_mosaic.version = 11 : i64} {
  func.func @fused_forward_kernel(%arg0: memref<16x128xf32, #tpu.memory_space<vmem>>, %arg1: memref<16x16xbf16, #tpu.memory_space<vmem>>, %arg2: memref<16x16xi8, #tpu.memory_space<vmem>>, %arg3: memref<128x128xbf16, #tpu.memory_space<vmem>>, %arg4: memref<1x128xf32, #tpu.memory_space<vmem>>, %arg5: memref<1x128xf32, #tpu.memory_space<vmem>>, %arg6: memref<1x128xf32, #tpu.memory_space<vmem>>, %arg7: memref<128x128xbf16, #tpu.memory_space<vmem>>, %arg8: memref<1x128xf32, #tpu.memory_space<vmem>>, %arg9: memref<1x128xf32, #tpu.memory_space<vmem>>, %arg10: memref<1x128xf32, #tpu.memory_space<vmem>>, %arg11: memref<2x128x64xbf16, #tpu.memory_space<vmem>>, %arg12: memref<2x1x64xf32, #tpu.memory_space<vmem>>, %arg13: memref<2x128x64xbf16, #tpu.memory_space<vmem>>, %arg14: memref<2x1x64xf32, #tpu.memory_space<vmem>>, %arg15: memref<2x128x64xbf16, #tpu.memory_space<vmem>>, %arg16: memref<2x1x64xf32, #tpu.memory_space<vmem>>, %arg17: memref<128x128xbf16, #tpu.memory_space<vmem>>, %arg18: memref<1x128xf32, #tpu.memory_space<vmem>>, %arg19: memref<1x128xf32, #tpu.memory_space<vmem>>, %arg20: memref<1x128xf32, #tpu.memory_space<vmem>>, %arg21: memref<2x128x64xbf16, #tpu.memory_space<vmem>>, %arg22: memref<2x1x64xf32, #tpu.memory_space<vmem>>, %arg23: memref<2x128x64xbf16, #tpu.memory_space<vmem>>, %arg24: memref<2x1x64xf32, #tpu.memory_space<vmem>>, %arg25: memref<2x128x64xbf16, #tpu.memory_space<vmem>>, %arg26: memref<2x1x64xf32, #tpu.memory_space<vmem>>, %arg27: memref<128x128xbf16, #tpu.memory_space<vmem>>, %arg28: memref<1x128xf32, #tpu.memory_space<vmem>>, %arg29: memref<1x128xf32, #tpu.memory_space<vmem>>, %arg30: memref<1x128xf32, #tpu.memory_space<vmem>>, %arg31: memref<2x128x64xbf16, #tpu.memory_space<vmem>>, %arg32: memref<2x1x64xf32, #tpu.memory_space<vmem>>, %arg33: memref<2x128x64xbf16, #tpu.memory_space<vmem>>, %arg34: memref<2x1x64xf32, #tpu.memory_space<vmem>>, %arg35: memref<2x128x64xbf16, #tpu.memory_space<vmem>>, %arg36: memref<2x1x64xf32, #tpu.memory_space<vmem>>, %arg37: memref<128x128xbf16, #tpu.memory_space<vmem>>, %arg38: memref<1x128xf32, #tpu.memory_space<vmem>>, %arg39: memref<1x128xf32, #tpu.memory_space<vmem>>, %arg40: memref<1x128xf32, #tpu.memory_space<vmem>>, %arg41: memref<128x128xbf16, #tpu.memory_space<vmem>>, %arg42: memref<1x128xf32, #tpu.memory_space<vmem>>, %arg43: memref<2x128xf32, #tpu.memory_space<vmem>>) attributes {dimension_semantics = [], scalar_prefetch = 0 : i64, scratch_operands = 0 : i64, tpu.core_type = #tpu.core_type<tc>} {
    %c0 = arith.constant 0 : index
    %c0_0 = arith.constant 0 : index
    %0 = vector.load %arg0[%c0, %c0_0] : memref<16x128xf32, #tpu.memory_space<vmem>>, vector<16x128xf32>
    %c0_1 = arith.constant 0 : index
    %c0_2 = arith.constant 0 : index
    %1 = vector.load %arg1[%c0_1, %c0_2] : memref<16x16xbf16, #tpu.memory_space<vmem>>, vector<16x16xbf16>
    %c0_3 = arith.constant 0 : index
    %c0_4 = arith.constant 0 : index
    %2 = vector.load %arg2[%c0_3, %c0_4] : memref<16x16xi8, #tpu.memory_space<vmem>>, vector<16x16xi8>
    %3 = arith.sitofp %2 : vector<16x16xi8> to vector<16x16xf32>
    %cst = arith.constant 1.000000e+00 : f32
    %4 = vector.broadcast %cst : f32 to vector<16x16xf32>
    %5 = arith.subf %3, %4 : vector<16x16xf32>
    %cst_5 = arith.constant 1.000000e+30 : f32
    %6 = vector.broadcast %cst_5 : f32 to vector<16x16xf32>
    %7 = arith.mulf %5, %6 : vector<16x16xf32>
    %cst_6 = arith.constant dense<0xFF800000> : vector<16xf32>
    %8 = vector.multi_reduction <maximumf>, %3, %cst_6 [1] : vector<16x16xf32> to vector<16xf32>
    %9 = vector.shape_cast %8 : vector<16xf32> to vector<16x1xf32>
    %10 = arith.truncf %0 : vector<16x128xf32> to vector<16x128xbf16>
    %c0_7 = arith.constant 0 : index
    %c0_8 = arith.constant 0 : index
    %11 = vector.load %arg3[%c0_7, %c0_8] : memref<128x128xbf16, #tpu.memory_space<vmem>>, vector<128x128xbf16>
    %cst_9 = arith.constant dense<0.000000e+00> : vector<16x128xf32>
    %12 = tpu.matmul %10, %11, %cst_9 {dimension_numbers = #tpu.dot_dimension_numbers<[1], [0], [0], [1], [0, 0, 1, 1], [], []>} : vector<16x128xbf16>, vector<128x128xbf16>, vector<16x128xf32> -> vector<16x128xf32>
    %c0_10 = arith.constant 0 : index
    %c0_11 = arith.constant 0 : index
    %13 = vector.load %arg4[%c0_10, %c0_11] : memref<1x128xf32, #tpu.memory_space<vmem>>, vector<1x128xf32>
    %14 = vector.broadcast %13 : vector<1x128xf32> to vector<16x128xf32>
    %15 = arith.addf %12, %14 : vector<16x128xf32>
    %16 = arith.truncf %15 : vector<16x128xf32> to vector<16x128xbf16>
    %cst_12 = arith.constant dense<0.000000e+00> : vector<16x128xf32>
    %17 = tpu.matmul %1, %16, %cst_12 {dimension_numbers = #tpu.dot_dimension_numbers<[1], [0], [0], [1], [0, 0, 1, 1], [], []>} : vector<16x16xbf16>, vector<16x128xbf16>, vector<16x128xf32> -> vector<16x128xf32>
    %cst_13 = arith.constant dense<0.000000e+00> : vector<128xf32>
    %18 = vector.multi_reduction <add>, %17, %cst_13 [0] : vector<16x128xf32> to vector<128xf32>
    %19 = vector.shape_cast %18 : vector<128xf32> to vector<1x128xf32>
    %cst_14 = arith.constant 6.250000e-02 : f32
    %20 = vector.broadcast %cst_14 : f32 to vector<1x128xf32>
    %21 = arith.mulf %19, %20 : vector<1x128xf32>
    %22 = arith.mulf %17, %17 : vector<16x128xf32>
    %cst_15 = arith.constant dense<0.000000e+00> : vector<128xf32>
    %23 = vector.multi_reduction <add>, %22, %cst_15 [0] : vector<16x128xf32> to vector<128xf32>
    %24 = vector.shape_cast %23 : vector<128xf32> to vector<1x128xf32>
    %cst_16 = arith.constant 6.250000e-02 : f32
    %25 = vector.broadcast %cst_16 : f32 to vector<1x128xf32>
    %26 = arith.mulf %24, %25 : vector<1x128xf32>
    %27 = arith.mulf %21, %21 : vector<1x128xf32>
    %28 = arith.subf %26, %27 : vector<1x128xf32>
    %cst_17 = arith.constant 0.000000e+00 : f32
    %29 = vector.broadcast %cst_17 : f32 to vector<1x128xf32>
    %30 = arith.maximumf %28, %29 : vector<1x128xf32>
    %31 = vector.broadcast %21 : vector<1x128xf32> to vector<16x128xf32>
    %32 = arith.subf %17, %31 : vector<16x128xf32>
    %cst_18 = arith.constant 9.99999974E-6 : f32
    %33 = vector.broadcast %cst_18 : f32 to vector<1x128xf32>
    %34 = arith.addf %30, %33 : vector<1x128xf32>
    %35 = math.rsqrt %34 : vector<1x128xf32>
    %36 = vector.broadcast %35 : vector<1x128xf32> to vector<16x128xf32>
    %37 = arith.mulf %32, %36 : vector<16x128xf32>
    %c0_19 = arith.constant 0 : index
    %c0_20 = arith.constant 0 : index
    %38 = vector.load %arg5[%c0_19, %c0_20] : memref<1x128xf32, #tpu.memory_space<vmem>>, vector<1x128xf32>
    %39 = vector.broadcast %38 : vector<1x128xf32> to vector<16x128xf32>
    %40 = arith.mulf %37, %39 : vector<16x128xf32>
    %c0_21 = arith.constant 0 : index
    %c0_22 = arith.constant 0 : index
    %41 = vector.load %arg6[%c0_21, %c0_22] : memref<1x128xf32, #tpu.memory_space<vmem>>, vector<1x128xf32>
    %42 = vector.broadcast %41 : vector<1x128xf32> to vector<16x128xf32>
    %43 = arith.addf %40, %42 : vector<16x128xf32>
    %cst_23 = arith.constant 0.000000e+00 : f32
    %44 = vector.broadcast %cst_23 : f32 to vector<16x128xf32>
    %45 = arith.cmpf ogt, %43, %44 : vector<16x128xf32>
    %cst_24 = arith.constant 1.000000e-01 : f32
    %46 = vector.broadcast %cst_24 : f32 to vector<16x128xf32>
    %47 = arith.mulf %46, %43 : vector<16x128xf32>
    %48 = arith.select %45, %43, %47 : vector<16x128xi1>, vector<16x128xf32>
    %49 = arith.truncf %48 : vector<16x128xf32> to vector<16x128xbf16>
    %c0_25 = arith.constant 0 : index
    %c0_26 = arith.constant 0 : index
    %50 = vector.load %arg7[%c0_25, %c0_26] : memref<128x128xbf16, #tpu.memory_space<vmem>>, vector<128x128xbf16>
    %cst_27 = arith.constant dense<0.000000e+00> : vector<16x128xf32>
    %51 = tpu.matmul %49, %50, %cst_27 {dimension_numbers = #tpu.dot_dimension_numbers<[1], [0], [0], [1], [0, 0, 1, 1], [], []>} : vector<16x128xbf16>, vector<128x128xbf16>, vector<16x128xf32> -> vector<16x128xf32>
    %c0_28 = arith.constant 0 : index
    %c0_29 = arith.constant 0 : index
    %52 = vector.load %arg8[%c0_28, %c0_29] : memref<1x128xf32, #tpu.memory_space<vmem>>, vector<1x128xf32>
    %53 = vector.broadcast %52 : vector<1x128xf32> to vector<16x128xf32>
    %54 = arith.addf %51, %53 : vector<16x128xf32>
    %55 = arith.truncf %54 : vector<16x128xf32> to vector<16x128xbf16>
    %cst_30 = arith.constant dense<0.000000e+00> : vector<16x128xf32>
    %56 = tpu.matmul %1, %55, %cst_30 {dimension_numbers = #tpu.dot_dimension_numbers<[1], [0], [0], [1], [0, 0, 1, 1], [], []>} : vector<16x16xbf16>, vector<16x128xbf16>, vector<16x128xf32> -> vector<16x128xf32>
    %cst_31 = arith.constant dense<0.000000e+00> : vector<128xf32>
    %57 = vector.multi_reduction <add>, %56, %cst_31 [0] : vector<16x128xf32> to vector<128xf32>
    %58 = vector.shape_cast %57 : vector<128xf32> to vector<1x128xf32>
    %cst_32 = arith.constant 6.250000e-02 : f32
    %59 = vector.broadcast %cst_32 : f32 to vector<1x128xf32>
    %60 = arith.mulf %58, %59 : vector<1x128xf32>
    %61 = arith.mulf %56, %56 : vector<16x128xf32>
    %cst_33 = arith.constant dense<0.000000e+00> : vector<128xf32>
    %62 = vector.multi_reduction <add>, %61, %cst_33 [0] : vector<16x128xf32> to vector<128xf32>
    %63 = vector.shape_cast %62 : vector<128xf32> to vector<1x128xf32>
    %cst_34 = arith.constant 6.250000e-02 : f32
    %64 = vector.broadcast %cst_34 : f32 to vector<1x128xf32>
    %65 = arith.mulf %63, %64 : vector<1x128xf32>
    %66 = arith.mulf %60, %60 : vector<1x128xf32>
    %67 = arith.subf %65, %66 : vector<1x128xf32>
    %cst_35 = arith.constant 0.000000e+00 : f32
    %68 = vector.broadcast %cst_35 : f32 to vector<1x128xf32>
    %69 = arith.maximumf %67, %68 : vector<1x128xf32>
    %70 = vector.broadcast %60 : vector<1x128xf32> to vector<16x128xf32>
    %71 = arith.subf %56, %70 : vector<16x128xf32>
    %cst_36 = arith.constant 9.99999974E-6 : f32
    %72 = vector.broadcast %cst_36 : f32 to vector<1x128xf32>
    %73 = arith.addf %69, %72 : vector<1x128xf32>
    %74 = math.rsqrt %73 : vector<1x128xf32>
    %75 = vector.broadcast %74 : vector<1x128xf32> to vector<16x128xf32>
    %76 = arith.mulf %71, %75 : vector<16x128xf32>
    %c0_37 = arith.constant 0 : index
    %c0_38 = arith.constant 0 : index
    %77 = vector.load %arg9[%c0_37, %c0_38] : memref<1x128xf32, #tpu.memory_space<vmem>>, vector<1x128xf32>
    %78 = vector.broadcast %77 : vector<1x128xf32> to vector<16x128xf32>
    %79 = arith.mulf %76, %78 : vector<16x128xf32>
    %c0_39 = arith.constant 0 : index
    %c0_40 = arith.constant 0 : index
    %80 = vector.load %arg10[%c0_39, %c0_40] : memref<1x128xf32, #tpu.memory_space<vmem>>, vector<1x128xf32>
    %81 = vector.broadcast %80 : vector<1x128xf32> to vector<16x128xf32>
    %82 = arith.addf %79, %81 : vector<16x128xf32>
    %cst_41 = arith.constant 0.000000e+00 : f32
    %83 = vector.broadcast %cst_41 : f32 to vector<16x128xf32>
    %84 = arith.cmpf ogt, %82, %83 : vector<16x128xf32>
    %cst_42 = arith.constant 1.000000e-01 : f32
    %85 = vector.broadcast %cst_42 : f32 to vector<16x128xf32>
    %86 = arith.mulf %85, %82 : vector<16x128xf32>
    %87 = arith.select %84, %82, %86 : vector<16x128xi1>, vector<16x128xf32>
    %88 = arith.truncf %87 : vector<16x128xf32> to vector<16x128xbf16>
    %c0_43 = arith.constant 0 : index
    %c0_44 = arith.constant 0 : index
    %89 = vector.load %arg17[%c0_43, %c0_44] : memref<128x128xbf16, #tpu.memory_space<vmem>>, vector<128x128xbf16>
    %cst_45 = arith.constant dense<0.000000e+00> : vector<16x128xf32>
    %90 = tpu.matmul %88, %89, %cst_45 {dimension_numbers = #tpu.dot_dimension_numbers<[1], [0], [0], [1], [0, 0, 1, 1], [], []>} : vector<16x128xbf16>, vector<128x128xbf16>, vector<16x128xf32> -> vector<16x128xf32>
    %c0_46 = arith.constant 0 : index
    %c0_47 = arith.constant 0 : index
    %91 = vector.load %arg18[%c0_46, %c0_47] : memref<1x128xf32, #tpu.memory_space<vmem>>, vector<1x128xf32>
    %92 = vector.broadcast %91 : vector<1x128xf32> to vector<16x128xf32>
    %93 = arith.addf %90, %92 : vector<16x128xf32>
    %c0_48 = arith.constant 0 : index
    %c0_49 = arith.constant 0 : index
    %c0_50 = arith.constant 0 : index
    %94 = vector.load %arg11[%c0_48, %c0_49, %c0_50] : memref<2x128x64xbf16, #tpu.memory_space<vmem>>, vector<1x128x64xbf16>
    %95 = vector.shape_cast %94 : vector<1x128x64xbf16> to vector<128x64xbf16>
    %cst_51 = arith.constant dense<0.000000e+00> : vector<16x64xf32>
    %96 = tpu.matmul %88, %95, %cst_51 {dimension_numbers = #tpu.dot_dimension_numbers<[1], [0], [0], [1], [0, 0, 1, 1], [], []>} : vector<16x128xbf16>, vector<128x64xbf16>, vector<16x64xf32> -> vector<16x64xf32>
    %c0_52 = arith.constant 0 : index
    %c0_53 = arith.constant 0 : index
    %c0_54 = arith.constant 0 : index
    %97 = vector.load %arg12[%c0_52, %c0_53, %c0_54] : memref<2x1x64xf32, #tpu.memory_space<vmem>>, vector<1x1x64xf32>
    %98 = vector.shape_cast %97 : vector<1x1x64xf32> to vector<1x64xf32>
    %99 = vector.broadcast %98 : vector<1x64xf32> to vector<16x64xf32>
    %100 = arith.addf %96, %99 : vector<16x64xf32>
    %c0_55 = arith.constant 0 : index
    %c0_56 = arith.constant 0 : index
    %c0_57 = arith.constant 0 : index
    %101 = vector.load %arg13[%c0_55, %c0_56, %c0_57] : memref<2x128x64xbf16, #tpu.memory_space<vmem>>, vector<1x128x64xbf16>
    %102 = vector.shape_cast %101 : vector<1x128x64xbf16> to vector<128x64xbf16>
    %cst_58 = arith.constant dense<0.000000e+00> : vector<16x64xf32>
    %103 = tpu.matmul %88, %102, %cst_58 {dimension_numbers = #tpu.dot_dimension_numbers<[1], [0], [0], [1], [0, 0, 1, 1], [], []>} : vector<16x128xbf16>, vector<128x64xbf16>, vector<16x64xf32> -> vector<16x64xf32>
    %c0_59 = arith.constant 0 : index
    %c0_60 = arith.constant 0 : index
    %c0_61 = arith.constant 0 : index
    %104 = vector.load %arg14[%c0_59, %c0_60, %c0_61] : memref<2x1x64xf32, #tpu.memory_space<vmem>>, vector<1x1x64xf32>
    %105 = vector.shape_cast %104 : vector<1x1x64xf32> to vector<1x64xf32>
    %106 = vector.broadcast %105 : vector<1x64xf32> to vector<16x64xf32>
    %107 = arith.addf %103, %106 : vector<16x64xf32>
    %c0_62 = arith.constant 0 : index
    %c0_63 = arith.constant 0 : index
    %c0_64 = arith.constant 0 : index
    %108 = vector.load %arg15[%c0_62, %c0_63, %c0_64] : memref<2x128x64xbf16, #tpu.memory_space<vmem>>, vector<1x128x64xbf16>
    %109 = vector.shape_cast %108 : vector<1x128x64xbf16> to vector<128x64xbf16>
    %cst_65 = arith.constant dense<0.000000e+00> : vector<16x64xf32>
    %110 = tpu.matmul %88, %109, %cst_65 {dimension_numbers = #tpu.dot_dimension_numbers<[1], [0], [0], [1], [0, 0, 1, 1], [], []>} : vector<16x128xbf16>, vector<128x64xbf16>, vector<16x64xf32> -> vector<16x64xf32>
    %c0_66 = arith.constant 0 : index
    %c0_67 = arith.constant 0 : index
    %c0_68 = arith.constant 0 : index
    %111 = vector.load %arg16[%c0_66, %c0_67, %c0_68] : memref<2x1x64xf32, #tpu.memory_space<vmem>>, vector<1x1x64xf32>
    %112 = vector.shape_cast %111 : vector<1x1x64xf32> to vector<1x64xf32>
    %113 = vector.broadcast %112 : vector<1x64xf32> to vector<16x64xf32>
    %114 = arith.addf %110, %113 : vector<16x64xf32>
    %115 = arith.truncf %100 : vector<16x64xf32> to vector<16x64xbf16>
    %116 = arith.truncf %107 : vector<16x64xf32> to vector<16x64xbf16>
    "tpu.trace_start"() <{level = 10 : i32, message = "ic,jc->ij"}> : () -> ()
    %cst_69 = arith.constant dense<0.000000e+00> : vector<16x16xf32>
    %117 = tpu.matmul %115, %116, %cst_69 {dimension_numbers = #tpu.dot_dimension_numbers<[1], [1], [0], [0], [0, 0, 1, 0], [], []>} : vector<16x64xbf16>, vector<16x64xbf16>, vector<16x16xf32> -> vector<16x16xf32>
    "tpu.trace_stop"() : () -> ()
    %118 = arith.addf %117, %7 : vector<16x16xf32>
    %cst_70 = arith.constant dense<0xFF800000> : vector<16xf32>
    %119 = vector.multi_reduction <maximumf>, %118, %cst_70 [1] : vector<16x16xf32> to vector<16xf32>
    %120 = vector.shape_cast %119 : vector<16xf32> to vector<16x1xf32>
    %121 = vector.broadcast %120 : vector<16x1xf32> to vector<16x16xf32>
    %122 = arith.subf %118, %121 : vector<16x16xf32>
    %123 = math.exp %122 : vector<16x16xf32>
    %cst_71 = arith.constant dense<0.000000e+00> : vector<16xf32>
    %124 = vector.multi_reduction <add>, %123, %cst_71 [1] : vector<16x16xf32> to vector<16xf32>
    %125 = vector.shape_cast %124 : vector<16xf32> to vector<16x1xf32>
    %126 = tpu.reciprocal %125 {approx = true} : vector<16x1xf32> -> vector<16x1xf32>
    %127 = arith.mulf %126, %9 : vector<16x1xf32>
    %128 = vector.broadcast %127 : vector<16x1xf32> to vector<16x16xf32>
    %129 = arith.mulf %123, %128 : vector<16x16xf32>
    %130 = arith.truncf %129 : vector<16x16xf32> to vector<16x16xbf16>
    %131 = arith.truncf %114 : vector<16x64xf32> to vector<16x64xbf16>
    %cst_72 = arith.constant dense<0.000000e+00> : vector<16x64xf32>
    %132 = tpu.matmul %130, %131, %cst_72 {dimension_numbers = #tpu.dot_dimension_numbers<[1], [0], [0], [1], [0, 0, 1, 1], [], []>} : vector<16x16xbf16>, vector<16x64xbf16>, vector<16x64xf32> -> vector<16x64xf32>
    %c1 = arith.constant 1 : index
    %c0_73 = arith.constant 0 : index
    %c0_74 = arith.constant 0 : index
    %133 = vector.load %arg11[%c1, %c0_73, %c0_74] : memref<2x128x64xbf16, #tpu.memory_space<vmem>>, vector<1x128x64xbf16>
    %134 = vector.shape_cast %133 : vector<1x128x64xbf16> to vector<128x64xbf16>
    %cst_75 = arith.constant dense<0.000000e+00> : vector<16x64xf32>
    %135 = tpu.matmul %88, %134, %cst_75 {dimension_numbers = #tpu.dot_dimension_numbers<[1], [0], [0], [1], [0, 0, 1, 1], [], []>} : vector<16x128xbf16>, vector<128x64xbf16>, vector<16x64xf32> -> vector<16x64xf32>
    %c1_76 = arith.constant 1 : index
    %c0_77 = arith.constant 0 : index
    %c0_78 = arith.constant 0 : index
    %136 = vector.load %arg12[%c1_76, %c0_77, %c0_78] : memref<2x1x64xf32, #tpu.memory_space<vmem>>, vector<1x1x64xf32>
    %137 = vector.shape_cast %136 : vector<1x1x64xf32> to vector<1x64xf32>
    %138 = vector.broadcast %137 : vector<1x64xf32> to vector<16x64xf32>
    %139 = arith.addf %135, %138 : vector<16x64xf32>
    %c1_79 = arith.constant 1 : index
    %c0_80 = arith.constant 0 : index
    %c0_81 = arith.constant 0 : index
    %140 = vector.load %arg13[%c1_79, %c0_80, %c0_81] : memref<2x128x64xbf16, #tpu.memory_space<vmem>>, vector<1x128x64xbf16>
    %141 = vector.shape_cast %140 : vector<1x128x64xbf16> to vector<128x64xbf16>
    %cst_82 = arith.constant dense<0.000000e+00> : vector<16x64xf32>
    %142 = tpu.matmul %88, %141, %cst_82 {dimension_numbers = #tpu.dot_dimension_numbers<[1], [0], [0], [1], [0, 0, 1, 1], [], []>} : vector<16x128xbf16>, vector<128x64xbf16>, vector<16x64xf32> -> vector<16x64xf32>
    %c1_83 = arith.constant 1 : index
    %c0_84 = arith.constant 0 : index
    %c0_85 = arith.constant 0 : index
    %143 = vector.load %arg14[%c1_83, %c0_84, %c0_85] : memref<2x1x64xf32, #tpu.memory_space<vmem>>, vector<1x1x64xf32>
    %144 = vector.shape_cast %143 : vector<1x1x64xf32> to vector<1x64xf32>
    %145 = vector.broadcast %144 : vector<1x64xf32> to vector<16x64xf32>
    %146 = arith.addf %142, %145 : vector<16x64xf32>
    %c1_86 = arith.constant 1 : index
    %c0_87 = arith.constant 0 : index
    %c0_88 = arith.constant 0 : index
    %147 = vector.load %arg15[%c1_86, %c0_87, %c0_88] : memref<2x128x64xbf16, #tpu.memory_space<vmem>>, vector<1x128x64xbf16>
    %148 = vector.shape_cast %147 : vector<1x128x64xbf16> to vector<128x64xbf16>
    %cst_89 = arith.constant dense<0.000000e+00> : vector<16x64xf32>
    %149 = tpu.matmul %88, %148, %cst_89 {dimension_numbers = #tpu.dot_dimension_numbers<[1], [0], [0], [1], [0, 0, 1, 1], [], []>} : vector<16x128xbf16>, vector<128x64xbf16>, vector<16x64xf32> -> vector<16x64xf32>
    %c1_90 = arith.constant 1 : index
    %c0_91 = arith.constant 0 : index
    %c0_92 = arith.constant 0 : index
    %150 = vector.load %arg16[%c1_90, %c0_91, %c0_92] : memref<2x1x64xf32, #tpu.memory_space<vmem>>, vector<1x1x64xf32>
    %151 = vector.shape_cast %150 : vector<1x1x64xf32> to vector<1x64xf32>
    %152 = vector.broadcast %151 : vector<1x64xf32> to vector<16x64xf32>
    %153 = arith.addf %149, %152 : vector<16x64xf32>
    %154 = arith.truncf %139 : vector<16x64xf32> to vector<16x64xbf16>
    %155 = arith.truncf %146 : vector<16x64xf32> to vector<16x64xbf16>
    "tpu.trace_start"() <{level = 10 : i32, message = "ic,jc->ij"}> : () -> ()
    %cst_93 = arith.constant dense<0.000000e+00> : vector<16x16xf32>
    %156 = tpu.matmul %154, %155, %cst_93 {dimension_numbers = #tpu.dot_dimension_numbers<[1], [1], [0], [0], [0, 0, 1, 0], [], []>} : vector<16x64xbf16>, vector<16x64xbf16>, vector<16x16xf32> -> vector<16x16xf32>
    "tpu.trace_stop"() : () -> ()
    %157 = arith.addf %156, %7 : vector<16x16xf32>
    %cst_94 = arith.constant dense<0xFF800000> : vector<16xf32>
    %158 = vector.multi_reduction <maximumf>, %157, %cst_94 [1] : vector<16x16xf32> to vector<16xf32>
    %159 = vector.shape_cast %158 : vector<16xf32> to vector<16x1xf32>
    %160 = vector.broadcast %159 : vector<16x1xf32> to vector<16x16xf32>
    %161 = arith.subf %157, %160 : vector<16x16xf32>
    %162 = math.exp %161 : vector<16x16xf32>
    %cst_95 = arith.constant dense<0.000000e+00> : vector<16xf32>
    %163 = vector.multi_reduction <add>, %162, %cst_95 [1] : vector<16x16xf32> to vector<16xf32>
    %164 = vector.shape_cast %163 : vector<16xf32> to vector<16x1xf32>
    %165 = tpu.reciprocal %164 {approx = true} : vector<16x1xf32> -> vector<16x1xf32>
    %166 = arith.mulf %165, %9 : vector<16x1xf32>
    %167 = vector.broadcast %166 : vector<16x1xf32> to vector<16x16xf32>
    %168 = arith.mulf %162, %167 : vector<16x16xf32>
    %169 = arith.truncf %168 : vector<16x16xf32> to vector<16x16xbf16>
    %170 = arith.truncf %153 : vector<16x64xf32> to vector<16x64xbf16>
    %cst_96 = arith.constant dense<0.000000e+00> : vector<16x64xf32>
    %171 = tpu.matmul %169, %170, %cst_96 {dimension_numbers = #tpu.dot_dimension_numbers<[1], [0], [0], [1], [0, 0, 1, 1], [], []>} : vector<16x16xbf16>, vector<16x64xbf16>, vector<16x64xf32> -> vector<16x64xf32>
    %172 = tpu.concatenate %132, %171 in 1 : vector<16x64xf32>, vector<16x64xf32> -> vector<16x128xf32>
    %173 = arith.addf %172, %93 : vector<16x128xf32>
    %cst_97 = arith.constant dense<0.000000e+00> : vector<128xf32>
    %174 = vector.multi_reduction <add>, %173, %cst_97 [0] : vector<16x128xf32> to vector<128xf32>
    %175 = vector.shape_cast %174 : vector<128xf32> to vector<1x128xf32>
    %cst_98 = arith.constant 6.250000e-02 : f32
    %176 = vector.broadcast %cst_98 : f32 to vector<1x128xf32>
    %177 = arith.mulf %175, %176 : vector<1x128xf32>
    %178 = arith.mulf %173, %173 : vector<16x128xf32>
    %cst_99 = arith.constant dense<0.000000e+00> : vector<128xf32>
    %179 = vector.multi_reduction <add>, %178, %cst_99 [0] : vector<16x128xf32> to vector<128xf32>
    %180 = vector.shape_cast %179 : vector<128xf32> to vector<1x128xf32>
    %cst_100 = arith.constant 6.250000e-02 : f32
    %181 = vector.broadcast %cst_100 : f32 to vector<1x128xf32>
    %182 = arith.mulf %180, %181 : vector<1x128xf32>
    %183 = arith.mulf %177, %177 : vector<1x128xf32>
    %184 = arith.subf %182, %183 : vector<1x128xf32>
    %cst_101 = arith.constant 0.000000e+00 : f32
    %185 = vector.broadcast %cst_101 : f32 to vector<1x128xf32>
    %186 = arith.maximumf %184, %185 : vector<1x128xf32>
    %187 = vector.broadcast %177 : vector<1x128xf32> to vector<16x128xf32>
    %188 = arith.subf %173, %187 : vector<16x128xf32>
    %cst_102 = arith.constant 9.99999974E-6 : f32
    %189 = vector.broadcast %cst_102 : f32 to vector<1x128xf32>
    %190 = arith.addf %186, %189 : vector<1x128xf32>
    %191 = math.rsqrt %190 : vector<1x128xf32>
    %192 = vector.broadcast %191 : vector<1x128xf32> to vector<16x128xf32>
    %193 = arith.mulf %188, %192 : vector<16x128xf32>
    %c0_103 = arith.constant 0 : index
    %c0_104 = arith.constant 0 : index
    %194 = vector.load %arg19[%c0_103, %c0_104] : memref<1x128xf32, #tpu.memory_space<vmem>>, vector<1x128xf32>
    %195 = vector.broadcast %194 : vector<1x128xf32> to vector<16x128xf32>
    %196 = arith.mulf %193, %195 : vector<16x128xf32>
    %c0_105 = arith.constant 0 : index
    %c0_106 = arith.constant 0 : index
    %197 = vector.load %arg20[%c0_105, %c0_106] : memref<1x128xf32, #tpu.memory_space<vmem>>, vector<1x128xf32>
    %198 = vector.broadcast %197 : vector<1x128xf32> to vector<16x128xf32>
    %199 = arith.addf %196, %198 : vector<16x128xf32>
    %cst_107 = arith.constant 0.000000e+00 : f32
    %200 = vector.broadcast %cst_107 : f32 to vector<16x128xf32>
    %201 = arith.cmpf ogt, %199, %200 : vector<16x128xf32>
    %cst_108 = arith.constant 1.000000e-01 : f32
    %202 = vector.broadcast %cst_108 : f32 to vector<16x128xf32>
    %203 = arith.mulf %202, %199 : vector<16x128xf32>
    %204 = arith.select %201, %199, %203 : vector<16x128xi1>, vector<16x128xf32>
    %205 = arith.truncf %204 : vector<16x128xf32> to vector<16x128xbf16>
    %c0_109 = arith.constant 0 : index
    %c0_110 = arith.constant 0 : index
    %206 = vector.load %arg27[%c0_109, %c0_110] : memref<128x128xbf16, #tpu.memory_space<vmem>>, vector<128x128xbf16>
    %cst_111 = arith.constant dense<0.000000e+00> : vector<16x128xf32>
    %207 = tpu.matmul %205, %206, %cst_111 {dimension_numbers = #tpu.dot_dimension_numbers<[1], [0], [0], [1], [0, 0, 1, 1], [], []>} : vector<16x128xbf16>, vector<128x128xbf16>, vector<16x128xf32> -> vector<16x128xf32>
    %c0_112 = arith.constant 0 : index
    %c0_113 = arith.constant 0 : index
    %208 = vector.load %arg28[%c0_112, %c0_113] : memref<1x128xf32, #tpu.memory_space<vmem>>, vector<1x128xf32>
    %209 = vector.broadcast %208 : vector<1x128xf32> to vector<16x128xf32>
    %210 = arith.addf %207, %209 : vector<16x128xf32>
    %c0_114 = arith.constant 0 : index
    %c0_115 = arith.constant 0 : index
    %c0_116 = arith.constant 0 : index
    %211 = vector.load %arg21[%c0_114, %c0_115, %c0_116] : memref<2x128x64xbf16, #tpu.memory_space<vmem>>, vector<1x128x64xbf16>
    %212 = vector.shape_cast %211 : vector<1x128x64xbf16> to vector<128x64xbf16>
    %cst_117 = arith.constant dense<0.000000e+00> : vector<16x64xf32>
    %213 = tpu.matmul %205, %212, %cst_117 {dimension_numbers = #tpu.dot_dimension_numbers<[1], [0], [0], [1], [0, 0, 1, 1], [], []>} : vector<16x128xbf16>, vector<128x64xbf16>, vector<16x64xf32> -> vector<16x64xf32>
    %c0_118 = arith.constant 0 : index
    %c0_119 = arith.constant 0 : index
    %c0_120 = arith.constant 0 : index
    %214 = vector.load %arg22[%c0_118, %c0_119, %c0_120] : memref<2x1x64xf32, #tpu.memory_space<vmem>>, vector<1x1x64xf32>
    %215 = vector.shape_cast %214 : vector<1x1x64xf32> to vector<1x64xf32>
    %216 = vector.broadcast %215 : vector<1x64xf32> to vector<16x64xf32>
    %217 = arith.addf %213, %216 : vector<16x64xf32>
    %c0_121 = arith.constant 0 : index
    %c0_122 = arith.constant 0 : index
    %c0_123 = arith.constant 0 : index
    %218 = vector.load %arg23[%c0_121, %c0_122, %c0_123] : memref<2x128x64xbf16, #tpu.memory_space<vmem>>, vector<1x128x64xbf16>
    %219 = vector.shape_cast %218 : vector<1x128x64xbf16> to vector<128x64xbf16>
    %cst_124 = arith.constant dense<0.000000e+00> : vector<16x64xf32>
    %220 = tpu.matmul %205, %219, %cst_124 {dimension_numbers = #tpu.dot_dimension_numbers<[1], [0], [0], [1], [0, 0, 1, 1], [], []>} : vector<16x128xbf16>, vector<128x64xbf16>, vector<16x64xf32> -> vector<16x64xf32>
    %c0_125 = arith.constant 0 : index
    %c0_126 = arith.constant 0 : index
    %c0_127 = arith.constant 0 : index
    %221 = vector.load %arg24[%c0_125, %c0_126, %c0_127] : memref<2x1x64xf32, #tpu.memory_space<vmem>>, vector<1x1x64xf32>
    %222 = vector.shape_cast %221 : vector<1x1x64xf32> to vector<1x64xf32>
    %223 = vector.broadcast %222 : vector<1x64xf32> to vector<16x64xf32>
    %224 = arith.addf %220, %223 : vector<16x64xf32>
    %c0_128 = arith.constant 0 : index
    %c0_129 = arith.constant 0 : index
    %c0_130 = arith.constant 0 : index
    %225 = vector.load %arg25[%c0_128, %c0_129, %c0_130] : memref<2x128x64xbf16, #tpu.memory_space<vmem>>, vector<1x128x64xbf16>
    %226 = vector.shape_cast %225 : vector<1x128x64xbf16> to vector<128x64xbf16>
    %cst_131 = arith.constant dense<0.000000e+00> : vector<16x64xf32>
    %227 = tpu.matmul %205, %226, %cst_131 {dimension_numbers = #tpu.dot_dimension_numbers<[1], [0], [0], [1], [0, 0, 1, 1], [], []>} : vector<16x128xbf16>, vector<128x64xbf16>, vector<16x64xf32> -> vector<16x64xf32>
    %c0_132 = arith.constant 0 : index
    %c0_133 = arith.constant 0 : index
    %c0_134 = arith.constant 0 : index
    %228 = vector.load %arg26[%c0_132, %c0_133, %c0_134] : memref<2x1x64xf32, #tpu.memory_space<vmem>>, vector<1x1x64xf32>
    %229 = vector.shape_cast %228 : vector<1x1x64xf32> to vector<1x64xf32>
    %230 = vector.broadcast %229 : vector<1x64xf32> to vector<16x64xf32>
    %231 = arith.addf %227, %230 : vector<16x64xf32>
    %232 = arith.truncf %217 : vector<16x64xf32> to vector<16x64xbf16>
    %233 = arith.truncf %224 : vector<16x64xf32> to vector<16x64xbf16>
    "tpu.trace_start"() <{level = 10 : i32, message = "ic,jc->ij"}> : () -> ()
    %cst_135 = arith.constant dense<0.000000e+00> : vector<16x16xf32>
    %234 = tpu.matmul %232, %233, %cst_135 {dimension_numbers = #tpu.dot_dimension_numbers<[1], [1], [0], [0], [0, 0, 1, 0], [], []>} : vector<16x64xbf16>, vector<16x64xbf16>, vector<16x16xf32> -> vector<16x16xf32>
    "tpu.trace_stop"() : () -> ()
    %235 = arith.addf %234, %7 : vector<16x16xf32>
    %cst_136 = arith.constant dense<0xFF800000> : vector<16xf32>
    %236 = vector.multi_reduction <maximumf>, %235, %cst_136 [1] : vector<16x16xf32> to vector<16xf32>
    %237 = vector.shape_cast %236 : vector<16xf32> to vector<16x1xf32>
    %238 = vector.broadcast %237 : vector<16x1xf32> to vector<16x16xf32>
    %239 = arith.subf %235, %238 : vector<16x16xf32>
    %240 = math.exp %239 : vector<16x16xf32>
    %cst_137 = arith.constant dense<0.000000e+00> : vector<16xf32>
    %241 = vector.multi_reduction <add>, %240, %cst_137 [1] : vector<16x16xf32> to vector<16xf32>
    %242 = vector.shape_cast %241 : vector<16xf32> to vector<16x1xf32>
    %243 = tpu.reciprocal %242 {approx = true} : vector<16x1xf32> -> vector<16x1xf32>
    %244 = arith.mulf %243, %9 : vector<16x1xf32>
    %245 = vector.broadcast %244 : vector<16x1xf32> to vector<16x16xf32>
    %246 = arith.mulf %240, %245 : vector<16x16xf32>
    %247 = arith.truncf %246 : vector<16x16xf32> to vector<16x16xbf16>
    %248 = arith.truncf %231 : vector<16x64xf32> to vector<16x64xbf16>
    %cst_138 = arith.constant dense<0.000000e+00> : vector<16x64xf32>
    %249 = tpu.matmul %247, %248, %cst_138 {dimension_numbers = #tpu.dot_dimension_numbers<[1], [0], [0], [1], [0, 0, 1, 1], [], []>} : vector<16x16xbf16>, vector<16x64xbf16>, vector<16x64xf32> -> vector<16x64xf32>
    %c1_139 = arith.constant 1 : index
    %c0_140 = arith.constant 0 : index
    %c0_141 = arith.constant 0 : index
    %250 = vector.load %arg21[%c1_139, %c0_140, %c0_141] : memref<2x128x64xbf16, #tpu.memory_space<vmem>>, vector<1x128x64xbf16>
    %251 = vector.shape_cast %250 : vector<1x128x64xbf16> to vector<128x64xbf16>
    %cst_142 = arith.constant dense<0.000000e+00> : vector<16x64xf32>
    %252 = tpu.matmul %205, %251, %cst_142 {dimension_numbers = #tpu.dot_dimension_numbers<[1], [0], [0], [1], [0, 0, 1, 1], [], []>} : vector<16x128xbf16>, vector<128x64xbf16>, vector<16x64xf32> -> vector<16x64xf32>
    %c1_143 = arith.constant 1 : index
    %c0_144 = arith.constant 0 : index
    %c0_145 = arith.constant 0 : index
    %253 = vector.load %arg22[%c1_143, %c0_144, %c0_145] : memref<2x1x64xf32, #tpu.memory_space<vmem>>, vector<1x1x64xf32>
    %254 = vector.shape_cast %253 : vector<1x1x64xf32> to vector<1x64xf32>
    %255 = vector.broadcast %254 : vector<1x64xf32> to vector<16x64xf32>
    %256 = arith.addf %252, %255 : vector<16x64xf32>
    %c1_146 = arith.constant 1 : index
    %c0_147 = arith.constant 0 : index
    %c0_148 = arith.constant 0 : index
    %257 = vector.load %arg23[%c1_146, %c0_147, %c0_148] : memref<2x128x64xbf16, #tpu.memory_space<vmem>>, vector<1x128x64xbf16>
    %258 = vector.shape_cast %257 : vector<1x128x64xbf16> to vector<128x64xbf16>
    %cst_149 = arith.constant dense<0.000000e+00> : vector<16x64xf32>
    %259 = tpu.matmul %205, %258, %cst_149 {dimension_numbers = #tpu.dot_dimension_numbers<[1], [0], [0], [1], [0, 0, 1, 1], [], []>} : vector<16x128xbf16>, vector<128x64xbf16>, vector<16x64xf32> -> vector<16x64xf32>
    %c1_150 = arith.constant 1 : index
    %c0_151 = arith.constant 0 : index
    %c0_152 = arith.constant 0 : index
    %260 = vector.load %arg24[%c1_150, %c0_151, %c0_152] : memref<2x1x64xf32, #tpu.memory_space<vmem>>, vector<1x1x64xf32>
    %261 = vector.shape_cast %260 : vector<1x1x64xf32> to vector<1x64xf32>
    %262 = vector.broadcast %261 : vector<1x64xf32> to vector<16x64xf32>
    %263 = arith.addf %259, %262 : vector<16x64xf32>
    %c1_153 = arith.constant 1 : index
    %c0_154 = arith.constant 0 : index
    %c0_155 = arith.constant 0 : index
    %264 = vector.load %arg25[%c1_153, %c0_154, %c0_155] : memref<2x128x64xbf16, #tpu.memory_space<vmem>>, vector<1x128x64xbf16>
    %265 = vector.shape_cast %264 : vector<1x128x64xbf16> to vector<128x64xbf16>
    %cst_156 = arith.constant dense<0.000000e+00> : vector<16x64xf32>
    %266 = tpu.matmul %205, %265, %cst_156 {dimension_numbers = #tpu.dot_dimension_numbers<[1], [0], [0], [1], [0, 0, 1, 1], [], []>} : vector<16x128xbf16>, vector<128x64xbf16>, vector<16x64xf32> -> vector<16x64xf32>
    %c1_157 = arith.constant 1 : index
    %c0_158 = arith.constant 0 : index
    %c0_159 = arith.constant 0 : index
    %267 = vector.load %arg26[%c1_157, %c0_158, %c0_159] : memref<2x1x64xf32, #tpu.memory_space<vmem>>, vector<1x1x64xf32>
    %268 = vector.shape_cast %267 : vector<1x1x64xf32> to vector<1x64xf32>
    %269 = vector.broadcast %268 : vector<1x64xf32> to vector<16x64xf32>
    %270 = arith.addf %266, %269 : vector<16x64xf32>
    %271 = arith.truncf %256 : vector<16x64xf32> to vector<16x64xbf16>
    %272 = arith.truncf %263 : vector<16x64xf32> to vector<16x64xbf16>
    "tpu.trace_start"() <{level = 10 : i32, message = "ic,jc->ij"}> : () -> ()
    %cst_160 = arith.constant dense<0.000000e+00> : vector<16x16xf32>
    %273 = tpu.matmul %271, %272, %cst_160 {dimension_numbers = #tpu.dot_dimension_numbers<[1], [1], [0], [0], [0, 0, 1, 0], [], []>} : vector<16x64xbf16>, vector<16x64xbf16>, vector<16x16xf32> -> vector<16x16xf32>
    "tpu.trace_stop"() : () -> ()
    %274 = arith.addf %273, %7 : vector<16x16xf32>
    %cst_161 = arith.constant dense<0xFF800000> : vector<16xf32>
    %275 = vector.multi_reduction <maximumf>, %274, %cst_161 [1] : vector<16x16xf32> to vector<16xf32>
    %276 = vector.shape_cast %275 : vector<16xf32> to vector<16x1xf32>
    %277 = vector.broadcast %276 : vector<16x1xf32> to vector<16x16xf32>
    %278 = arith.subf %274, %277 : vector<16x16xf32>
    %279 = math.exp %278 : vector<16x16xf32>
    %cst_162 = arith.constant dense<0.000000e+00> : vector<16xf32>
    %280 = vector.multi_reduction <add>, %279, %cst_162 [1] : vector<16x16xf32> to vector<16xf32>
    %281 = vector.shape_cast %280 : vector<16xf32> to vector<16x1xf32>
    %282 = tpu.reciprocal %281 {approx = true} : vector<16x1xf32> -> vector<16x1xf32>
    %283 = arith.mulf %282, %9 : vector<16x1xf32>
    %284 = vector.broadcast %283 : vector<16x1xf32> to vector<16x16xf32>
    %285 = arith.mulf %279, %284 : vector<16x16xf32>
    %286 = arith.truncf %285 : vector<16x16xf32> to vector<16x16xbf16>
    %287 = arith.truncf %270 : vector<16x64xf32> to vector<16x64xbf16>
    %cst_163 = arith.constant dense<0.000000e+00> : vector<16x64xf32>
    %288 = tpu.matmul %286, %287, %cst_163 {dimension_numbers = #tpu.dot_dimension_numbers<[1], [0], [0], [1], [0, 0, 1, 1], [], []>} : vector<16x16xbf16>, vector<16x64xbf16>, vector<16x64xf32> -> vector<16x64xf32>
    %289 = tpu.concatenate %249, %288 in 1 : vector<16x64xf32>, vector<16x64xf32> -> vector<16x128xf32>
    %290 = arith.addf %289, %210 : vector<16x128xf32>
    %cst_164 = arith.constant dense<0.000000e+00> : vector<128xf32>
    %291 = vector.multi_reduction <add>, %290, %cst_164 [0] : vector<16x128xf32> to vector<128xf32>
    %292 = vector.shape_cast %291 : vector<128xf32> to vector<1x128xf32>
    %cst_165 = arith.constant 6.250000e-02 : f32
    %293 = vector.broadcast %cst_165 : f32 to vector<1x128xf32>
    %294 = arith.mulf %292, %293 : vector<1x128xf32>
    %295 = arith.mulf %290, %290 : vector<16x128xf32>
    %cst_166 = arith.constant dense<0.000000e+00> : vector<128xf32>
    %296 = vector.multi_reduction <add>, %295, %cst_166 [0] : vector<16x128xf32> to vector<128xf32>
    %297 = vector.shape_cast %296 : vector<128xf32> to vector<1x128xf32>
    %cst_167 = arith.constant 6.250000e-02 : f32
    %298 = vector.broadcast %cst_167 : f32 to vector<1x128xf32>
    %299 = arith.mulf %297, %298 : vector<1x128xf32>
    %300 = arith.mulf %294, %294 : vector<1x128xf32>
    %301 = arith.subf %299, %300 : vector<1x128xf32>
    %cst_168 = arith.constant 0.000000e+00 : f32
    %302 = vector.broadcast %cst_168 : f32 to vector<1x128xf32>
    %303 = arith.maximumf %301, %302 : vector<1x128xf32>
    %304 = vector.broadcast %294 : vector<1x128xf32> to vector<16x128xf32>
    %305 = arith.subf %290, %304 : vector<16x128xf32>
    %cst_169 = arith.constant 9.99999974E-6 : f32
    %306 = vector.broadcast %cst_169 : f32 to vector<1x128xf32>
    %307 = arith.addf %303, %306 : vector<1x128xf32>
    %308 = math.rsqrt %307 : vector<1x128xf32>
    %309 = vector.broadcast %308 : vector<1x128xf32> to vector<16x128xf32>
    %310 = arith.mulf %305, %309 : vector<16x128xf32>
    %c0_170 = arith.constant 0 : index
    %c0_171 = arith.constant 0 : index
    %311 = vector.load %arg29[%c0_170, %c0_171] : memref<1x128xf32, #tpu.memory_space<vmem>>, vector<1x128xf32>
    %312 = vector.broadcast %311 : vector<1x128xf32> to vector<16x128xf32>
    %313 = arith.mulf %310, %312 : vector<16x128xf32>
    %c0_172 = arith.constant 0 : index
    %c0_173 = arith.constant 0 : index
    %314 = vector.load %arg30[%c0_172, %c0_173] : memref<1x128xf32, #tpu.memory_space<vmem>>, vector<1x128xf32>
    %315 = vector.broadcast %314 : vector<1x128xf32> to vector<16x128xf32>
    %316 = arith.addf %313, %315 : vector<16x128xf32>
    %cst_174 = arith.constant 0.000000e+00 : f32
    %317 = vector.broadcast %cst_174 : f32 to vector<16x128xf32>
    %318 = arith.cmpf ogt, %316, %317 : vector<16x128xf32>
    %cst_175 = arith.constant 1.000000e-01 : f32
    %319 = vector.broadcast %cst_175 : f32 to vector<16x128xf32>
    %320 = arith.mulf %319, %316 : vector<16x128xf32>
    %321 = arith.select %318, %316, %320 : vector<16x128xi1>, vector<16x128xf32>
    %322 = arith.truncf %321 : vector<16x128xf32> to vector<16x128xbf16>
    %c0_176 = arith.constant 0 : index
    %c0_177 = arith.constant 0 : index
    %323 = vector.load %arg37[%c0_176, %c0_177] : memref<128x128xbf16, #tpu.memory_space<vmem>>, vector<128x128xbf16>
    %cst_178 = arith.constant dense<0.000000e+00> : vector<16x128xf32>
    %324 = tpu.matmul %322, %323, %cst_178 {dimension_numbers = #tpu.dot_dimension_numbers<[1], [0], [0], [1], [0, 0, 1, 1], [], []>} : vector<16x128xbf16>, vector<128x128xbf16>, vector<16x128xf32> -> vector<16x128xf32>
    %c0_179 = arith.constant 0 : index
    %c0_180 = arith.constant 0 : index
    %325 = vector.load %arg38[%c0_179, %c0_180] : memref<1x128xf32, #tpu.memory_space<vmem>>, vector<1x128xf32>
    %326 = vector.broadcast %325 : vector<1x128xf32> to vector<16x128xf32>
    %327 = arith.addf %324, %326 : vector<16x128xf32>
    %c0_181 = arith.constant 0 : index
    %c0_182 = arith.constant 0 : index
    %c0_183 = arith.constant 0 : index
    %328 = vector.load %arg31[%c0_181, %c0_182, %c0_183] : memref<2x128x64xbf16, #tpu.memory_space<vmem>>, vector<1x128x64xbf16>
    %329 = vector.shape_cast %328 : vector<1x128x64xbf16> to vector<128x64xbf16>
    %cst_184 = arith.constant dense<0.000000e+00> : vector<16x64xf32>
    %330 = tpu.matmul %322, %329, %cst_184 {dimension_numbers = #tpu.dot_dimension_numbers<[1], [0], [0], [1], [0, 0, 1, 1], [], []>} : vector<16x128xbf16>, vector<128x64xbf16>, vector<16x64xf32> -> vector<16x64xf32>
    %c0_185 = arith.constant 0 : index
    %c0_186 = arith.constant 0 : index
    %c0_187 = arith.constant 0 : index
    %331 = vector.load %arg32[%c0_185, %c0_186, %c0_187] : memref<2x1x64xf32, #tpu.memory_space<vmem>>, vector<1x1x64xf32>
    %332 = vector.shape_cast %331 : vector<1x1x64xf32> to vector<1x64xf32>
    %333 = vector.broadcast %332 : vector<1x64xf32> to vector<16x64xf32>
    %334 = arith.addf %330, %333 : vector<16x64xf32>
    %c0_188 = arith.constant 0 : index
    %c0_189 = arith.constant 0 : index
    %c0_190 = arith.constant 0 : index
    %335 = vector.load %arg33[%c0_188, %c0_189, %c0_190] : memref<2x128x64xbf16, #tpu.memory_space<vmem>>, vector<1x128x64xbf16>
    %336 = vector.shape_cast %335 : vector<1x128x64xbf16> to vector<128x64xbf16>
    %cst_191 = arith.constant dense<0.000000e+00> : vector<16x64xf32>
    %337 = tpu.matmul %322, %336, %cst_191 {dimension_numbers = #tpu.dot_dimension_numbers<[1], [0], [0], [1], [0, 0, 1, 1], [], []>} : vector<16x128xbf16>, vector<128x64xbf16>, vector<16x64xf32> -> vector<16x64xf32>
    %c0_192 = arith.constant 0 : index
    %c0_193 = arith.constant 0 : index
    %c0_194 = arith.constant 0 : index
    %338 = vector.load %arg34[%c0_192, %c0_193, %c0_194] : memref<2x1x64xf32, #tpu.memory_space<vmem>>, vector<1x1x64xf32>
    %339 = vector.shape_cast %338 : vector<1x1x64xf32> to vector<1x64xf32>
    %340 = vector.broadcast %339 : vector<1x64xf32> to vector<16x64xf32>
    %341 = arith.addf %337, %340 : vector<16x64xf32>
    %c0_195 = arith.constant 0 : index
    %c0_196 = arith.constant 0 : index
    %c0_197 = arith.constant 0 : index
    %342 = vector.load %arg35[%c0_195, %c0_196, %c0_197] : memref<2x128x64xbf16, #tpu.memory_space<vmem>>, vector<1x128x64xbf16>
    %343 = vector.shape_cast %342 : vector<1x128x64xbf16> to vector<128x64xbf16>
    %cst_198 = arith.constant dense<0.000000e+00> : vector<16x64xf32>
    %344 = tpu.matmul %322, %343, %cst_198 {dimension_numbers = #tpu.dot_dimension_numbers<[1], [0], [0], [1], [0, 0, 1, 1], [], []>} : vector<16x128xbf16>, vector<128x64xbf16>, vector<16x64xf32> -> vector<16x64xf32>
    %c0_199 = arith.constant 0 : index
    %c0_200 = arith.constant 0 : index
    %c0_201 = arith.constant 0 : index
    %345 = vector.load %arg36[%c0_199, %c0_200, %c0_201] : memref<2x1x64xf32, #tpu.memory_space<vmem>>, vector<1x1x64xf32>
    %346 = vector.shape_cast %345 : vector<1x1x64xf32> to vector<1x64xf32>
    %347 = vector.broadcast %346 : vector<1x64xf32> to vector<16x64xf32>
    %348 = arith.addf %344, %347 : vector<16x64xf32>
    %349 = arith.truncf %334 : vector<16x64xf32> to vector<16x64xbf16>
    %350 = arith.truncf %341 : vector<16x64xf32> to vector<16x64xbf16>
    "tpu.trace_start"() <{level = 10 : i32, message = "ic,jc->ij"}> : () -> ()
    %cst_202 = arith.constant dense<0.000000e+00> : vector<16x16xf32>
    %351 = tpu.matmul %349, %350, %cst_202 {dimension_numbers = #tpu.dot_dimension_numbers<[1], [1], [0], [0], [0, 0, 1, 0], [], []>} : vector<16x64xbf16>, vector<16x64xbf16>, vector<16x16xf32> -> vector<16x16xf32>
    "tpu.trace_stop"() : () -> ()
    %352 = arith.addf %351, %7 : vector<16x16xf32>
    %cst_203 = arith.constant dense<0xFF800000> : vector<16xf32>
    %353 = vector.multi_reduction <maximumf>, %352, %cst_203 [1] : vector<16x16xf32> to vector<16xf32>
    %354 = vector.shape_cast %353 : vector<16xf32> to vector<16x1xf32>
    %355 = vector.broadcast %354 : vector<16x1xf32> to vector<16x16xf32>
    %356 = arith.subf %352, %355 : vector<16x16xf32>
    %357 = math.exp %356 : vector<16x16xf32>
    %cst_204 = arith.constant dense<0.000000e+00> : vector<16xf32>
    %358 = vector.multi_reduction <add>, %357, %cst_204 [1] : vector<16x16xf32> to vector<16xf32>
    %359 = vector.shape_cast %358 : vector<16xf32> to vector<16x1xf32>
    %360 = tpu.reciprocal %359 {approx = true} : vector<16x1xf32> -> vector<16x1xf32>
    %361 = arith.mulf %360, %9 : vector<16x1xf32>
    %362 = vector.broadcast %361 : vector<16x1xf32> to vector<16x16xf32>
    %363 = arith.mulf %357, %362 : vector<16x16xf32>
    %364 = arith.truncf %363 : vector<16x16xf32> to vector<16x16xbf16>
    %365 = arith.truncf %348 : vector<16x64xf32> to vector<16x64xbf16>
    %cst_205 = arith.constant dense<0.000000e+00> : vector<16x64xf32>
    %366 = tpu.matmul %364, %365, %cst_205 {dimension_numbers = #tpu.dot_dimension_numbers<[1], [0], [0], [1], [0, 0, 1, 1], [], []>} : vector<16x16xbf16>, vector<16x64xbf16>, vector<16x64xf32> -> vector<16x64xf32>
    %c1_206 = arith.constant 1 : index
    %c0_207 = arith.constant 0 : index
    %c0_208 = arith.constant 0 : index
    %367 = vector.load %arg31[%c1_206, %c0_207, %c0_208] : memref<2x128x64xbf16, #tpu.memory_space<vmem>>, vector<1x128x64xbf16>
    %368 = vector.shape_cast %367 : vector<1x128x64xbf16> to vector<128x64xbf16>
    %cst_209 = arith.constant dense<0.000000e+00> : vector<16x64xf32>
    %369 = tpu.matmul %322, %368, %cst_209 {dimension_numbers = #tpu.dot_dimension_numbers<[1], [0], [0], [1], [0, 0, 1, 1], [], []>} : vector<16x128xbf16>, vector<128x64xbf16>, vector<16x64xf32> -> vector<16x64xf32>
    %c1_210 = arith.constant 1 : index
    %c0_211 = arith.constant 0 : index
    %c0_212 = arith.constant 0 : index
    %370 = vector.load %arg32[%c1_210, %c0_211, %c0_212] : memref<2x1x64xf32, #tpu.memory_space<vmem>>, vector<1x1x64xf32>
    %371 = vector.shape_cast %370 : vector<1x1x64xf32> to vector<1x64xf32>
    %372 = vector.broadcast %371 : vector<1x64xf32> to vector<16x64xf32>
    %373 = arith.addf %369, %372 : vector<16x64xf32>
    %c1_213 = arith.constant 1 : index
    %c0_214 = arith.constant 0 : index
    %c0_215 = arith.constant 0 : index
    %374 = vector.load %arg33[%c1_213, %c0_214, %c0_215] : memref<2x128x64xbf16, #tpu.memory_space<vmem>>, vector<1x128x64xbf16>
    %375 = vector.shape_cast %374 : vector<1x128x64xbf16> to vector<128x64xbf16>
    %cst_216 = arith.constant dense<0.000000e+00> : vector<16x64xf32>
    %376 = tpu.matmul %322, %375, %cst_216 {dimension_numbers = #tpu.dot_dimension_numbers<[1], [0], [0], [1], [0, 0, 1, 1], [], []>} : vector<16x128xbf16>, vector<128x64xbf16>, vector<16x64xf32> -> vector<16x64xf32>
    %c1_217 = arith.constant 1 : index
    %c0_218 = arith.constant 0 : index
    %c0_219 = arith.constant 0 : index
    %377 = vector.load %arg34[%c1_217, %c0_218, %c0_219] : memref<2x1x64xf32, #tpu.memory_space<vmem>>, vector<1x1x64xf32>
    %378 = vector.shape_cast %377 : vector<1x1x64xf32> to vector<1x64xf32>
    %379 = vector.broadcast %378 : vector<1x64xf32> to vector<16x64xf32>
    %380 = arith.addf %376, %379 : vector<16x64xf32>
    %c1_220 = arith.constant 1 : index
    %c0_221 = arith.constant 0 : index
    %c0_222 = arith.constant 0 : index
    %381 = vector.load %arg35[%c1_220, %c0_221, %c0_222] : memref<2x128x64xbf16, #tpu.memory_space<vmem>>, vector<1x128x64xbf16>
    %382 = vector.shape_cast %381 : vector<1x128x64xbf16> to vector<128x64xbf16>
    %cst_223 = arith.constant dense<0.000000e+00> : vector<16x64xf32>
    %383 = tpu.matmul %322, %382, %cst_223 {dimension_numbers = #tpu.dot_dimension_numbers<[1], [0], [0], [1], [0, 0, 1, 1], [], []>} : vector<16x128xbf16>, vector<128x64xbf16>, vector<16x64xf32> -> vector<16x64xf32>
    %c1_224 = arith.constant 1 : index
    %c0_225 = arith.constant 0 : index
    %c0_226 = arith.constant 0 : index
    %384 = vector.load %arg36[%c1_224, %c0_225, %c0_226] : memref<2x1x64xf32, #tpu.memory_space<vmem>>, vector<1x1x64xf32>
    %385 = vector.shape_cast %384 : vector<1x1x64xf32> to vector<1x64xf32>
    %386 = vector.broadcast %385 : vector<1x64xf32> to vector<16x64xf32>
    %387 = arith.addf %383, %386 : vector<16x64xf32>
    %388 = arith.truncf %373 : vector<16x64xf32> to vector<16x64xbf16>
    %389 = arith.truncf %380 : vector<16x64xf32> to vector<16x64xbf16>
    "tpu.trace_start"() <{level = 10 : i32, message = "ic,jc->ij"}> : () -> ()
    %cst_227 = arith.constant dense<0.000000e+00> : vector<16x16xf32>
    %390 = tpu.matmul %388, %389, %cst_227 {dimension_numbers = #tpu.dot_dimension_numbers<[1], [1], [0], [0], [0, 0, 1, 0], [], []>} : vector<16x64xbf16>, vector<16x64xbf16>, vector<16x16xf32> -> vector<16x16xf32>
    "tpu.trace_stop"() : () -> ()
    %391 = arith.addf %390, %7 : vector<16x16xf32>
    %cst_228 = arith.constant dense<0xFF800000> : vector<16xf32>
    %392 = vector.multi_reduction <maximumf>, %391, %cst_228 [1] : vector<16x16xf32> to vector<16xf32>
    %393 = vector.shape_cast %392 : vector<16xf32> to vector<16x1xf32>
    %394 = vector.broadcast %393 : vector<16x1xf32> to vector<16x16xf32>
    %395 = arith.subf %391, %394 : vector<16x16xf32>
    %396 = math.exp %395 : vector<16x16xf32>
    %cst_229 = arith.constant dense<0.000000e+00> : vector<16xf32>
    %397 = vector.multi_reduction <add>, %396, %cst_229 [1] : vector<16x16xf32> to vector<16xf32>
    %398 = vector.shape_cast %397 : vector<16xf32> to vector<16x1xf32>
    %399 = tpu.reciprocal %398 {approx = true} : vector<16x1xf32> -> vector<16x1xf32>
    %400 = arith.mulf %399, %9 : vector<16x1xf32>
    %401 = vector.broadcast %400 : vector<16x1xf32> to vector<16x16xf32>
    %402 = arith.mulf %396, %401 : vector<16x16xf32>
    %403 = arith.truncf %402 : vector<16x16xf32> to vector<16x16xbf16>
    %404 = arith.truncf %387 : vector<16x64xf32> to vector<16x64xbf16>
    %cst_230 = arith.constant dense<0.000000e+00> : vector<16x64xf32>
    %405 = tpu.matmul %403, %404, %cst_230 {dimension_numbers = #tpu.dot_dimension_numbers<[1], [0], [0], [1], [0, 0, 1, 1], [], []>} : vector<16x16xbf16>, vector<16x64xbf16>, vector<16x64xf32> -> vector<16x64xf32>
    %406 = tpu.concatenate %366, %405 in 1 : vector<16x64xf32>, vector<16x64xf32> -> vector<16x128xf32>
    %407 = arith.addf %406, %327 : vector<16x128xf32>
    %cst_231 = arith.constant dense<0.000000e+00> : vector<128xf32>
    %408 = vector.multi_reduction <add>, %407, %cst_231 [0] : vector<16x128xf32> to vector<128xf32>
    %409 = vector.shape_cast %408 : vector<128xf32> to vector<1x128xf32>
    %cst_232 = arith.constant 6.250000e-02 : f32
    %410 = vector.broadcast %cst_232 : f32 to vector<1x128xf32>
    %411 = arith.mulf %409, %410 : vector<1x128xf32>
    %412 = arith.mulf %407, %407 : vector<16x128xf32>
    %cst_233 = arith.constant dense<0.000000e+00> : vector<128xf32>
    %413 = vector.multi_reduction <add>, %412, %cst_233 [0] : vector<16x128xf32> to vector<128xf32>
    %414 = vector.shape_cast %413 : vector<128xf32> to vector<1x128xf32>
    %cst_234 = arith.constant 6.250000e-02 : f32
    %415 = vector.broadcast %cst_234 : f32 to vector<1x128xf32>
    %416 = arith.mulf %414, %415 : vector<1x128xf32>
    %417 = arith.mulf %411, %411 : vector<1x128xf32>
    %418 = arith.subf %416, %417 : vector<1x128xf32>
    %cst_235 = arith.constant 0.000000e+00 : f32
    %419 = vector.broadcast %cst_235 : f32 to vector<1x128xf32>
    %420 = arith.maximumf %418, %419 : vector<1x128xf32>
    %421 = vector.broadcast %411 : vector<1x128xf32> to vector<16x128xf32>
    %422 = arith.subf %407, %421 : vector<16x128xf32>
    %cst_236 = arith.constant 9.99999974E-6 : f32
    %423 = vector.broadcast %cst_236 : f32 to vector<1x128xf32>
    %424 = arith.addf %420, %423 : vector<1x128xf32>
    %425 = math.rsqrt %424 : vector<1x128xf32>
    %426 = vector.broadcast %425 : vector<1x128xf32> to vector<16x128xf32>
    %427 = arith.mulf %422, %426 : vector<16x128xf32>
    %c0_237 = arith.constant 0 : index
    %c0_238 = arith.constant 0 : index
    %428 = vector.load %arg39[%c0_237, %c0_238] : memref<1x128xf32, #tpu.memory_space<vmem>>, vector<1x128xf32>
    %429 = vector.broadcast %428 : vector<1x128xf32> to vector<16x128xf32>
    %430 = arith.mulf %427, %429 : vector<16x128xf32>
    %c0_239 = arith.constant 0 : index
    %c0_240 = arith.constant 0 : index
    %431 = vector.load %arg40[%c0_239, %c0_240] : memref<1x128xf32, #tpu.memory_space<vmem>>, vector<1x128xf32>
    %432 = vector.broadcast %431 : vector<1x128xf32> to vector<16x128xf32>
    %433 = arith.addf %430, %432 : vector<16x128xf32>
    %cst_241 = arith.constant 0.000000e+00 : f32
    %434 = vector.broadcast %cst_241 : f32 to vector<16x128xf32>
    %435 = arith.cmpf ogt, %433, %434 : vector<16x128xf32>
    %cst_242 = arith.constant 1.000000e-01 : f32
    %436 = vector.broadcast %cst_242 : f32 to vector<16x128xf32>
    %437 = arith.mulf %436, %433 : vector<16x128xf32>
    %438 = arith.select %435, %433, %437 : vector<16x128xi1>, vector<16x128xf32>
    %439 = vector.shape_cast %438 : vector<16x128xf32> to vector<2x8x128xf32>
    %cst_243 = arith.constant 0.000000e+00 : f32
    %cst_244 = arith.constant 1.000000e+02 : f32
    %440 = vector.broadcast %cst_243 : f32 to vector<2x8x128xf32>
    %441 = arith.maximumf %440, %439 : vector<2x8x128xf32>
    %442 = vector.broadcast %cst_244 : f32 to vector<2x8x128xf32>
    %443 = arith.minimumf %442, %441 : vector<2x8x128xf32>
    %cst_245 = arith.constant dense<0.000000e+00> : vector<2x128xf32>
    %444 = vector.multi_reduction <add>, %443, %cst_245 [1] : vector<2x8x128xf32> to vector<2x128xf32>
    %cst_246 = arith.constant 8.000000e+00 : f32
    %445 = vector.broadcast %cst_246 : f32 to vector<2x128xf32>
    %446 = arith.divf %444, %445 : vector<2x128xf32>
    %cst_247 = arith.constant 0.000000e+00 : f32
    %cst_248 = arith.constant 1.000000e+02 : f32
    %447 = vector.broadcast %cst_247 : f32 to vector<2x128xf32>
    %448 = arith.maximumf %447, %446 : vector<2x128xf32>
    %449 = vector.broadcast %cst_248 : f32 to vector<2x128xf32>
    %450 = arith.minimumf %449, %448 : vector<2x128xf32>
    %451 = arith.truncf %450 : vector<2x128xf32> to vector<2x128xbf16>
    %c0_249 = arith.constant 0 : index
    %c0_250 = arith.constant 0 : index
    %452 = vector.load %arg41[%c0_249, %c0_250] : memref<128x128xbf16, #tpu.memory_space<vmem>>, vector<128x128xbf16>
    %cst_251 = arith.constant dense<0.000000e+00> : vector<2x128xf32>
    %453 = tpu.matmul %451, %452, %cst_251 {dimension_numbers = #tpu.dot_dimension_numbers<[1], [0], [0], [1], [0, 0, 1, 1], [], []>} : vector<2x128xbf16>, vector<128x128xbf16>, vector<2x128xf32> -> vector<2x128xf32>
    %c0_252 = arith.constant 0 : index
    %c0_253 = arith.constant 0 : index
    %454 = vector.load %arg42[%c0_252, %c0_253] : memref<1x128xf32, #tpu.memory_space<vmem>>, vector<1x128xf32>
    %455 = vector.broadcast %454 : vector<1x128xf32> to vector<2x128xf32>
    %456 = arith.addf %453, %455 : vector<2x128xf32>
    %c0_254 = arith.constant 0 : index
    %c0_255 = arith.constant 0 : index
    %457 = vector.load %arg43[%c0_254, %c0_255] : memref<2x128xf32, #tpu.memory_space<vmem>>, vector<2x128xf32>
    tpu.vector_store %arg43[%c0_254, %c0_255], %456 {strides = array<i32>} : memref<2x128xf32, #tpu.memory_space<vmem>>, vector<2x128xf32>,
    return
  }
}

</mosaic_0001>

<llo_original>
// kernel: mul.9
$region0: #{mul.9}
  #allocation0 [shape = 's32[1]{0}', space=sflag, size = 0x4, scoped, tag = 'scoped memory for mul.9']
  %s0 = inlined_call_operand.vmem [shape: f32[44], index: 0, kind: input, shape index: {}]
  %s1 = inlined_call_operand.vmem [shape: f32[44], index: 1, kind: input, shape index: {}]
  %s2 = inlined_call_operand.vmem [shape: f32[44], index: 2, kind: output, shape index: {}]
  %v3 = vld [vmem:[%s0] sm:$0x1]
  %v4 = vld [vmem:[%s1] sm:$0x1]
  %5 = xla_tuple %v3, %v4
  %6 = xla_tuple %5
  %v7 = vmul.f32 %v3, %v4
  %8 = xla_tuple %v7
  %9 = vst [vmem:[%s2] sm:$0x1] %v7

// kernel: graphformer_decoder_forward.1
$region0: #{graphformer_decoder_forward.1}
  #allocation0 [shape = 'u32[]', space=smem, size = 0x4, offset = 0x4, fixed_abs, tag = 'smem constant byte address 0x4 - core index']
  #allocation1 [shape = 'u32[72,128]{1,0:T(1,128)}', space=vmem, size = 0x9000, scoped, tag = 'internal scratch']
  %s0 = inlined_call_operand.smem [shape: u32[44], index: -1, kind: input, shape index: {}]
  %s1 = sld [smem:[%s0]]
  %s2 = scalar_lea.smem %s0, 1
  %s3 = sld [smem:[%s2]]
  %s4 = scalar_lea.smem %s0, 2
  %s5 = sld [smem:[%s4]]
  %s6 = scalar_lea.smem %s0, 3
  %s7 = sld [smem:[%s6]]
  %s8 = scalar_lea.smem %s0, 4
  %s9 = sld [smem:[%s8]]
  %s10 = scalar_lea.smem %s0, 5
  %s11 = sld [smem:[%s10]]
  %s12 = scalar_lea.smem %s0, 6
  %s13 = sld [smem:[%s12]]
  %s14 = scalar_lea.smem %s0, 7
  %s15 = sld [smem:[%s14]]
  %s16 = scalar_lea.smem %s0, 8
  %s17 = sld [smem:[%s16]]
  %s18 = scalar_lea.smem %s0, 9
  %s19 = sld [smem:[%s18]]
  %s20 = scalar_lea.smem %s0, 10
  %s21 = sld [smem:[%s20]]
  %s22 = scalar_lea.smem %s0, 11
  %s23 = sld [smem:[%s22]]
  %s24 = scalar_lea.smem %s0, 12
  %s25 = sld [smem:[%s24]]
  %s26 = scalar_lea.smem %s0, 13
  %s27 = sld [smem:[%s26]]
  %s28 = scalar_lea.smem %s0, 14
  %s29 = sld [smem:[%s28]]
  %s30 = scalar_lea.smem %s0, 15
  %s31 = sld [smem:[%s30]]
  %s32 = scalar_lea.smem %s0, 16
  %s33 = sld [smem:[%s32]]
  %s34 = scalar_lea.smem %s0, 17
  %s35 = sld [smem:[%s34]]
  %s36 = scalar_lea.smem %s0, 18
  %s37 = sld [smem:[%s36]]
  %s38 = scalar_lea.smem %s0, 19
  %s39 = sld [smem:[%s38]]
  %s40 = scalar_lea.smem %s0, 20
  %s41 = sld [smem:[%s40]]
  %s42 = scalar_lea.smem %s0, 21
  %s43 = sld [smem:[%s42]]
  %s44 = scalar_lea.smem %s0, 22
  %s45 = sld [smem:[%s44]]
  %s46 = scalar_lea.smem %s0, 23
  %s47 = sld [smem:[%s46]]
  %s48 = scalar_lea.smem %s0, 24
  %s49 = sld [smem:[%s48]]
  %s50 = scalar_lea.smem %s0, 25
  %s51 = sld [smem:[%s50]]
  %s52 = scalar_lea.smem %s0, 26
  %s53 = sld [smem:[%s52]]
  %s54 = scalar_lea.smem %s0, 27
  %s55 = sld [smem:[%s54]]
  %s56 = scalar_lea.smem %s0, 28
  %s57 = sld [smem:[%s56]]
  %s58 = scalar_lea.smem %s0, 29
  %s59 = sld [smem:[%s58]]
  %s60 = scalar_lea.smem %s0, 30
  %s61 = sld [smem:[%s60]]
  %s62 = scalar_lea.smem %s0, 31
  %s63 = sld [smem:[%s62]]
  %s64 = scalar_lea.smem %s0, 32
  %s65 = sld [smem:[%s64]]
  %s66 = scalar_lea.smem %s0, 33
  %s67 = sld [smem:[%s66]]
  %s68 = scalar_lea.smem %s0, 34
  %s69 = sld [smem:[%s68]]
  %s70 = scalar_lea.smem %s0, 35
  %s71 = sld [smem:[%s70]]
  %s72 = scalar_lea.smem %s0, 36
  %s73 = sld [smem:[%s72]]
  %s74 = scalar_lea.smem %s0, 37
  %s75 = sld [smem:[%s74]]
  %s76 = scalar_lea.smem %s0, 38
  %s77 = sld [smem:[%s76]]
  %s78 = scalar_lea.smem %s0, 39
  %s79 = sld [smem:[%s78]]
  %s80 = scalar_lea.smem %s0, 40
  %s81 = sld [smem:[%s80]]
  %s82 = scalar_lea.smem %s0, 41
  %s83 = sld [smem:[%s82]]
  %s84 = scalar_lea.smem %s0, 42
  %s85 = sld [smem:[%s84]]
  %s86 = scalar_lea.smem %s0, 43
  %s87 = sld [smem:[%s86]]
  %s88 = sld [smem:[#allocation0]]
  $region182: #{graphformer_decoder_forward.1} parent=0
    _
  %s90 = ssub.s32 1, %s88
  %s91 = scalar_select 0, %s90, %s88
  // Predicated region
  $region2: #{graphformer_decoder_forward.1} parent=0 // pred_check
    _
  $region3: #{graphformer_decoder_forward.1} parent=0 // pred_check_branch
    %93 = sbr.rel (0) target = $region5
  $region4: #{graphformer_decoder_forward.1} parent=0 // pred_region
    _
  $region5: #{graphformer_decoder_forward.1} parent=0 // pred_fallthru
    _
  // Predicated region
  $region6: #{graphformer_decoder_forward.1} parent=0 // pred_check
    _
  $region7: #{graphformer_decoder_forward.1} parent=0 // pred_check_branch
    %95 = sbr.rel (0) target = $region9
  $region8: #{graphformer_decoder_forward.1} parent=0 // pred_region
    _
  $region9: #{graphformer_decoder_forward.1} parent=0 // pred_fallthru
    _
  // Predicated region
  $region10: #{graphformer_decoder_forward.1} parent=0 // pred_check
    _
  $region11: #{graphformer_decoder_forward.1} parent=0 // pred_check_branch
    %97 = sbr.rel (0) target = $region13
  $region12: #{graphformer_decoder_forward.1} parent=0 // pred_region
    _
  $region13: #{graphformer_decoder_forward.1} parent=0 // pred_fallthru
    _
  // Predicated region
  $region14: #{graphformer_decoder_forward.1} parent=0 // pred_check
    _
  $region15: #{graphformer_decoder_forward.1} parent=0 // pred_check_branch
    %99 = sbr.rel (0) target = $region17
  $region16: #{graphformer_decoder_forward.1} parent=0 // pred_region
    _
  $region17: #{graphformer_decoder_forward.1} parent=0 // pred_fallthru
    _
  // Predicated region
  $region18: #{graphformer_decoder_forward.1} parent=0 // pred_check
    _
  $region19: #{graphformer_decoder_forward.1} parent=0 // pred_check_branch
    %101 = sbr.rel (0) target = $region21
  $region20: #{graphformer_decoder_forward.1} parent=0 // pred_region
    _
  $region21: #{graphformer_decoder_forward.1} parent=0 // pred_fallthru
    _
  // Predicated region
  $region22: #{graphformer_decoder_forward.1} parent=0 // pred_check
    _
  $region23: #{graphformer_decoder_forward.1} parent=0 // pred_check_branch
    %103 = sbr.rel (0) target = $region25
  $region24: #{graphformer_decoder_forward.1} parent=0 // pred_region
    _
  $region25: #{graphformer_decoder_forward.1} parent=0 // pred_fallthru
    _
  // Predicated region
  $region26: #{graphformer_decoder_forward.1} parent=0 // pred_check
    _
  $region27: #{graphformer_decoder_forward.1} parent=0 // pred_check_branch
    %105 = sbr.rel (0) target = $region29
  $region28: #{graphformer_decoder_forward.1} parent=0 // pred_region
    _
  $region29: #{graphformer_decoder_forward.1} parent=0 // pred_fallthru
    _
  // Predicated region
  $region30: #{graphformer_decoder_forward.1} parent=0 // pred_check
    _
  $region31: #{graphformer_decoder_forward.1} parent=0 // pred_check_branch
    %107 = sbr.rel (0) target = $region33
  $region32: #{graphformer_decoder_forward.1} parent=0 // pred_region
    _
  $region33: #{graphformer_decoder_forward.1} parent=0 // pred_fallthru
    _
  // Predicated region
  $region34: #{graphformer_decoder_forward.1} parent=0 // pred_check
    _
  $region35: #{graphformer_decoder_forward.1} parent=0 // pred_check_branch
    %109 = sbr.rel (0) target = $region37
  $region36: #{graphformer_decoder_forward.1} parent=0 // pred_region
    _
  $region37: #{graphformer_decoder_forward.1} parent=0 // pred_fallthru
    _
  // Predicated region
  $region38: #{graphformer_decoder_forward.1} parent=0 // pred_check
    _
  $region39: #{graphformer_decoder_forward.1} parent=0 // pred_check_branch
    %111 = sbr.rel (0) target = $region41
  $region40: #{graphformer_decoder_forward.1} parent=0 // pred_region
    _
  $region41: #{graphformer_decoder_forward.1} parent=0 // pred_fallthru
    _
  // Predicated region
  $region42: #{graphformer_decoder_forward.1} parent=0 // pred_check
    _
  $region43: #{graphformer_decoder_forward.1} parent=0 // pred_check_branch
    %113 = sbr.rel (0) target = $region45
  $region44: #{graphformer_decoder_forward.1} parent=0 // pred_region
    _
  $region45: #{graphformer_decoder_forward.1} parent=0 // pred_fallthru
    _
  // Predicated region
  $region46: #{graphformer_decoder_forward.1} parent=0 // pred_check
    _
  $region47: #{graphformer_decoder_forward.1} parent=0 // pred_check_branch
    %115 = sbr.rel (0) target = $region49
  $region48: #{graphformer_decoder_forward.1} parent=0 // pred_region
    _
  $region49: #{graphformer_decoder_forward.1} parent=0 // pred_fallthru
    _
  // Predicated region
  $region50: #{graphformer_decoder_forward.1} parent=0 // pred_check
    _
  $region51: #{graphformer_decoder_forward.1} parent=0 // pred_check_branch
    %117 = sbr.rel (0) target = $region53
  $region52: #{graphformer_decoder_forward.1} parent=0 // pred_region
    _
  $region53: #{graphformer_decoder_forward.1} parent=0 // pred_fallthru
    _
  // Predicated region
  $region54: #{graphformer_decoder_forward.1} parent=0 // pred_check
    _
  $region55: #{graphformer_decoder_forward.1} parent=0 // pred_check_branch
    %119 = sbr.rel (0) target = $region57
  $region56: #{graphformer_decoder_forward.1} parent=0 // pred_region
    _
  $region57: #{graphformer_decoder_forward.1} parent=0 // pred_fallthru
    _
  // Predicated region
  $region58: #{graphformer_decoder_forward.1} parent=0 // pred_check
    _
  $region59: #{graphformer_decoder_forward.1} parent=0 // pred_check_branch
    %121 = sbr.rel (0) target = $region61
  $region60: #{graphformer_decoder_forward.1} parent=0 // pred_region
    _
  $region61: #{graphformer_decoder_forward.1} parent=0 // pred_fallthru
    _
  // Predicated region
  $region62: #{graphformer_decoder_forward.1} parent=0 // pred_check
    _
  $region63: #{graphformer_decoder_forward.1} parent=0 // pred_check_branch
    %123 = sbr.rel (0) target = $region65
  $region64: #{graphformer_decoder_forward.1} parent=0 // pred_region
    _
  $region65: #{graphformer_decoder_forward.1} parent=0 // pred_fallthru
    _
  // Predicated region
  $region66: #{graphformer_decoder_forward.1} parent=0 // pred_check
    _
  $region67: #{graphformer_decoder_forward.1} parent=0 // pred_check_branch
    %125 = sbr.rel (0) target = $region69
  $region68: #{graphformer_decoder_forward.1} parent=0 // pred_region
    _
  $region69: #{graphformer_decoder_forward.1} parent=0 // pred_fallthru
    _
  // Predicated region
  $region70: #{graphformer_decoder_forward.1} parent=0 // pred_check
    _
  $region71: #{graphformer_decoder_forward.1} parent=0 // pred_check_branch
    %127 = sbr.rel (0) target = $region73
  $region72: #{graphformer_decoder_forward.1} parent=0 // pred_region
    _
  $region73: #{graphformer_decoder_forward.1} parent=0 // pred_fallthru
    _
  // Predicated region
  $region74: #{graphformer_decoder_forward.1} parent=0 // pred_check
    _
  $region75: #{graphformer_decoder_forward.1} parent=0 // pred_check_branch
    %129 = sbr.rel (0) target = $region77
  $region76: #{graphformer_decoder_forward.1} parent=0 // pred_region
    _
  $region77: #{graphformer_decoder_forward.1} parent=0 // pred_fallthru
    _
  // Predicated region
  $region78: #{graphformer_decoder_forward.1} parent=0 // pred_check
    _
  $region79: #{graphformer_decoder_forward.1} parent=0 // pred_check_branch
    %131 = sbr.rel (0) target = $region81
  $region80: #{graphformer_decoder_forward.1} parent=0 // pred_region
    _
  $region81: #{graphformer_decoder_forward.1} parent=0 // pred_fallthru
    _
  // Predicated region
  $region82: #{graphformer_decoder_forward.1} parent=0 // pred_check
    _
  $region83: #{graphformer_decoder_forward.1} parent=0 // pred_check_branch
    %133 = sbr.rel (0) target = $region85
  $region84: #{graphformer_decoder_forward.1} parent=0 // pred_region
    _
  $region85: #{graphformer_decoder_forward.1} parent=0 // pred_fallthru
    _
  // Predicated region
  $region86: #{graphformer_decoder_forward.1} parent=0 // pred_check
    _
  $region87: #{graphformer_decoder_forward.1} parent=0 // pred_check_branch
    %135 = sbr.rel (0) target = $region89
  $region88: #{graphformer_decoder_forward.1} parent=0 // pred_region
    _
  $region89: #{graphformer_decoder_forward.1} parent=0 // pred_fallthru
    _
  // Predicated region
  $region90: #{graphformer_decoder_forward.1} parent=0 // pred_check
    _
  $region91: #{graphformer_decoder_forward.1} parent=0 // pred_check_branch
    %137 = sbr.rel (0) target = $region93
  $region92: #{graphformer_decoder_forward.1} parent=0 // pred_region
    _
  $region93: #{graphformer_decoder_forward.1} parent=0 // pred_fallthru
    _
  // Predicated region
  $region94: #{graphformer_decoder_forward.1} parent=0 // pred_check
    _
  $region95: #{graphformer_decoder_forward.1} parent=0 // pred_check_branch
    %139 = sbr.rel (0) target = $region97
  $region96: #{graphformer_decoder_forward.1} parent=0 // pred_region
    _
  $region97: #{graphformer_decoder_forward.1} parent=0 // pred_fallthru
    _
  // Predicated region
  $region98: #{graphformer_decoder_forward.1} parent=0 // pred_check
    _
  $region99: #{graphformer_decoder_forward.1} parent=0 // pred_check_branch
    %141 = sbr.rel (0) target = $region101
  $region100: #{graphformer_decoder_forward.1} parent=0 // pred_region
    _
  $region101: #{graphformer_decoder_forward.1} parent=0 // pred_fallthru
    _
  // Predicated region
  $region102: #{graphformer_decoder_forward.1} parent=0 // pred_check
    _
  $region103: #{graphformer_decoder_forward.1} parent=0 // pred_check_branch
    %143 = sbr.rel (0) target = $region105
  $region104: #{graphformer_decoder_forward.1} parent=0 // pred_region
    _
  $region105: #{graphformer_decoder_forward.1} parent=0 // pred_fallthru
    _
  // Predicated region
  $region106: #{graphformer_decoder_forward.1} parent=0 // pred_check
    _
  $region107: #{graphformer_decoder_forward.1} parent=0 // pred_check_branch
    %145 = sbr.rel (0) target = $region109
  $region108: #{graphformer_decoder_forward.1} parent=0 // pred_region
    _
  $region109: #{graphformer_decoder_forward.1} parent=0 // pred_fallthru
    _
  // Predicated region
  $region110: #{graphformer_decoder_forward.1} parent=0 // pred_check
    _
  $region111: #{graphformer_decoder_forward.1} parent=0 // pred_check_branch
    %147 = sbr.rel (0) target = $region113
  $region112: #{graphformer_decoder_forward.1} parent=0 // pred_region
    _
  $region113: #{graphformer_decoder_forward.1} parent=0 // pred_fallthru
    _
  // Predicated region
  $region114: #{graphformer_decoder_forward.1} parent=0 // pred_check
    _
  $region115: #{graphformer_decoder_forward.1} parent=0 // pred_check_branch
    %149 = sbr.rel (0) target = $region117
  $region116: #{graphformer_decoder_forward.1} parent=0 // pred_region
    _
  $region117: #{graphformer_decoder_forward.1} parent=0 // pred_fallthru
    _
  // Predicated region
  $region118: #{graphformer_decoder_forward.1} parent=0 // pred_check
    _
  $region119: #{graphformer_decoder_forward.1} parent=0 // pred_check_branch
    %151 = sbr.rel (0) target = $region121
  $region120: #{graphformer_decoder_forward.1} parent=0 // pred_region
    _
  $region121: #{graphformer_decoder_forward.1} parent=0 // pred_fallthru
    _
  // Predicated region
  $region122: #{graphformer_decoder_forward.1} parent=0 // pred_check
    _
  $region123: #{graphformer_decoder_forward.1} parent=0 // pred_check_branch
    %153 = sbr.rel (0) target = $region125
  $region124: #{graphformer_decoder_forward.1} parent=0 // pred_region
    _
  $region125: #{graphformer_decoder_forward.1} parent=0 // pred_fallthru
    _
  // Predicated region
  $region126: #{graphformer_decoder_forward.1} parent=0 // pred_check
    _
  $region127: #{graphformer_decoder_forward.1} parent=0 // pred_check_branch
    %155 = sbr.rel (0) target = $region129
  $region128: #{graphformer_decoder_forward.1} parent=0 // pred_region
    _
  $region129: #{graphformer_decoder_forward.1} parent=0 // pred_fallthru
    _
  // Predicated region
  $region130: #{graphformer_decoder_forward.1} parent=0 // pred_check
    _
  $region131: #{graphformer_decoder_forward.1} parent=0 // pred_check_branch
    %157 = sbr.rel (0) target = $region133
  $region132: #{graphformer_decoder_forward.1} parent=0 // pred_region
    _
  $region133: #{graphformer_decoder_forward.1} parent=0 // pred_fallthru
    _
  // Predicated region
  $region134: #{graphformer_decoder_forward.1} parent=0 // pred_check
    _
  $region135: #{graphformer_decoder_forward.1} parent=0 // pred_check_branch
    %159 = sbr.rel (0) target = $region137
  $region136: #{graphformer_decoder_forward.1} parent=0 // pred_region
    _
  $region137: #{graphformer_decoder_forward.1} parent=0 // pred_fallthru
    _
  // Predicated region
  $region138: #{graphformer_decoder_forward.1} parent=0 // pred_check
    _
  $region139: #{graphformer_decoder_forward.1} parent=0 // pred_check_branch
    %161 = sbr.rel (0) target = $region141
  $region140: #{graphformer_decoder_forward.1} parent=0 // pred_region
    _
  $region141: #{graphformer_decoder_forward.1} parent=0 // pred_fallthru
    _
  // Predicated region
  $region142: #{graphformer_decoder_forward.1} parent=0 // pred_check
    _
  $region143: #{graphformer_decoder_forward.1} parent=0 // pred_check_branch
    %163 = sbr.rel (0) target = $region145
  $region144: #{graphformer_decoder_forward.1} parent=0 // pred_region
    _
  $region145: #{graphformer_decoder_forward.1} parent=0 // pred_fallthru
    _
  // Predicated region
  $region146: #{graphformer_decoder_forward.1} parent=0 // pred_check
    _
  $region147: #{graphformer_decoder_forward.1} parent=0 // pred_check_branch
    %165 = sbr.rel (0) target = $region149
  $region148: #{graphformer_decoder_forward.1} parent=0 // pred_region
    _
  $region149: #{graphformer_decoder_forward.1} parent=0 // pred_fallthru
    _
  // Predicated region
  $region150: #{graphformer_decoder_forward.1} parent=0 // pred_check
    _
  $region151: #{graphformer_decoder_forward.1} parent=0 // pred_check_branch
    %167 = sbr.rel (0) target = $region153
  $region152: #{graphformer_decoder_forward.1} parent=0 // pred_region
    _
  $region153: #{graphformer_decoder_forward.1} parent=0 // pred_fallthru
    _
  // Predicated region
  $region154: #{graphformer_decoder_forward.1} parent=0 // pred_check
    _
  $region155: #{graphformer_decoder_forward.1} parent=0 // pred_check_branch
    %169 = sbr.rel (0) target = $region157
  $region156: #{graphformer_decoder_forward.1} parent=0 // pred_region
    _
  $region157: #{graphformer_decoder_forward.1} parent=0 // pred_fallthru
    _
  // Predicated region
  $region158: #{graphformer_decoder_forward.1} parent=0 // pred_check
    _
  $region159: #{graphformer_decoder_forward.1} parent=0 // pred_check_branch
    %171 = sbr.rel (0) target = $region161
  $region160: #{graphformer_decoder_forward.1} parent=0 // pred_region
    _
  $region161: #{graphformer_decoder_forward.1} parent=0 // pred_fallthru
    _
  // Predicated region
  $region162: #{graphformer_decoder_forward.1} parent=0 // pred_check
    _
  $region163: #{graphformer_decoder_forward.1} parent=0 // pred_check_branch
    %173 = sbr.rel (0) target = $region165
  $region164: #{graphformer_decoder_forward.1} parent=0 // pred_region
    _
  $region165: #{graphformer_decoder_forward.1} parent=0 // pred_fallthru
    _
  // Predicated region
  $region166: #{graphformer_decoder_forward.1} parent=0 // pred_check
    _
  $region167: #{graphformer_decoder_forward.1} parent=0 // pred_check_branch
    %175 = sbr.rel (0) target = $region169
  $region168: #{graphformer_decoder_forward.1} parent=0 // pred_region
    _
  $region169: #{graphformer_decoder_forward.1} parent=0 // pred_fallthru
    _
  // Predicated region
  $region170: #{graphformer_decoder_forward.1} parent=0 // pred_check
    _
  $region171: #{graphformer_decoder_forward.1} parent=0 // pred_check_branch
    %177 = sbr.rel (0) target = $region173
  $region172: #{graphformer_decoder_forward.1} parent=0 // pred_region
    _
  $region173: #{graphformer_decoder_forward.1} parent=0 // pred_fallthru
    _
  %v179 = vld [vmem:[%s1] sm:$0xff]
  %v180 = vld [vmem:[%s1 + $0x8] sm:$0xff]
  %v181 = vld [vmem:[%s3] sm:$0xf]
  %v182 = vld [vmem:[%s3 + $0x4] sm:$0xf]
  %v183 = vld [vmem:[%s5] sm:$0x3]
  %v184 = vld [vmem:[%s5 + $0x2] sm:$0x3]
  %v185 = vunpack.c.0.s8 %v183
  %v186 = vunpack.c.0.s8 %v184
  %v187 = vcvt.s32.f32 %v185
  %v188 = vcvt.s32.f32 %v186
  %v189 = vsub.f32 %v187, 1.0
  %v190 = vsub.f32 %v188, 1.0
  %v191 = vmul.f32 %v189, 1e+30
  %v192 = vmul.f32 %v190, 1e+30
  %vm193 = vcmask 130048
  %v194 = vsel %vm193, %v187, -inf
  %195 = vmax.xlane.f32.xlu0 %v194
  %v196 = vpop.xlane.xlu0 %195
  %v197 = vsel %vm193, %v188, -inf
  %198 = vmax.xlane.f32.xlu0 %v197
  %v199 = vpop.xlane.xlu0 %198
  %v200 = vpack.c.bf16 %v180, %v179
  %v201 = vld [vmem:[%s7] sm:$0xf]
  %v202 = vld [vmem:[%s7 + $0x4] sm:$0xf]
  %v203 = vld [vmem:[%s7 + $0x8] sm:$0xf]
  %v204 = vld [vmem:[%s7 + $0xc] sm:$0xf]
  %v205 = vld [vmem:[%s7 + $0x10] sm:$0xf]
  %v206 = vld [vmem:[%s7 + $0x14] sm:$0xf]
  %v207 = vld [vmem:[%s7 + $0x18] sm:$0xf]
  %v208 = vld [vmem:[%s7 + $0x1c] sm:$0xf]
  %v209 = vld [vmem:[%s7 + $0x20] sm:$0xf]
  %v210 = vld [vmem:[%s7 + $0x24] sm:$0xf]
  %v211 = vld [vmem:[%s7 + $0x28] sm:$0xf]
  %v212 = vld [vmem:[%s7 + $0x2c] sm:$0xf]
  %v213 = vld [vmem:[%s7 + $0x30] sm:$0xf]
  %v214 = vld [vmem:[%s7 + $0x34] sm:$0xf]
  %v215 = vld [vmem:[%s7 + $0x38] sm:$0xf]
  %v216 = vld [vmem:[%s7 + $0x3c] sm:$0xf]
  %v217 = vld [vmem:[%s9] sm:$0x1]
  %v219 = vperm.slane %v217, 0
  %v237 = vunpack.c.l.b16 %v201
  %v238 = vunpack.c.l.b16 %v202
  %v239 = vunpack.c.l.b16 %v203
  %v240 = vunpack.c.l.b16 %v204
  %v241 = vunpack.c.l.b16 %v205
  %v242 = vunpack.c.l.b16 %v206
  %v243 = vunpack.c.l.b16 %v207
  %v244 = vunpack.c.l.b16 %v208
  %v245 = vunpack.c.l.b16 %v209
  %v246 = vunpack.c.l.b16 %v210
  %v247 = vunpack.c.l.b16 %v211
  %v248 = vunpack.c.l.b16 %v212
  %v249 = vunpack.c.l.b16 %v213
  %v250 = vunpack.c.l.b16 %v214
  %v251 = vunpack.c.l.b16 %v215
  %v252 = vunpack.c.l.b16 %v216
  %v253 = vpack.c.b16 %v238, %v237
  %v254 = vpack.c.b16 %v240, %v239
  %v255 = vpack.c.b16 %v242, %v241
  %v256 = vpack.c.b16 %v244, %v243
  %v257 = vpack.c.b16 %v246, %v245
  %v258 = vpack.c.b16 %v248, %v247
  %v259 = vpack.c.b16 %v250, %v249
  %v260 = vpack.c.b16 %v252, %v251
  %269 = vmatpush.bf16.msra.mxu0 %v260
  %270 = vmatpush.bf16.msra.mxu0 %v259
  %271 = vmatpush.bf16.msra.mxu0 %v258
  %272 = vmatpush.bf16.msra.mxu0 %v257
  %273 = vmatpush.bf16.msra.mxu0 %v256
  %274 = vmatpush.bf16.msra.mxu0 %v255
  %275 = vmatpush.bf16.msra.mxu0 %v254
  %276 = vmatpush.bf16.msra.mxu0 %v253
  %277 = vmatmul.bf16.gmra.mxu0 %v200
  %v278 = vpop.f32.mrf.mxu0
  %v279 = vadd.f32 %v219, %v278
  %v280 = vpop.f32.mrf.mxu0
  %v281 = vadd.f32 %v219, %v280
  %282 = vdwg.mxu0
  %v283 = vpack.c.bf16 %v281, %v279
  %v286 = vunpack.c.l.b16 %v181
  %v287 = vunpack.c.l.b16 %v182
  %v288 = vpack.c.b16 %v287, %v286
  %v290 = vsel %vm193, %v288, 0
  %292 = vmatpush.bf16.msra.mxu0 0
  %293 = vmatpush.bf16.msra.mxu0 0
  %294 = vmatpush.bf16.msra.mxu0 0
  %295 = vmatpush.bf16.msra.mxu0 0
  %296 = vmatpush.bf16.msra.mxu0 0
  %297 = vmatpush.bf16.msra.mxu0 0
  %298 = vmatpush.bf16.msra.mxu0 0
  %299 = vmatpush.bf16.msra.mxu0 %v283
  %300 = vmatmul.bf16.gmra.mxu0 %v290
  %v301 = vpop.f32.mrf.mxu0
  %v302 = vadd.f32 0.0, %v301
  %v303 = vpop.f32.mrf.mxu0
  %v304 = vadd.f32 0.0, %v303
  %305 = vdwg.mxu0
  %v306 = vadd.f32 %v302, %v304
  %v307 = vrot.slane %v306, 4
  %v308 = vadd.f32 %v306, %v307
  %v309 = vrot.slane %v308, 2
  %v310 = vadd.f32 %v308, %v309
  %v311 = vrot.slane %v310, 1
  %v312 = vadd.f32 %v310, %v311
  %v313 = vmul.f32 %v312, 0.0625
  %v314 = vmul.f32 %v302, %v302
  %v315 = vmul.f32 %v304, %v304
  %v316 = vadd.f32 %v314, %v315
  %v317 = vrot.slane %v316, 4
  %v318 = vadd.f32 %v316, %v317
  %v319 = vrot.slane %v318, 2
  %v320 = vadd.f32 %v318, %v319
  %v321 = vrot.slane %v320, 1
  %v322 = vadd.f32 %v320, %v321
  %v323 = vmul.f32 %v322, 0.0625
  %v324 = vmul.f32 %v313, %v313
  %v325 = vsub.f32 %v323, %v324
  %v326 = vmax.f32 %v325, 0.0
  %v327 = vsub.f32 %v302, %v313
  %v328 = vsub.f32 %v304, %v313
  %v329 = vadd.f32 %v326, 1e-05
  %v330 = vrsqrt.pop %v329
  %v331 = vmul.f32 %v330, %v329
  %v332 = vmul.f32 %v331, %v330
  %v333 = vmul.f32 0.5, %v332
  %v334 = vsub.f32 1.5, %v333
  %v335 = vmul.f32 %v330, %v334
  %vm336 = vweird.f32 %v329
  %vm337 = vweird.f32 %v330
  %vm338 = vmor %vm336, %vm337
  %v339 = vsel %vm338, %v330, %v335
  %v340 = vmul.f32 %v327, %v339
  %v341 = vmul.f32 %v328, %v339
  %v342 = vld [vmem:[%s11] sm:$0x1]
  %v344 = vperm.slane %v342, 0
  %v346 = vmul.f32 %v340, %v344
  %v347 = vmul.f32 %v341, %v344
  %v348 = vld [vmem:[%s13] sm:$0x1]
  %v350 = vperm.slane %v348, 0
  %v352 = vadd.f32 %v346, %v350
  %v353 = vadd.f32 %v347, %v350
  %vm354 = vcmp.gt.f32.partialorder %v352, 0.0
  %vm355 = vcmp.gt.f32.partialorder %v353, 0.0
  %v356 = vmul.f32 %v352, 0.1
  %v357 = vmul.f32 %v353, 0.1
  %v358 = vsel %vm354, %v352, %v356
  %v359 = vsel %vm355, %v353, %v357
  %v360 = vpack.c.bf16 %v359, %v358
  %v361 = vld [vmem:[%s15] sm:$0xf]
  %v362 = vld [vmem:[%s15 + $0x4] sm:$0xf]
  %v363 = vld [vmem:[%s15 + $0x8] sm:$0xf]
  %v364 = vld [vmem:[%s15 + $0xc] sm:$0xf]
  %v365 = vld [vmem:[%s15 + $0x10] sm:$0xf]
  %v366 = vld [vmem:[%s15 + $0x14] sm:$0xf]
  %v367 = vld [vmem:[%s15 + $0x18] sm:$0xf]
  %v368 = vld [vmem:[%s15 + $0x1c] sm:$0xf]
  %v369 = vld [vmem:[%s15 + $0x20] sm:$0xf]
  %v370 = vld [vmem:[%s15 + $0x24] sm:$0xf]
  %v371 = vld [vmem:[%s15 + $0x28] sm:$0xf]
  %v372 = vld [vmem:[%s15 + $0x2c] sm:$0xf]
  %v373 = vld [vmem:[%s15 + $0x30] sm:$0xf]
  %v374 = vld [vmem:[%s15 + $0x34] sm:$0xf]
  %v375 = vld [vmem:[%s15 + $0x38] sm:$0xf]
  %v376 = vld [vmem:[%s15 + $0x3c] sm:$0xf]
  %v377 = vld [vmem:[%s17] sm:$0x1]
  %v379 = vperm.slane %v377, 0
  %v397 = vunpack.c.l.b16 %v361
  %v398 = vunpack.c.l.b16 %v362
  %v399 = vunpack.c.l.b16 %v363
  %v400 = vunpack.c.l.b16 %v364
  %v401 = vunpack.c.l.b16 %v365
  %v402 = vunpack.c.l.b16 %v366
  %v403 = vunpack.c.l.b16 %v367
  %v404 = vunpack.c.l.b16 %v368
  %v405 = vunpack.c.l.b16 %v369
  %v406 = vunpack.c.l.b16 %v370
  %v407 = vunpack.c.l.b16 %v371
  %v408 = vunpack.c.l.b16 %v372
  %v409 = vunpack.c.l.b16 %v373
  %v410 = vunpack.c.l.b16 %v374
  %v411 = vunpack.c.l.b16 %v375
  %v412 = vunpack.c.l.b16 %v376
  %v413 = vpack.c.b16 %v398, %v397
  %v414 = vpack.c.b16 %v400, %v399
  %v415 = vpack.c.b16 %v402, %v401
  %v416 = vpack.c.b16 %v404, %v403
  %v417 = vpack.c.b16 %v406, %v405
  %v418 = vpack.c.b16 %v408, %v407
  %v419 = vpack.c.b16 %v410, %v409
  %v420 = vpack.c.b16 %v412, %v411
  %429 = vmatpush.bf16.msra.mxu0 %v420
  %430 = vmatpush.bf16.msra.mxu0 %v419
  %431 = vmatpush.bf16.msra.mxu0 %v418
  %432 = vmatpush.bf16.msra.mxu0 %v417
  %433 = vmatpush.bf16.msra.mxu0 %v416
  %434 = vmatpush.bf16.msra.mxu0 %v415
  %435 = vmatpush.bf16.msra.mxu0 %v414
  %436 = vmatpush.bf16.msra.mxu0 %v413
  %437 = vmatmul.bf16.gmra.mxu0 %v360
  %v438 = vpop.f32.mrf.mxu0
  %v439 = vadd.f32 %v379, %v438
  %v440 = vpop.f32.mrf.mxu0
  %v441 = vadd.f32 %v379, %v440
  %442 = vdwg.mxu0
  %v443 = vpack.c.bf16 %v441, %v439
  %444 = vmatpush.bf16.msra.mxu0 0
  %445 = vmatpush.bf16.msra.mxu0 0
  %446 = vmatpush.bf16.msra.mxu0 0
  %447 = vmatpush.bf16.msra.mxu0 0
  %448 = vmatpush.bf16.msra.mxu0 0
  %449 = vmatpush.bf16.msra.mxu0 0
  %450 = vmatpush.bf16.msra.mxu0 0
  %451 = vmatpush.bf16.msra.mxu0 %v443
  %452 = vmatmul.bf16.gmra.mxu0 %v290
  %v453 = vpop.f32.mrf.mxu0
  %v454 = vadd.f32 0.0, %v453
  %v455 = vpop.f32.mrf.mxu0
  %v456 = vadd.f32 0.0, %v455
  %457 = vdwg.mxu0
  %v458 = vadd.f32 %v454, %v456
  %v459 = vrot.slane %v458, 4
  %v460 = vadd.f32 %v458, %v459
  %v461 = vrot.slane %v460, 2
  %v462 = vadd.f32 %v460, %v461
  %v463 = vrot.slane %v462, 1
  %v464 = vadd.f32 %v462, %v463
  %v465 = vmul.f32 %v464, 0.0625
  %v466 = vmul.f32 %v454, %v454
  %v467 = vmul.f32 %v456, %v456
  %v468 = vadd.f32 %v466, %v467
  %v469 = vrot.slane %v468, 4
  %v470 = vadd.f32 %v468, %v469
  %v471 = vrot.slane %v470, 2
  %v472 = vadd.f32 %v470, %v471
  %v473 = vrot.slane %v472, 1
  %v474 = vadd.f32 %v472, %v473
  %v475 = vmul.f32 %v474, 0.0625
  %v476 = vmul.f32 %v465, %v465
  %v477 = vsub.f32 %v475, %v476
  %v478 = vmax.f32 %v477, 0.0
  %v479 = vsub.f32 %v454, %v465
  %v480 = vsub.f32 %v456, %v465
  %v481 = vadd.f32 %v478, 1e-05
  %v482 = vrsqrt.pop %v481
  %v483 = vmul.f32 %v482, %v481
  %v484 = vmul.f32 %v483, %v482
  %v485 = vmul.f32 0.5, %v484
  %v486 = vsub.f32 1.5, %v485
  %v487 = vmul.f32 %v482, %v486
  %vm488 = vweird.f32 %v481
  %vm489 = vweird.f32 %v482
  %vm490 = vmor %vm488, %vm489
  %v491 = vsel %vm490, %v482, %v487
  %v492 = vmul.f32 %v479, %v491
  %v493 = vmul.f32 %v480, %v491
  %v494 = vld [vmem:[%s19] sm:$0x1]
  %v496 = vperm.slane %v494, 0
  %v498 = vmul.f32 %v492, %v496
  %v499 = vmul.f32 %v493, %v496
  %v500 = vld [vmem:[%s21] sm:$0x1]
  %v502 = vperm.slane %v500, 0
  %v504 = vadd.f32 %v498, %v502
  %v505 = vadd.f32 %v499, %v502
  %vm506 = vcmp.gt.f32.partialorder %v504, 0.0
  %vm507 = vcmp.gt.f32.partialorder %v505, 0.0
  %v508 = vmul.f32 %v504, 0.1
  %v509 = vmul.f32 %v505, 0.1
  %v510 = vsel %vm506, %v504, %v508
  %v511 = vsel %vm507, %v505, %v509
  %v512 = vpack.c.bf16 %v511, %v510
  %v513 = vld [vmem:[%s35] sm:$0xf]
  %v514 = vld [vmem:[%s35 + $0x4] sm:$0xf]
  %v515 = vld [vmem:[%s35 + $0x8] sm:$0xf]
  %v516 = vld [vmem:[%s35 + $0xc] sm:$0xf]
  %v517 = vld [vmem:[%s35 + $0x10] sm:$0xf]
  %v518 = vld [vmem:[%s35 + $0x14] sm:$0xf]
  %v519 = vld [vmem:[%s35 + $0x18] sm:$0xf]
  %v520 = vld [vmem:[%s35 + $0x1c] sm:$0xf]
  %v521 = vld [vmem:[%s35 + $0x20] sm:$0xf]
  %v522 = vld [vmem:[%s35 + $0x24] sm:$0xf]
  %v523 = vld [vmem:[%s35 + $0x28] sm:$0xf]
  %v524 = vld [vmem:[%s35 + $0x2c] sm:$0xf]
  %v525 = vld [vmem:[%s35 + $0x30] sm:$0xf]
  %v526 = vld [vmem:[%s35 + $0x34] sm:$0xf]
  %v527 = vld [vmem:[%s35 + $0x38] sm:$0xf]
  %v528 = vld [vmem:[%s35 + $0x3c] sm:$0xf]
  %v529 = vld [vmem:[%s37] sm:$0x1]
  %v531 = vperm.slane %v529, 0
  %v549 = vunpack.c.l.b16 %v513
  %v550 = vunpack.c.l.b16 %v514
  %v551 = vunpack.c.l.b16 %v515
  %v552 = vunpack.c.l.b16 %v516
  %v553 = vunpack.c.l.b16 %v517
  %v554 = vunpack.c.l.b16 %v518
  %v555 = vunpack.c.l.b16 %v519
  %v556 = vunpack.c.l.b16 %v520
  %v557 = vunpack.c.l.b16 %v521
  %v558 = vunpack.c.l.b16 %v522
  %v559 = vunpack.c.l.b16 %v523
  %v560 = vunpack.c.l.b16 %v524
  %v561 = vunpack.c.l.b16 %v525
  %v562 = vunpack.c.l.b16 %v526
  %v563 = vunpack.c.l.b16 %v527
  %v564 = vunpack.c.l.b16 %v528
  %v565 = vpack.c.b16 %v550, %v549
  %v566 = vpack.c.b16 %v552, %v551
  %v567 = vpack.c.b16 %v554, %v553
  %v568 = vpack.c.b16 %v556, %v555
  %v569 = vpack.c.b16 %v558, %v557
  %v570 = vpack.c.b16 %v560, %v559
  %v571 = vpack.c.b16 %v562, %v561
  %v572 = vpack.c.b16 %v564, %v563
  %581 = vmatpush.bf16.msra.mxu0 %v572
  %582 = vmatpush.bf16.msra.mxu0 %v571
  %583 = vmatpush.bf16.msra.mxu0 %v570
  %584 = vmatpush.bf16.msra.mxu0 %v569
  %585 = vmatpush.bf16.msra.mxu0 %v568
  %586 = vmatpush.bf16.msra.mxu0 %v567
  %587 = vmatpush.bf16.msra.mxu0 %v566
  %588 = vmatpush.bf16.msra.mxu0 %v565
  %589 = vmatmul.bf16.gmra.mxu0 %v512
  %v590 = vpop.f32.mrf.mxu0
  %v591 = vadd.f32 %v531, %v590
  %v592 = vpop.f32.mrf.mxu0
  %v593 = vadd.f32 %v531, %v592
  %594 = vdwg.mxu0
  %v595 = vld [vmem:[%s23] sm:$0xf]
  %v596 = vld [vmem:[%s23 + $0x4] sm:$0xf]
  %v597 = vld [vmem:[%s23 + $0x8] sm:$0xf]
  %v598 = vld [vmem:[%s23 + $0xc] sm:$0xf]
  %v599 = vld [vmem:[%s23 + $0x10] sm:$0xf]
  %v600 = vld [vmem:[%s23 + $0x14] sm:$0xf]
  %v601 = vld [vmem:[%s23 + $0x18] sm:$0xf]
  %v602 = vld [vmem:[%s23 + $0x1c] sm:$0xf]
  %v603 = vld [vmem:[%s23 + $0x20] sm:$0xf]
  %v604 = vld [vmem:[%s23 + $0x24] sm:$0xf]
  %v605 = vld [vmem:[%s23 + $0x28] sm:$0xf]
  %v606 = vld [vmem:[%s23 + $0x2c] sm:$0xf]
  %v607 = vld [vmem:[%s23 + $0x30] sm:$0xf]
  %v608 = vld [vmem:[%s23 + $0x34] sm:$0xf]
  %v609 = vld [vmem:[%s23 + $0x38] sm:$0xf]
  %v610 = vld [vmem:[%s23 + $0x3c] sm:$0xf]
  %v611 = vld [vmem:[%s25] sm:$0x1]
  %v613 = vperm.slane %v611, 0
  %v631 = vunpack.c.l.b16 %v595
  %v632 = vunpack.c.l.b16 %v596
  %v633 = vunpack.c.l.b16 %v597
  %v634 = vunpack.c.l.b16 %v598
  %v635 = vunpack.c.l.b16 %v599
  %v636 = vunpack.c.l.b16 %v600
  %v637 = vunpack.c.l.b16 %v601
  %v638 = vunpack.c.l.b16 %v602
  %v639 = vunpack.c.l.b16 %v603
  %v640 = vunpack.c.l.b16 %v604
  %v641 = vunpack.c.l.b16 %v605
  %v642 = vunpack.c.l.b16 %v606
  %v643 = vunpack.c.l.b16 %v607
  %v644 = vunpack.c.l.b16 %v608
  %v645 = vunpack.c.l.b16 %v609
  %v646 = vunpack.c.l.b16 %v610
  %v647 = vpack.c.b16 %v632, %v631
  %v648 = vpack.c.b16 %v634, %v633
  %v649 = vpack.c.b16 %v636, %v635
  %v650 = vpack.c.b16 %v638, %v637
  %v651 = vpack.c.b16 %v640, %v639
  %v652 = vpack.c.b16 %v642, %v641
  %v653 = vpack.c.b16 %v644, %v643
  %v654 = vpack.c.b16 %v646, %v645
  %663 = vmatpush.bf16.msra.mxu0 %v654
  %664 = vmatpush.bf16.msra.mxu0 %v653
  %665 = vmatpush.bf16.msra.mxu0 %v652
  %666 = vmatpush.bf16.msra.mxu0 %v651
  %667 = vmatpush.bf16.msra.mxu0 %v650
  %668 = vmatpush.bf16.msra.mxu0 %v649
  %669 = vmatpush.bf16.msra.mxu0 %v648
  %670 = vmatpush.bf16.msra.mxu0 %v647
  %671 = vmatmul.bf16.gmra.mxu0 %v512
  %v672 = vpop.f32.mrf.mxu0
  %v673 = vadd.f32 %v613, %v672
  %v674 = vpop.f32.mrf.mxu0
  %v675 = vadd.f32 %v613, %v674
  %676 = vdwg.mxu0
  %v677 = vld [vmem:[%s27] sm:$0xf]
  %v678 = vld [vmem:[%s27 + $0x4] sm:$0xf]
  %v679 = vld [vmem:[%s27 + $0x8] sm:$0xf]
  %v680 = vld [vmem:[%s27 + $0xc] sm:$0xf]
  %v681 = vld [vmem:[%s27 + $0x10] sm:$0xf]
  %v682 = vld [vmem:[%s27 + $0x14] sm:$0xf]
  %v683 = vld [vmem:[%s27 + $0x18] sm:$0xf]
  %v684 = vld [vmem:[%s27 + $0x1c] sm:$0xf]
  %v685 = vld [vmem:[%s27 + $0x20] sm:$0xf]
  %v686 = vld [vmem:[%s27 + $0x24] sm:$0xf]
  %v687 = vld [vmem:[%s27 + $0x28] sm:$0xf]
  %v688 = vld [vmem:[%s27 + $0x2c] sm:$0xf]
  %v689 = vld [vmem:[%s27 + $0x30] sm:$0xf]
  %v690 = vld [vmem:[%s27 + $0x34] sm:$0xf]
  %v691 = vld [vmem:[%s27 + $0x38] sm:$0xf]
  %v692 = vld [vmem:[%s27 + $0x3c] sm:$0xf]
  %v693 = vld [vmem:[%s29] sm:$0x1]
  %v695 = vperm.slane %v693, 0
  %v713 = vunpack.c.l.b16 %v677
  %v714 = vunpack.c.l.b16 %v678
  %v715 = vunpack.c.l.b16 %v679
  %v716 = vunpack.c.l.b16 %v680
  %v717 = vunpack.c.l.b16 %v681
  %v718 = vunpack.c.l.b16 %v682
  %v719 = vunpack.c.l.b16 %v683
  %v720 = vunpack.c.l.b16 %v684
  %v721 = vunpack.c.l.b16 %v685
  %v722 = vunpack.c.l.b16 %v686
  %v723 = vunpack.c.l.b16 %v687
  %v724 = vunpack.c.l.b16 %v688
  %v725 = vunpack.c.l.b16 %v689
  %v726 = vunpack.c.l.b16 %v690
  %v727 = vunpack.c.l.b16 %v691
  %v728 = vunpack.c.l.b16 %v692
  %v729 = vpack.c.b16 %v714, %v713
  %v730 = vpack.c.b16 %v716, %v715
  %v731 = vpack.c.b16 %v718, %v717
  %v732 = vpack.c.b16 %v720, %v719
  %v733 = vpack.c.b16 %v722, %v721
  %v734 = vpack.c.b16 %v724, %v723
  %v735 = vpack.c.b16 %v726, %v725
  %v736 = vpack.c.b16 %v728, %v727
  %745 = vmatpush.bf16.msra.mxu0 %v736
  %746 = vmatpush.bf16.msra.mxu0 %v735
  %747 = vmatpush.bf16.msra.mxu0 %v734
  %748 = vmatpush.bf16.msra.mxu0 %v733
  %749 = vmatpush.bf16.msra.mxu0 %v732
  %750 = vmatpush.bf16.msra.mxu0 %v731
  %751 = vmatpush.bf16.msra.mxu0 %v730
  %752 = vmatpush.bf16.msra.mxu0 %v729
  %753 = vmatmul.bf16.gmra.mxu0 %v512
  %v754 = vpop.f32.mrf.mxu0
  %v755 = vadd.f32 %v695, %v754
  %v756 = vpop.f32.mrf.mxu0
  %v757 = vadd.f32 %v695, %v756
  %758 = vdwg.mxu0
  %v759 = vld [vmem:[%s31] sm:$0xf]
  %v760 = vld [vmem:[%s31 + $0x4] sm:$0xf]
  %v761 = vld [vmem:[%s31 + $0x8] sm:$0xf]
  %v762 = vld [vmem:[%s31 + $0xc] sm:$0xf]
  %v763 = vld [vmem:[%s31 + $0x10] sm:$0xf]
  %v764 = vld [vmem:[%s31 + $0x14] sm:$0xf]
  %v765 = vld [vmem:[%s31 + $0x18] sm:$0xf]
  %v766 = vld [vmem:[%s31 + $0x1c] sm:$0xf]
  %v767 = vld [vmem:[%s31 + $0x20] sm:$0xf]
  %v768 = vld [vmem:[%s31 + $0x24] sm:$0xf]
  %v769 = vld [vmem:[%s31 + $0x28] sm:$0xf]
  %v770 = vld [vmem:[%s31 + $0x2c] sm:$0xf]
  %v771 = vld [vmem:[%s31 + $0x30] sm:$0xf]
  %v772 = vld [vmem:[%s31 + $0x34] sm:$0xf]
  %v773 = vld [vmem:[%s31 + $0x38] sm:$0xf]
  %v774 = vld [vmem:[%s31 + $0x3c] sm:$0xf]
  %v775 = vld [vmem:[%s33] sm:$0x1]
  %v777 = vperm.slane %v775, 0
  %v795 = vunpack.c.l.b16 %v759
  %v796 = vunpack.c.l.b16 %v760
  %v797 = vunpack.c.l.b16 %v761
  %v798 = vunpack.c.l.b16 %v762
  %v799 = vunpack.c.l.b16 %v763
  %v800 = vunpack.c.l.b16 %v764
  %v801 = vunpack.c.l.b16 %v765
  %v802 = vunpack.c.l.b16 %v766
  %v803 = vunpack.c.l.b16 %v767
  %v804 = vunpack.c.l.b16 %v768
  %v805 = vunpack.c.l.b16 %v769
  %v806 = vunpack.c.l.b16 %v770
  %v807 = vunpack.c.l.b16 %v771
  %v808 = vunpack.c.l.b16 %v772
  %v809 = vunpack.c.l.b16 %v773
  %v810 = vunpack.c.l.b16 %v774
  %v811 = vpack.c.b16 %v796, %v795
  %v812 = vpack.c.b16 %v798, %v797
  %v813 = vpack.c.b16 %v800, %v799
  %v814 = vpack.c.b16 %v802, %v801
  %v815 = vpack.c.b16 %v804, %v803
  %v816 = vpack.c.b16 %v806, %v805
  %v817 = vpack.c.b16 %v808, %v807
  %v818 = vpack.c.b16 %v810, %v809
  %827 = vmatpush.bf16.msra.mxu0 %v818
  %828 = vmatpush.bf16.msra.mxu0 %v817
  %829 = vmatpush.bf16.msra.mxu0 %v816
  %830 = vmatpush.bf16.msra.mxu0 %v815
  %831 = vmatpush.bf16.msra.mxu0 %v814
  %832 = vmatpush.bf16.msra.mxu0 %v813
  %833 = vmatpush.bf16.msra.mxu0 %v812
  %834 = vmatpush.bf16.msra.mxu0 %v811
  %835 = vmatmul.bf16.gmra.mxu0 %v512
  %v836 = vpop.f32.mrf.mxu0
  %v837 = vadd.f32 %v777, %v836
  %v838 = vpop.f32.mrf.mxu0
  %v839 = vadd.f32 %v777, %v838
  %840 = vdwg.mxu0
  %v841 = vpack.c.bf16 %v675, %v673
  %v842 = vpack.c.bf16 %v757, %v755
  %vm843 = vcmask 523264
  %v845 = vsel %vm843, %v841, 0
  %v848 = vsel %vm843, %v842, 0
  %850 = vmatpush.bf16.xpose.msra.mxu0 0
  %851 = vmatpush.bf16.xpose.msra.mxu0 0
  %852 = vmatpush.bf16.xpose.msra.mxu0 0
  %853 = vmatpush.bf16.xpose.msra.mxu0 0
  %854 = vmatpush.bf16.xpose.msra.mxu0 0
  %855 = vmatpush.bf16.xpose.msra.mxu0 0
  %856 = vmatpush.bf16.xpose.msra.mxu0 0
  %857 = vmatpush.bf16.xpose.msra.mxu0 %v848
  %858 = vmatmul.bf16.gmra.mxu0 %v845
  %v859 = vpop.f32.mrf.mxu0
  %v860 = vadd.f32 %v191, %v859
  %v861 = vpop.f32.mrf.mxu0
  %v862 = vadd.f32 %v192, %v861
  %863 = vdwg.mxu0
  %v864 = vsel %vm193, %v860, -inf
  %865 = vmax.xlane.f32.xlu0 %v864
  %v866 = vpop.xlane.xlu0 %865
  %v867 = vsel %vm193, %v862, -inf
  %868 = vmax.xlane.f32.xlu0 %v867
  %v869 = vpop.xlane.xlu0 %868
  %v870 = vsub.f32 %v860, %v866
  %v871 = vsub.f32 %v862, %v869
  %v872 = vmul.f32 %v870, 1.442695
  %v873 = vpow.pop %v872
  %v874 = vmul.f32 %v871, 1.442695
  %v875 = vpow.pop %v874
  %v876 = vsel %vm193, %v873, 0.0
  %877 = vadd.xlane.f32.xlu0 %v876
  %v878 = vpop.xlane.xlu0 %877
  %v879 = vsel %vm193, %v875, 0.0
  %880 = vadd.xlane.f32.xlu0 %v879
  %v881 = vpop.xlane.xlu0 %880
  %v882 = vrcp.pop %v878
  %v883 = vrcp.pop %v881
  %v884 = vmul.f32 %v882, %v196
  %v885 = vmul.f32 %v883, %v199
  %v886 = vmul.f32 %v873, %v884
  %v887 = vmul.f32 %v875, %v885
  %v888 = vpack.c.bf16 %v887, %v886
  %v889 = vpack.c.bf16 %v839, %v837
  %v891 = vsel %vm193, %v888, 0
  %893 = vmatpush.bf16.msra.mxu0 0
  %894 = vmatpush.bf16.msra.mxu0 0
  %895 = vmatpush.bf16.msra.mxu0 0
  %896 = vmatpush.bf16.msra.mxu0 0
  %897 = vmatpush.bf16.msra.mxu0 0
  %898 = vmatpush.bf16.msra.mxu0 0
  %899 = vmatpush.bf16.msra.mxu0 0
  %900 = vmatpush.bf16.msra.mxu0 %v889
  %901 = vmatmul.bf16.gmra.mxu0 %v891
  %v902 = vpop.f32.mrf.mxu0
  %v903 = vadd.f32 0.0, %v902
  %v904 = vpop.f32.mrf.mxu0
  %v905 = vadd.f32 0.0, %v904
  %906 = vdwg.mxu0
  %s907 = scalar_lea.vmem %s23, 64
  %v908 = vld [vmem:[%s907] sm:$0xf]
  %v909 = vld [vmem:[%s907 + $0x4] sm:$0xf]
  %v910 = vld [vmem:[%s907 + $0x8] sm:$0xf]
  %v911 = vld [vmem:[%s907 + $0xc] sm:$0xf]
  %v912 = vld [vmem:[%s907 + $0x10] sm:$0xf]
  %v913 = vld [vmem:[%s907 + $0x14] sm:$0xf]
  %v914 = vld [vmem:[%s907 + $0x18] sm:$0xf]
  %v915 = vld [vmem:[%s907 + $0x1c] sm:$0xf]
  %v916 = vld [vmem:[%s907 + $0x20] sm:$0xf]
  %v917 = vld [vmem:[%s907 + $0x24] sm:$0xf]
  %v918 = vld [vmem:[%s907 + $0x28] sm:$0xf]
  %v919 = vld [vmem:[%s907 + $0x2c] sm:$0xf]
  %v920 = vld [vmem:[%s907 + $0x30] sm:$0xf]
  %v921 = vld [vmem:[%s907 + $0x34] sm:$0xf]
  %v922 = vld [vmem:[%s907 + $0x38] sm:$0xf]
  %v923 = vld [vmem:[%s907 + $0x3c] sm:$0xf]
  %s924 = scalar_lea.vmem %s25, 1
  %v925 = vld [vmem:[%s924] sm:$0x1]
  %v927 = vperm.slane %v925, 0
  %v945 = vunpack.c.l.b16 %v908
  %v946 = vunpack.c.l.b16 %v909
  %v947 = vunpack.c.l.b16 %v910
  %v948 = vunpack.c.l.b16 %v911
  %v949 = vunpack.c.l.b16 %v912
  %v950 = vunpack.c.l.b16 %v913
  %v951 = vunpack.c.l.b16 %v914
  %v952 = vunpack.c.l.b16 %v915
  %v953 = vunpack.c.l.b16 %v916
  %v954 = vunpack.c.l.b16 %v917
  %v955 = vunpack.c.l.b16 %v918
  %v956 = vunpack.c.l.b16 %v919
  %v957 = vunpack.c.l.b16 %v920
  %v958 = vunpack.c.l.b16 %v921
  %v959 = vunpack.c.l.b16 %v922
  %v960 = vunpack.c.l.b16 %v923
  %v961 = vpack.c.b16 %v946, %v945
  %v962 = vpack.c.b16 %v948, %v947
  %v963 = vpack.c.b16 %v950, %v949
  %v964 = vpack.c.b16 %v952, %v951
  %v965 = vpack.c.b16 %v954, %v953
  %v966 = vpack.c.b16 %v956, %v955
  %v967 = vpack.c.b16 %v958, %v957
  %v968 = vpack.c.b16 %v960, %v959
  %977 = vmatpush.bf16.msra.mxu0 %v968
  %978 = vmatpush.bf16.msra.mxu0 %v967
  %979 = vmatpush.bf16.msra.mxu0 %v966
  %980 = vmatpush.bf16.msra.mxu0 %v965
  %981 = vmatpush.bf16.msra.mxu0 %v964
  %982 = vmatpush.bf16.msra.mxu0 %v963
  %983 = vmatpush.bf16.msra.mxu0 %v962
  %984 = vmatpush.bf16.msra.mxu0 %v961
  %985 = vmatmul.bf16.gmra.mxu0 %v512
  %v986 = vpop.f32.mrf.mxu0
  %v987 = vadd.f32 %v927, %v986
  %v988 = vpop.f32.mrf.mxu0
  %v989 = vadd.f32 %v927, %v988
  %990 = vdwg.mxu0
  %s991 = scalar_lea.vmem %s27, 64
  %v992 = vld [vmem:[%s991] sm:$0xf]
  %v993 = vld [vmem:[%s991 + $0x4] sm:$0xf]
  %v994 = vld [vmem:[%s991 + $0x8] sm:$0xf]
  %v995 = vld [vmem:[%s991 + $0xc] sm:$0xf]
  %v996 = vld [vmem:[%s991 + $0x10] sm:$0xf]
  %v997 = vld [vmem:[%s991 + $0x14] sm:$0xf]
  %v998 = vld [vmem:[%s991 + $0x18] sm:$0xf]
  %v999 = vld [vmem:[%s991 + $0x1c] sm:$0xf]
  %v1000 = vld [vmem:[%s991 + $0x20] sm:$0xf]
  %v1001 = vld [vmem:[%s991 + $0x24] sm:$0xf]
  %v1002 = vld [vmem:[%s991 + $0x28] sm:$0xf]
  %v1003 = vld [vmem:[%s991 + $0x2c] sm:$0xf]
  %v1004 = vld [vmem:[%s991 + $0x30] sm:$0xf]
  %v1005 = vld [vmem:[%s991 + $0x34] sm:$0xf]
  %v1006 = vld [vmem:[%s991 + $0x38] sm:$0xf]
  %v1007 = vld [vmem:[%s991 + $0x3c] sm:$0xf]
  %s1008 = scalar_lea.vmem %s29, 1
  %v1009 = vld [vmem:[%s1008] sm:$0x1]
  %v1011 = vperm.slane %v1009, 0
  %v1029 = vunpack.c.l.b16 %v992
  %v1030 = vunpack.c.l.b16 %v993
  %v1031 = vunpack.c.l.b16 %v994
  %v1032 = vunpack.c.l.b16 %v995
  %v1033 = vunpack.c.l.b16 %v996
  %v1034 = vunpack.c.l.b16 %v997
  %v1035 = vunpack.c.l.b16 %v998
  %v1036 = vunpack.c.l.b16 %v999
  %v1037 = vunpack.c.l.b16 %v1000
  %v1038 = vunpack.c.l.b16 %v1001
  %v1039 = vunpack.c.l.b16 %v1002
  %v1040 = vunpack.c.l.b16 %v1003
  %v1041 = vunpack.c.l.b16 %v1004
  %v1042 = vunpack.c.l.b16 %v1005
  %v1043 = vunpack.c.l.b16 %v1006
  %v1044 = vunpack.c.l.b16 %v1007
  %v1045 = vpack.c.b16 %v1030, %v1029
  %v1046 = vpack.c.b16 %v1032, %v1031
  %v1047 = vpack.c.b16 %v1034, %v1033
  %v1048 = vpack.c.b16 %v1036, %v1035
  %v1049 = vpack.c.b16 %v1038, %v1037
  %v1050 = vpack.c.b16 %v1040, %v1039
  %v1051 = vpack.c.b16 %v1042, %v1041
  %v1052 = vpack.c.b16 %v1044, %v1043
  %1061 = vmatpush.bf16.msra.mxu0 %v1052
  %1062 = vmatpush.bf16.msra.mxu0 %v1051
  %1063 = vmatpush.bf16.msra.mxu0 %v1050
  %1064 = vmatpush.bf16.msra.mxu0 %v1049
  %1065 = vmatpush.bf16.msra.mxu0 %v1048
  %1066 = vmatpush.bf16.msra.mxu0 %v1047
  %1067 = vmatpush.bf16.msra.mxu0 %v1046
  %1068 = vmatpush.bf16.msra.mxu0 %v1045
  %1069 = vmatmul.bf16.gmra.mxu0 %v512
  %v1070 = vpop.f32.mrf.mxu0
  %v1071 = vadd.f32 %v1011, %v1070
  %v1072 = vpop.f32.mrf.mxu0
  %v1073 = vadd.f32 %v1011, %v1072
  %1074 = vdwg.mxu0
  %s1075 = scalar_lea.vmem %s31, 64
  %v1076 = vld [vmem:[%s1075] sm:$0xf]
  %v1077 = vld [vmem:[%s1075 + $0x4] sm:$0xf]
  %v1078 = vld [vmem:[%s1075 + $0x8] sm:$0xf]
  %v1079 = vld [vmem:[%s1075 + $0xc] sm:$0xf]
  %v1080 = vld [vmem:[%s1075 + $0x10] sm:$0xf]
  %v1081 = vld [vmem:[%s1075 + $0x14] sm:$0xf]
  %v1082 = vld [vmem:[%s1075 + $0x18] sm:$0xf]
  %v1083 = vld [vmem:[%s1075 + $0x1c] sm:$0xf]
  %v1084 = vld [vmem:[%s1075 + $0x20] sm:$0xf]
  %v1085 = vld [vmem:[%s1075 + $0x24] sm:$0xf]
  %v1086 = vld [vmem:[%s1075 + $0x28] sm:$0xf]
  %v1087 = vld [vmem:[%s1075 + $0x2c] sm:$0xf]
  %v1088 = vld [vmem:[%s1075 + $0x30] sm:$0xf]
  %v1089 = vld [vmem:[%s1075 + $0x34] sm:$0xf]
  %v1090 = vld [vmem:[%s1075 + $0x38] sm:$0xf]
  %v1091 = vld [vmem:[%s1075 + $0x3c] sm:$0xf]
  %s1092 = scalar_lea.vmem %s33, 1
  %v1093 = vld [vmem:[%s1092] sm:$0x1]
  %v1095 = vperm.slane %v1093, 0
  %v1113 = vunpack.c.l.b16 %v1076
  %v1114 = vunpack.c.l.b16 %v1077
  %v1115 = vunpack.c.l.b16 %v1078
  %v1116 = vunpack.c.l.b16 %v1079
  %v1117 = vunpack.c.l.b16 %v1080
  %v1118 = vunpack.c.l.b16 %v1081
  %v1119 = vunpack.c.l.b16 %v1082
  %v1120 = vunpack.c.l.b16 %v1083
  %v1121 = vunpack.c.l.b16 %v1084
  %v1122 = vunpack.c.l.b16 %v1085
  %v1123 = vunpack.c.l.b16 %v1086
  %v1124 = vunpack.c.l.b16 %v1087
  %v1125 = vunpack.c.l.b16 %v1088
  %v1126 = vunpack.c.l.b16 %v1089
  %v1127 = vunpack.c.l.b16 %v1090
  %v1128 = vunpack.c.l.b16 %v1091
  %v1129 = vpack.c.b16 %v1114, %v1113
  %v1130 = vpack.c.b16 %v1116, %v1115
  %v1131 = vpack.c.b16 %v1118, %v1117
  %v1132 = vpack.c.b16 %v1120, %v1119
  %v1133 = vpack.c.b16 %v1122, %v1121
  %v1134 = vpack.c.b16 %v1124, %v1123
  %v1135 = vpack.c.b16 %v1126, %v1125
  %v1136 = vpack.c.b16 %v1128, %v1127
  %1145 = vmatpush.bf16.msra.mxu0 %v1136
  %1146 = vmatpush.bf16.msra.mxu0 %v1135
  %1147 = vmatpush.bf16.msra.mxu0 %v1134
  %1148 = vmatpush.bf16.msra.mxu0 %v1133
  %1149 = vmatpush.bf16.msra.mxu0 %v1132
  %1150 = vmatpush.bf16.msra.mxu0 %v1131
  %1151 = vmatpush.bf16.msra.mxu0 %v1130
  %1152 = vmatpush.bf16.msra.mxu0 %v1129
  %1153 = vmatmul.bf16.gmra.mxu0 %v512
  %v1154 = vpop.f32.mrf.mxu0
  %v1155 = vadd.f32 %v1095, %v1154
  %v1156 = vpop.f32.mrf.mxu0
  %v1157 = vadd.f32 %v1095, %v1156
  %1158 = vdwg.mxu0
  %v1159 = vpack.c.bf16 %v989, %v987
  %v1160 = vpack.c.bf16 %v1073, %v1071
  %v1162 = vsel %vm843, %v1159, 0
  %v1165 = vsel %vm843, %v1160, 0
  %1167 = vmatpush.bf16.xpose.msra.mxu0 0
  %1168 = vmatpush.bf16.xpose.msra.mxu0 0
  %1169 = vmatpush.bf16.xpose.msra.mxu0 0
  %1170 = vmatpush.bf16.xpose.msra.mxu0 0
  %1171 = vmatpush.bf16.xpose.msra.mxu0 0
  %1172 = vmatpush.bf16.xpose.msra.mxu0 0
  %1173 = vmatpush.bf16.xpose.msra.mxu0 0
  %1174 = vmatpush.bf16.xpose.msra.mxu0 %v1165
  %1175 = vmatmul.bf16.gmra.mxu0 %v1162
  %v1176 = vpop.f32.mrf.mxu0
  %v1177 = vadd.f32 %v191, %v1176
  %v1178 = vpop.f32.mrf.mxu0
  %v1179 = vadd.f32 %v192, %v1178
  %1180 = vdwg.mxu0
  %v1181 = vsel %vm193, %v1177, -inf
  %1182 = vmax.xlane.f32.xlu0 %v1181
  %v1183 = vpop.xlane.xlu0 %1182
  %v1184 = vsel %vm193, %v1179, -inf
  %1185 = vmax.xlane.f32.xlu0 %v1184
  %v1186 = vpop.xlane.xlu0 %1185
  %v1187 = vsub.f32 %v1177, %v1183
  %v1188 = vsub.f32 %v1179, %v1186
  %v1189 = vmul.f32 %v1187, 1.442695
  %v1190 = vpow.pop %v1189
  %v1191 = vmul.f32 %v1188, 1.442695
  %v1192 = vpow.pop %v1191
  %v1193 = vsel %vm193, %v1190, 0.0
  %1194 = vadd.xlane.f32.xlu0 %v1193
  %v1195 = vpop.xlane.xlu0 %1194
  %v1196 = vsel %vm193, %v1192, 0.0
  %1197 = vadd.xlane.f32.xlu0 %v1196
  %v1198 = vpop.xlane.xlu0 %1197
  %v1199 = vrcp.pop %v1195
  %v1200 = vrcp.pop %v1198
  %v1201 = vmul.f32 %v1199, %v196
  %v1202 = vmul.f32 %v1200, %v199
  %v1203 = vmul.f32 %v1190, %v1201
  %v1204 = vmul.f32 %v1192, %v1202
  %v1205 = vpack.c.bf16 %v1204, %v1203
  %v1206 = vpack.c.bf16 %v1157, %v1155
  %v1208 = vsel %vm193, %v1205, 0
  %1210 = vmatpush.bf16.msra.mxu0 0
  %1211 = vmatpush.bf16.msra.mxu0 0
  %1212 = vmatpush.bf16.msra.mxu0 0
  %1213 = vmatpush.bf16.msra.mxu0 0
  %1214 = vmatpush.bf16.msra.mxu0 0
  %1215 = vmatpush.bf16.msra.mxu0 0
  %1216 = vmatpush.bf16.msra.mxu0 0
  %1217 = vmatpush.bf16.msra.mxu0 %v1206
  %1218 = vmatmul.bf16.gmra.mxu0 %v1208
  %v1219 = vpop.f32.mrf.mxu0
  %v1220 = vadd.f32 0.0, %v1219
  %v1221 = vpop.f32.mrf.mxu0
  %v1222 = vadd.f32 0.0, %v1221
  %1223 = vdwg.mxu0
  %1226 = vrot.lane.b32.xlu0 %v1220, 64
  %v1227 = vpop.permute.xlu0 %1226
  %1228 = vrot.lane.b32.xlu0 %v1222, 64
  %v1229 = vpop.permute.xlu0 %1228
  %v1232 = vsel %vm843, %v903, %v1227
  %v1233 = vsel %vm843, %v905, %v1229
  %v1234 = vadd.f32 %v1232, %v591
  %v1235 = vadd.f32 %v1233, %v593
  %v1236 = vadd.f32 %v1234, %v1235
  %v1237 = vrot.slane %v1236, 4
  %v1238 = vadd.f32 %v1236, %v1237
  %v1239 = vrot.slane %v1238, 2
  %v1240 = vadd.f32 %v1238, %v1239
  %v1241 = vrot.slane %v1240, 1
  %v1242 = vadd.f32 %v1240, %v1241
  %v1243 = vmul.f32 %v1242, 0.0625
  %v1244 = vmul.f32 %v1234, %v1234
  %v1245 = vmul.f32 %v1235, %v1235
  %v1246 = vadd.f32 %v1244, %v1245
  %v1247 = vrot.slane %v1246, 4
  %v1248 = vadd.f32 %v1246, %v1247
  %v1249 = vrot.slane %v1248, 2
  %v1250 = vadd.f32 %v1248, %v1249
  %v1251 = vrot.slane %v1250, 1
  %v1252 = vadd.f32 %v1250, %v1251
  %v1253 = vmul.f32 %v1252, 0.0625
  %v1254 = vmul.f32 %v1243, %v1243
  %v1255 = vsub.f32 %v1253, %v1254
  %v1256 = vmax.f32 %v1255, 0.0
  %v1257 = vsub.f32 %v1234, %v1243
  %v1258 = vsub.f32 %v1235, %v1243
  %v1259 = vadd.f32 %v1256, 1e-05
  %v1260 = vrsqrt.pop %v1259
  %v1261 = vmul.f32 %v1260, %v1259
  %v1262 = vmul.f32 %v1261, %v1260
  %v1263 = vmul.f32 0.5, %v1262
  %v1264 = vsub.f32 1.5, %v1263
  %v1265 = vmul.f32 %v1260, %v1264
  %vm1266 = vweird.f32 %v1259
  %vm1267 = vweird.f32 %v1260
  %vm1268 = vmor %vm1266, %vm1267
  %v1269 = vsel %vm1268, %v1260, %v1265
  %v1270 = vmul.f32 %v1257, %v1269
  %v1271 = vmul.f32 %v1258, %v1269
  %v1272 = vld [vmem:[%s39] sm:$0x1]
  %v1274 = vperm.slane %v1272, 0
  %v1276 = vmul.f32 %v1270, %v1274
  %v1277 = vmul.f32 %v1271, %v1274
  %v1278 = vld [vmem:[%s41] sm:$0x1]
  %v1280 = vperm.slane %v1278, 0
  %v1282 = vadd.f32 %v1276, %v1280
  %v1283 = vadd.f32 %v1277, %v1280
  %vm1284 = vcmp.gt.f32.partialorder %v1282, 0.0
  %vm1285 = vcmp.gt.f32.partialorder %v1283, 0.0
  %v1286 = vmul.f32 %v1282, 0.1
  %v1287 = vmul.f32 %v1283, 0.1
  %v1288 = vsel %vm1284, %v1282, %v1286
  %v1289 = vsel %vm1285, %v1283, %v1287
  %v1290 = vpack.c.bf16 %v1289, %v1288
  %v1291 = vld [vmem:[%s55] sm:$0xf]
  %v1292 = vld [vmem:[%s55 + $0x4] sm:$0xf]
  %v1293 = vld [vmem:[%s55 + $0x8] sm:$0xf]
  %v1294 = vld [vmem:[%s55 + $0xc] sm:$0xf]
  %v1295 = vld [vmem:[%s55 + $0x10] sm:$0xf]
  %v1296 = vld [vmem:[%s55 + $0x14] sm:$0xf]
  %v1297 = vld [vmem:[%s55 + $0x18] sm:$0xf]
  %v1298 = vld [vmem:[%s55 + $0x1c] sm:$0xf]
  %v1299 = vld [vmem:[%s55 + $0x20] sm:$0xf]
  %v1300 = vld [vmem:[%s55 + $0x24] sm:$0xf]
  %v1301 = vld [vmem:[%s55 + $0x28] sm:$0xf]
  %v1302 = vld [vmem:[%s55 + $0x2c] sm:$0xf]
  %v1303 = vld [vmem:[%s55 + $0x30] sm:$0xf]
  %v1304 = vld [vmem:[%s55 + $0x34] sm:$0xf]
  %v1305 = vld [vmem:[%s55 + $0x38] sm:$0xf]
  %v1306 = vld [vmem:[%s55 + $0x3c] sm:$0xf]
  %v1307 = vld [vmem:[%s57] sm:$0x1]
  %v1309 = vperm.slane %v1307, 0
  %v1327 = vunpack.c.l.b16 %v1291
  %v1328 = vunpack.c.l.b16 %v1292
  %v1329 = vunpack.c.l.b16 %v1293
  %v1330 = vunpack.c.l.b16 %v1294
  %v1331 = vunpack.c.l.b16 %v1295
  %v1332 = vunpack.c.l.b16 %v1296
  %v1333 = vunpack.c.l.b16 %v1297
  %v1334 = vunpack.c.l.b16 %v1298
  %v1335 = vunpack.c.l.b16 %v1299
  %v1336 = vunpack.c.l.b16 %v1300
  %v1337 = vunpack.c.l.b16 %v1301
  %v1338 = vunpack.c.l.b16 %v1302
  %v1339 = vunpack.c.l.b16 %v1303
  %v1340 = vunpack.c.l.b16 %v1304
  %v1341 = vunpack.c.l.b16 %v1305
  %v1342 = vunpack.c.l.b16 %v1306
  %v1343 = vpack.c.b16 %v1328, %v1327
  %v1344 = vpack.c.b16 %v1330, %v1329
  %v1345 = vpack.c.b16 %v1332, %v1331
  %v1346 = vpack.c.b16 %v1334, %v1333
  %v1347 = vpack.c.b16 %v1336, %v1335
  %v1348 = vpack.c.b16 %v1338, %v1337
  %v1349 = vpack.c.b16 %v1340, %v1339
  %v1350 = vpack.c.b16 %v1342, %v1341
  %1359 = vmatpush.bf16.msra.mxu0 %v1350
  %1360 = vmatpush.bf16.msra.mxu0 %v1349
  %1361 = vmatpush.bf16.msra.mxu0 %v1348
  %1362 = vmatpush.bf16.msra.mxu0 %v1347
  %1363 = vmatpush.bf16.msra.mxu0 %v1346
  %1364 = vmatpush.bf16.msra.mxu0 %v1345
  %1365 = vmatpush.bf16.msra.mxu0 %v1344
  %1366 = vmatpush.bf16.msra.mxu0 %v1343
  %1367 = vmatmul.bf16.gmra.mxu0 %v1290
  %v1368 = vpop.f32.mrf.mxu0
  %v1369 = vadd.f32 %v1309, %v1368
  %v1370 = vpop.f32.mrf.mxu0
  %v1371 = vadd.f32 %v1309, %v1370
  %1372 = vdwg.mxu0
  %v1373 = vld [vmem:[%s43] sm:$0xf]
  %v1374 = vld [vmem:[%s43 + $0x4] sm:$0xf]
  %v1375 = vld [vmem:[%s43 + $0x8] sm:$0xf]
  %v1376 = vld [vmem:[%s43 + $0xc] sm:$0xf]
  %v1377 = vld [vmem:[%s43 + $0x10] sm:$0xf]
  %v1378 = vld [vmem:[%s43 + $0x14] sm:$0xf]
  %v1379 = vld [vmem:[%s43 + $0x18] sm:$0xf]
  %v1380 = vld [vmem:[%s43 + $0x1c] sm:$0xf]
  %v1381 = vld [vmem:[%s43 + $0x20] sm:$0xf]
  %v1382 = vld [vmem:[%s43 + $0x24] sm:$0xf]
  %v1383 = vld [vmem:[%s43 + $0x28] sm:$0xf]
  %v1384 = vld [vmem:[%s43 + $0x2c] sm:$0xf]
  %v1385 = vld [vmem:[%s43 + $0x30] sm:$0xf]
  %v1386 = vld [vmem:[%s43 + $0x34] sm:$0xf]
  %v1387 = vld [vmem:[%s43 + $0x38] sm:$0xf]
  %v1388 = vld [vmem:[%s43 + $0x3c] sm:$0xf]
  %v1389 = vld [vmem:[%s45] sm:$0x1]
  %v1391 = vperm.slane %v1389, 0
  %v1409 = vunpack.c.l.b16 %v1373
  %v1410 = vunpack.c.l.b16 %v1374
  %v1411 = vunpack.c.l.b16 %v1375
  %v1412 = vunpack.c.l.b16 %v1376
  %v1413 = vunpack.c.l.b16 %v1377
  %v1414 = vunpack.c.l.b16 %v1378
  %v1415 = vunpack.c.l.b16 %v1379
  %v1416 = vunpack.c.l.b16 %v1380
  %v1417 = vunpack.c.l.b16 %v1381
  %v1418 = vunpack.c.l.b16 %v1382
  %v1419 = vunpack.c.l.b16 %v1383
  %v1420 = vunpack.c.l.b16 %v1384
  %v1421 = vunpack.c.l.b16 %v1385
  %v1422 = vunpack.c.l.b16 %v1386
  %v1423 = vunpack.c.l.b16 %v1387
  %v1424 = vunpack.c.l.b16 %v1388
  %v1425 = vpack.c.b16 %v1410, %v1409
  %v1426 = vpack.c.b16 %v1412, %v1411
  %v1427 = vpack.c.b16 %v1414, %v1413
  %v1428 = vpack.c.b16 %v1416, %v1415
  %v1429 = vpack.c.b16 %v1418, %v1417
  %v1430 = vpack.c.b16 %v1420, %v1419
  %v1431 = vpack.c.b16 %v1422, %v1421
  %v1432 = vpack.c.b16 %v1424, %v1423
  %1441 = vmatpush.bf16.msra.mxu0 %v1432
  %1442 = vmatpush.bf16.msra.mxu0 %v1431
  %1443 = vmatpush.bf16.msra.mxu0 %v1430
  %1444 = vmatpush.bf16.msra.mxu0 %v1429
  %1445 = vmatpush.bf16.msra.mxu0 %v1428
  %1446 = vmatpush.bf16.msra.mxu0 %v1427
  %1447 = vmatpush.bf16.msra.mxu0 %v1426
  %1448 = vmatpush.bf16.msra.mxu0 %v1425
  %1449 = vmatmul.bf16.gmra.mxu0 %v1290
  %v1450 = vpop.f32.mrf.mxu0
  %v1451 = vadd.f32 %v1391, %v1450
  %v1452 = vpop.f32.mrf.mxu0
  %v1453 = vadd.f32 %v1391, %v1452
  %1454 = vdwg.mxu0
  %v1455 = vld [vmem:[%s47] sm:$0xf]
  %v1456 = vld [vmem:[%s47 + $0x4] sm:$0xf]
  %v1457 = vld [vmem:[%s47 + $0x8] sm:$0xf]
  %v1458 = vld [vmem:[%s47 + $0xc] sm:$0xf]
  %v1459 = vld [vmem:[%s47 + $0x10] sm:$0xf]
  %v1460 = vld [vmem:[%s47 + $0x14] sm:$0xf]
  %v1461 = vld [vmem:[%s47 + $0x18] sm:$0xf]
  %v1462 = vld [vmem:[%s47 + $0x1c] sm:$0xf]
  %v1463 = vld [vmem:[%s47 + $0x20] sm:$0xf]
  %v1464 = vld [vmem:[%s47 + $0x24] sm:$0xf]
  %v1465 = vld [vmem:[%s47 + $0x28] sm:$0xf]
  %v1466 = vld [vmem:[%s47 + $0x2c] sm:$0xf]
  %v1467 = vld [vmem:[%s47 + $0x30] sm:$0xf]
  %v1468 = vld [vmem:[%s47 + $0x34] sm:$0xf]
  %v1469 = vld [vmem:[%s47 + $0x38] sm:$0xf]
  %v1470 = vld [vmem:[%s47 + $0x3c] sm:$0xf]
  %v1471 = vld [vmem:[%s49] sm:$0x1]
  %v1473 = vperm.slane %v1471, 0
  %v1491 = vunpack.c.l.b16 %v1455
  %v1492 = vunpack.c.l.b16 %v1456
  %v1493 = vunpack.c.l.b16 %v1457
  %v1494 = vunpack.c.l.b16 %v1458
  %v1495 = vunpack.c.l.b16 %v1459
  %v1496 = vunpack.c.l.b16 %v1460
  %v1497 = vunpack.c.l.b16 %v1461
  %v1498 = vunpack.c.l.b16 %v1462
  %v1499 = vunpack.c.l.b16 %v1463
  %v1500 = vunpack.c.l.b16 %v1464
  %v1501 = vunpack.c.l.b16 %v1465
  %v1502 = vunpack.c.l.b16 %v1466
  %v1503 = vunpack.c.l.b16 %v1467
  %v1504 = vunpack.c.l.b16 %v1468
  %v1505 = vunpack.c.l.b16 %v1469
  %v1506 = vunpack.c.l.b16 %v1470
  %v1507 = vpack.c.b16 %v1492, %v1491
  %v1508 = vpack.c.b16 %v1494, %v1493
  %v1509 = vpack.c.b16 %v1496, %v1495
  %v1510 = vpack.c.b16 %v1498, %v1497
  %v1511 = vpack.c.b16 %v1500, %v1499
  %v1512 = vpack.c.b16 %v1502, %v1501
  %v1513 = vpack.c.b16 %v1504, %v1503
  %v1514 = vpack.c.b16 %v1506, %v1505
  %1523 = vmatpush.bf16.msra.mxu0 %v1514
  %1524 = vmatpush.bf16.msra.mxu0 %v1513
  %1525 = vmatpush.bf16.msra.mxu0 %v1512
  %1526 = vmatpush.bf16.msra.mxu0 %v1511
  %1527 = vmatpush.bf16.msra.mxu0 %v1510
  %1528 = vmatpush.bf16.msra.mxu0 %v1509
  %1529 = vmatpush.bf16.msra.mxu0 %v1508
  %1530 = vmatpush.bf16.msra.mxu0 %v1507
  %1531 = vmatmul.bf16.gmra.mxu0 %v1290
  %v1532 = vpop.f32.mrf.mxu0
  %v1533 = vadd.f32 %v1473, %v1532
  %v1534 = vpop.f32.mrf.mxu0
  %v1535 = vadd.f32 %v1473, %v1534
  %1536 = vdwg.mxu0
  %v1537 = vld [vmem:[%s51] sm:$0xf]
  %v1538 = vld [vmem:[%s51 + $0x4] sm:$0xf]
  %v1539 = vld [vmem:[%s51 + $0x8] sm:$0xf]
  %v1540 = vld [vmem:[%s51 + $0xc] sm:$0xf]
  %v1541 = vld [vmem:[%s51 + $0x10] sm:$0xf]
  %v1542 = vld [vmem:[%s51 + $0x14] sm:$0xf]
  %v1543 = vld [vmem:[%s51 + $0x18] sm:$0xf]
  %v1544 = vld [vmem:[%s51 + $0x1c] sm:$0xf]
  %v1545 = vld [vmem:[%s51 + $0x20] sm:$0xf]
  %v1546 = vld [vmem:[%s51 + $0x24] sm:$0xf]
  %v1547 = vld [vmem:[%s51 + $0x28] sm:$0xf]
  %v1548 = vld [vmem:[%s51 + $0x2c] sm:$0xf]
  %v1549 = vld [vmem:[%s51 + $0x30] sm:$0xf]
  %v1550 = vld [vmem:[%s51 + $0x34] sm:$0xf]
  %v1551 = vld [vmem:[%s51 + $0x38] sm:$0xf]
  %v1552 = vld [vmem:[%s51 + $0x3c] sm:$0xf]
  %v1553 = vld [vmem:[%s53] sm:$0x1]
  %v1555 = vperm.slane %v1553, 0
  %v1573 = vunpack.c.l.b16 %v1537
  %v1574 = vunpack.c.l.b16 %v1538
  %v1575 = vunpack.c.l.b16 %v1539
  %v1576 = vunpack.c.l.b16 %v1540
  %v1577 = vunpack.c.l.b16 %v1541
  %v1578 = vunpack.c.l.b16 %v1542
  %v1579 = vunpack.c.l.b16 %v1543
  %v1580 = vunpack.c.l.b16 %v1544
  %v1581 = vunpack.c.l.b16 %v1545
  %v1582 = vunpack.c.l.b16 %v1546
  %v1583 = vunpack.c.l.b16 %v1547
  %v1584 = vunpack.c.l.b16 %v1548
  %v1585 = vunpack.c.l.b16 %v1549
  %v1586 = vunpack.c.l.b16 %v1550
  %v1587 = vunpack.c.l.b16 %v1551
  %v1588 = vunpack.c.l.b16 %v1552
  %v1589 = vpack.c.b16 %v1574, %v1573
  %v1590 = vpack.c.b16 %v1576, %v1575
  %v1591 = vpack.c.b16 %v1578, %v1577
  %v1592 = vpack.c.b16 %v1580, %v1579
  %v1593 = vpack.c.b16 %v1582, %v1581
  %v1594 = vpack.c.b16 %v1584, %v1583
  %v1595 = vpack.c.b16 %v1586, %v1585
  %v1596 = vpack.c.b16 %v1588, %v1587
  %1605 = vmatpush.bf16.msra.mxu0 %v1596
  %1606 = vmatpush.bf16.msra.mxu0 %v1595
  %1607 = vmatpush.bf16.msra.mxu0 %v1594
  %1608 = vmatpush.bf16.msra.mxu0 %v1593
  %1609 = vmatpush.bf16.msra.mxu0 %v1592
  %1610 = vmatpush.bf16.msra.mxu0 %v1591
  %1611 = vmatpush.bf16.msra.mxu0 %v1590
  %1612 = vmatpush.bf16.msra.mxu0 %v1589
  %1613 = vmatmul.bf16.gmra.mxu0 %v1290
  %v1614 = vpop.f32.mrf.mxu0
  %v1615 = vadd.f32 %v1555, %v1614
  %v1616 = vpop.f32.mrf.mxu0
  %v1617 = vadd.f32 %v1555, %v1616
  %1618 = vdwg.mxu0
  %v1619 = vpack.c.bf16 %v1453, %v1451
  %v1620 = vpack.c.bf16 %v1535, %v1533
  %v1622 = vsel %vm843, %v1619, 0
  %v1625 = vsel %vm843, %v1620, 0
  %1627 = vmatpush.bf16.xpose.msra.mxu0 0
  %1628 = vmatpush.bf16.xpose.msra.mxu0 0
  %1629 = vmatpush.bf16.xpose.msra.mxu0 0
  %1630 = vmatpush.bf16.xpose.msra.mxu0 0
  %1631 = vmatpush.bf16.xpose.msra.mxu0 0
  %1632 = vmatpush.bf16.xpose.msra.mxu0 0
  %1633 = vmatpush.bf16.xpose.msra.mxu0 0
  %1634 = vmatpush.bf16.xpose.msra.mxu0 %v1625
  %1635 = vmatmul.bf16.gmra.mxu0 %v1622
  %v1636 = vpop.f32.mrf.mxu0
  %v1637 = vadd.f32 %v191, %v1636
  %v1638 = vpop.f32.mrf.mxu0
  %v1639 = vadd.f32 %v192, %v1638
  %1640 = vdwg.mxu0
  %v1641 = vsel %vm193, %v1637, -inf
  %1642 = vmax.xlane.f32.xlu0 %v1641
  %v1643 = vpop.xlane.xlu0 %1642
  %v1644 = vsel %vm193, %v1639, -inf
  %1645 = vmax.xlane.f32.xlu0 %v1644
  %v1646 = vpop.xlane.xlu0 %1645
  %v1647 = vsub.f32 %v1637, %v1643
  %v1648 = vsub.f32 %v1639, %v1646
  %v1649 = vmul.f32 %v1647, 1.442695
  %v1650 = vpow.pop %v1649
  %v1651 = vmul.f32 %v1648, 1.442695
  %v1652 = vpow.pop %v1651
  %v1653 = vsel %vm193, %v1650, 0.0
  %1654 = vadd.xlane.f32.xlu0 %v1653
  %v1655 = vpop.xlane.xlu0 %1654
  %v1656 = vsel %vm193, %v1652, 0.0
  %1657 = vadd.xlane.f32.xlu0 %v1656
  %v1658 = vpop.xlane.xlu0 %1657
  %v1659 = vrcp.pop %v1655
  %v1660 = vrcp.pop %v1658
  %v1661 = vmul.f32 %v1659, %v196
  %v1662 = vmul.f32 %v1660, %v199
  %v1663 = vmul.f32 %v1650, %v1661
  %v1664 = vmul.f32 %v1652, %v1662
  %v1665 = vpack.c.bf16 %v1664, %v1663
  %v1666 = vpack.c.bf16 %v1617, %v1615
  %v1668 = vsel %vm193, %v1665, 0
  %1670 = vmatpush.bf16.msra.mxu0 0
  %1671 = vmatpush.bf16.msra.mxu0 0
  %1672 = vmatpush.bf16.msra.mxu0 0
  %1673 = vmatpush.bf16.msra.mxu0 0
  %1674 = vmatpush.bf16.msra.mxu0 0
  %1675 = vmatpush.bf16.msra.mxu0 0
  %1676 = vmatpush.bf16.msra.mxu0 0
  %1677 = vmatpush.bf16.msra.mxu0 %v1666
  %1678 = vmatmul.bf16.gmra.mxu0 %v1668
  %v1679 = vpop.f32.mrf.mxu0
  %v1680 = vadd.f32 0.0, %v1679
  %v1681 = vpop.f32.mrf.mxu0
  %v1682 = vadd.f32 0.0, %v1681
  %1683 = vdwg.mxu0
  %s1684 = scalar_lea.vmem %s43, 64
  %v1685 = vld [vmem:[%s1684] sm:$0xf]
  %v1686 = vld [vmem:[%s1684 + $0x4] sm:$0xf]
  %v1687 = vld [vmem:[%s1684 + $0x8] sm:$0xf]
  %v1688 = vld [vmem:[%s1684 + $0xc] sm:$0xf]
  %v1689 = vld [vmem:[%s1684 + $0x10] sm:$0xf]
  %v1690 = vld [vmem:[%s1684 + $0x14] sm:$0xf]
  %v1691 = vld [vmem:[%s1684 + $0x18] sm:$0xf]
  %v1692 = vld [vmem:[%s1684 + $0x1c] sm:$0xf]
  %v1693 = vld [vmem:[%s1684 + $0x20] sm:$0xf]
  %v1694 = vld [vmem:[%s1684 + $0x24] sm:$0xf]
  %v1695 = vld [vmem:[%s1684 + $0x28] sm:$0xf]
  %v1696 = vld [vmem:[%s1684 + $0x2c] sm:$0xf]
  %v1697 = vld [vmem:[%s1684 + $0x30] sm:$0xf]
  %v1698 = vld [vmem:[%s1684 + $0x34] sm:$0xf]
  %v1699 = vld [vmem:[%s1684 + $0x38] sm:$0xf]
  %v1700 = vld [vmem:[%s1684 + $0x3c] sm:$0xf]
  %s1701 = scalar_lea.vmem %s45, 1
  %v1702 = vld [vmem:[%s1701] sm:$0x1]
  %v1704 = vperm.slane %v1702, 0
  %v1722 = vunpack.c.l.b16 %v1685
  %v1723 = vunpack.c.l.b16 %v1686
  %v1724 = vunpack.c.l.b16 %v1687
  %v1725 = vunpack.c.l.b16 %v1688
  %v1726 = vunpack.c.l.b16 %v1689
  %v1727 = vunpack.c.l.b16 %v1690
  %v1728 = vunpack.c.l.b16 %v1691
  %v1729 = vunpack.c.l.b16 %v1692
  %v1730 = vunpack.c.l.b16 %v1693
  %v1731 = vunpack.c.l.b16 %v1694
  %v1732 = vunpack.c.l.b16 %v1695
  %v1733 = vunpack.c.l.b16 %v1696
  %v1734 = vunpack.c.l.b16 %v1697
  %v1735 = vunpack.c.l.b16 %v1698
  %v1736 = vunpack.c.l.b16 %v1699
  %v1737 = vunpack.c.l.b16 %v1700
  %v1738 = vpack.c.b16 %v1723, %v1722
  %v1739 = vpack.c.b16 %v1725, %v1724
  %v1740 = vpack.c.b16 %v1727, %v1726
  %v1741 = vpack.c.b16 %v1729, %v1728
  %v1742 = vpack.c.b16 %v1731, %v1730
  %v1743 = vpack.c.b16 %v1733, %v1732
  %v1744 = vpack.c.b16 %v1735, %v1734
  %v1745 = vpack.c.b16 %v1737, %v1736
  %1754 = vmatpush.bf16.msra.mxu0 %v1745
  %1755 = vmatpush.bf16.msra.mxu0 %v1744
  %1756 = vmatpush.bf16.msra.mxu0 %v1743
  %1757 = vmatpush.bf16.msra.mxu0 %v1742
  %1758 = vmatpush.bf16.msra.mxu0 %v1741
  %1759 = vmatpush.bf16.msra.mxu0 %v1740
  %1760 = vmatpush.bf16.msra.mxu0 %v1739
  %1761 = vmatpush.bf16.msra.mxu0 %v1738
  %1762 = vmatmul.bf16.gmra.mxu0 %v1290
  %v1763 = vpop.f32.mrf.mxu0
  %v1764 = vadd.f32 %v1704, %v1763
  %v1765 = vpop.f32.mrf.mxu0
  %v1766 = vadd.f32 %v1704, %v1765
  %1767 = vdwg.mxu0
  %s1768 = scalar_lea.vmem %s47, 64
  %v1769 = vld [vmem:[%s1768] sm:$0xf]
  %v1770 = vld [vmem:[%s1768 + $0x4] sm:$0xf]
  %v1771 = vld [vmem:[%s1768 + $0x8] sm:$0xf]
  %v1772 = vld [vmem:[%s1768 + $0xc] sm:$0xf]
  %v1773 = vld [vmem:[%s1768 + $0x10] sm:$0xf]
  %v1774 = vld [vmem:[%s1768 + $0x14] sm:$0xf]
  %v1775 = vld [vmem:[%s1768 + $0x18] sm:$0xf]
  %v1776 = vld [vmem:[%s1768 + $0x1c] sm:$0xf]
  %v1777 = vld [vmem:[%s1768 + $0x20] sm:$0xf]
  %v1778 = vld [vmem:[%s1768 + $0x24] sm:$0xf]
  %v1779 = vld [vmem:[%s1768 + $0x28] sm:$0xf]
  %v1780 = vld [vmem:[%s1768 + $0x2c] sm:$0xf]
  %v1781 = vld [vmem:[%s1768 + $0x30] sm:$0xf]
  %v1782 = vld [vmem:[%s1768 + $0x34] sm:$0xf]
  %v1783 = vld [vmem:[%s1768 + $0x38] sm:$0xf]
  %v1784 = vld [vmem:[%s1768 + $0x3c] sm:$0xf]
  %s1785 = scalar_lea.vmem %s49, 1
  %v1786 = vld [vmem:[%s1785] sm:$0x1]
  %v1788 = vperm.slane %v1786, 0
  %v1806 = vunpack.c.l.b16 %v1769
  %v1807 = vunpack.c.l.b16 %v1770
  %v1808 = vunpack.c.l.b16 %v1771
  %v1809 = vunpack.c.l.b16 %v1772
  %v1810 = vunpack.c.l.b16 %v1773
  %v1811 = vunpack.c.l.b16 %v1774
  %v1812 = vunpack.c.l.b16 %v1775
  %v1813 = vunpack.c.l.b16 %v1776
  %v1814 = vunpack.c.l.b16 %v1777
  %v1815 = vunpack.c.l.b16 %v1778
  %v1816 = vunpack.c.l.b16 %v1779
  %v1817 = vunpack.c.l.b16 %v1780
  %v1818 = vunpack.c.l.b16 %v1781
  %v1819 = vunpack.c.l.b16 %v1782
  %v1820 = vunpack.c.l.b16 %v1783
  %v1821 = vunpack.c.l.b16 %v1784
  %v1822 = vpack.c.b16 %v1807, %v1806
  %v1823 = vpack.c.b16 %v1809, %v1808
  %v1824 = vpack.c.b16 %v1811, %v1810
  %v1825 = vpack.c.b16 %v1813, %v1812
  %v1826 = vpack.c.b16 %v1815, %v1814
  %v1827 = vpack.c.b16 %v1817, %v1816
  %v1828 = vpack.c.b16 %v1819, %v1818
  %v1829 = vpack.c.b16 %v1821, %v1820
  %1838 = vmatpush.bf16.msra.mxu0 %v1829
  %1839 = vmatpush.bf16.msra.mxu0 %v1828
  %1840 = vmatpush.bf16.msra.mxu0 %v1827
  %1841 = vmatpush.bf16.msra.mxu0 %v1826
  %1842 = vmatpush.bf16.msra.mxu0 %v1825
  %1843 = vmatpush.bf16.msra.mxu0 %v1824
  %1844 = vmatpush.bf16.msra.mxu0 %v1823
  %1845 = vmatpush.bf16.msra.mxu0 %v1822
  %1846 = vmatmul.bf16.gmra.mxu0 %v1290
  %v1847 = vpop.f32.mrf.mxu0
  %v1848 = vadd.f32 %v1788, %v1847
  %v1849 = vpop.f32.mrf.mxu0
  %v1850 = vadd.f32 %v1788, %v1849
  %1851 = vdwg.mxu0
  %s1852 = scalar_lea.vmem %s51, 64
  %v1853 = vld [vmem:[%s1852] sm:$0xf]
  %v1854 = vld [vmem:[%s1852 + $0x4] sm:$0xf]
  %v1855 = vld [vmem:[%s1852 + $0x8] sm:$0xf]
  %v1856 = vld [vmem:[%s1852 + $0xc] sm:$0xf]
  %v1857 = vld [vmem:[%s1852 + $0x10] sm:$0xf]
  %v1858 = vld [vmem:[%s1852 + $0x14] sm:$0xf]
  %v1859 = vld [vmem:[%s1852 + $0x18] sm:$0xf]
  %v1860 = vld [vmem:[%s1852 + $0x1c] sm:$0xf]
  %v1861 = vld [vmem:[%s1852 + $0x20] sm:$0xf]
  %v1862 = vld [vmem:[%s1852 + $0x24] sm:$0xf]
  %v1863 = vld [vmem:[%s1852 + $0x28] sm:$0xf]
  %v1864 = vld [vmem:[%s1852 + $0x2c] sm:$0xf]
  %v1865 = vld [vmem:[%s1852 + $0x30] sm:$0xf]
  %v1866 = vld [vmem:[%s1852 + $0x34] sm:$0xf]
  %v1867 = vld [vmem:[%s1852 + $0x38] sm:$0xf]
  %v1868 = vld [vmem:[%s1852 + $0x3c] sm:$0xf]
  %s1869 = scalar_lea.vmem %s53, 1
  %v1870 = vld [vmem:[%s1869] sm:$0x1]
  %v1872 = vperm.slane %v1870, 0
  %v1890 = vunpack.c.l.b16 %v1853
  %v1891 = vunpack.c.l.b16 %v1854
  %v1892 = vunpack.c.l.b16 %v1855
  %v1893 = vunpack.c.l.b16 %v1856
  %v1894 = vunpack.c.l.b16 %v1857
  %v1895 = vunpack.c.l.b16 %v1858
  %v1896 = vunpack.c.l.b16 %v1859
  %v1897 = vunpack.c.l.b16 %v1860
  %v1898 = vunpack.c.l.b16 %v1861
  %v1899 = vunpack.c.l.b16 %v1862
  %v1900 = vunpack.c.l.b16 %v1863
  %v1901 = vunpack.c.l.b16 %v1864
  %v1902 = vunpack.c.l.b16 %v1865
  %v1903 = vunpack.c.l.b16 %v1866
  %v1904 = vunpack.c.l.b16 %v1867
  %v1905 = vunpack.c.l.b16 %v1868
  %v1906 = vpack.c.b16 %v1891, %v1890
  %v1907 = vpack.c.b16 %v1893, %v1892
  %v1908 = vpack.c.b16 %v1895, %v1894
  %v1909 = vpack.c.b16 %v1897, %v1896
  %v1910 = vpack.c.b16 %v1899, %v1898
  %v1911 = vpack.c.b16 %v1901, %v1900
  %v1912 = vpack.c.b16 %v1903, %v1902
  %v1913 = vpack.c.b16 %v1905, %v1904
  %1922 = vmatpush.bf16.msra.mxu0 %v1913
  %1923 = vmatpush.bf16.msra.mxu0 %v1912
  %1924 = vmatpush.bf16.msra.mxu0 %v1911
  %1925 = vmatpush.bf16.msra.mxu0 %v1910
  %1926 = vmatpush.bf16.msra.mxu0 %v1909
  %1927 = vmatpush.bf16.msra.mxu0 %v1908
  %1928 = vmatpush.bf16.msra.mxu0 %v1907
  %1929 = vmatpush.bf16.msra.mxu0 %v1906
  %1930 = vmatmul.bf16.gmra.mxu0 %v1290
  %v1931 = vpop.f32.mrf.mxu0
  %v1932 = vadd.f32 %v1872, %v1931
  %v1933 = vpop.f32.mrf.mxu0
  %v1934 = vadd.f32 %v1872, %v1933
  %1935 = vdwg.mxu0
  %v1936 = vpack.c.bf16 %v1766, %v1764
  %v1937 = vpack.c.bf16 %v1850, %v1848
  %v1939 = vsel %vm843, %v1936, 0
  %v1942 = vsel %vm843, %v1937, 0
  %1944 = vmatpush.bf16.xpose.msra.mxu0 0
  %1945 = vmatpush.bf16.xpose.msra.mxu0 0
  %1946 = vmatpush.bf16.xpose.msra.mxu0 0
  %1947 = vmatpush.bf16.xpose.msra.mxu0 0
  %1948 = vmatpush.bf16.xpose.msra.mxu0 0
  %1949 = vmatpush.bf16.xpose.msra.mxu0 0
  %1950 = vmatpush.bf16.xpose.msra.mxu0 0
  %1951 = vmatpush.bf16.xpose.msra.mxu0 %v1942
  %1952 = vmatmul.bf16.gmra.mxu0 %v1939
  %v1953 = vpop.f32.mrf.mxu0
  %v1954 = vadd.f32 %v191, %v1953
  %v1955 = vpop.f32.mrf.mxu0
  %v1956 = vadd.f32 %v192, %v1955
  %1957 = vdwg.mxu0
  %v1958 = vsel %vm193, %v1954, -inf
  %1959 = vmax.xlane.f32.xlu0 %v1958
  %v1960 = vpop.xlane.xlu0 %1959
  %v1961 = vsel %vm193, %v1956, -inf
  %1962 = vmax.xlane.f32.xlu0 %v1961
  %v1963 = vpop.xlane.xlu0 %1962
  %v1964 = vsub.f32 %v1954, %v1960
  %v1965 = vsub.f32 %v1956, %v1963
  %v1966 = vmul.f32 %v1964, 1.442695
  %v1967 = vpow.pop %v1966
  %v1968 = vmul.f32 %v1965, 1.442695
  %v1969 = vpow.pop %v1968
  %v1970 = vsel %vm193, %v1967, 0.0
  %1971 = vadd.xlane.f32.xlu0 %v1970
  %v1972 = vpop.xlane.xlu0 %1971
  %v1973 = vsel %vm193, %v1969, 0.0
  %1974 = vadd.xlane.f32.xlu0 %v1973
  %v1975 = vpop.xlane.xlu0 %1974
  %v1976 = vrcp.pop %v1972
  %v1977 = vrcp.pop %v1975
  %v1978 = vmul.f32 %v1976, %v196
  %v1979 = vmul.f32 %v1977, %v199
  %v1980 = vmul.f32 %v1967, %v1978
  %v1981 = vmul.f32 %v1969, %v1979
  %v1982 = vpack.c.bf16 %v1981, %v1980
  %v1983 = vpack.c.bf16 %v1934, %v1932
  %v1985 = vsel %vm193, %v1982, 0
  %1987 = vmatpush.bf16.msra.mxu0 0
  %1988 = vmatpush.bf16.msra.mxu0 0
  %1989 = vmatpush.bf16.msra.mxu0 0
  %1990 = vmatpush.bf16.msra.mxu0 0
  %1991 = vmatpush.bf16.msra.mxu0 0
  %1992 = vmatpush.bf16.msra.mxu0 0
  %1993 = vmatpush.bf16.msra.mxu0 0
  %1994 = vmatpush.bf16.msra.mxu0 %v1983
  %1995 = vmatmul.bf16.gmra.mxu0 %v1985
  %v1996 = vpop.f32.mrf.mxu0
  %v1997 = vadd.f32 0.0, %v1996
  %v1998 = vpop.f32.mrf.mxu0
  %v1999 = vadd.f32 0.0, %v1998
  %2000 = vdwg.mxu0
  %2003 = vrot.lane.b32.xlu0 %v1997, 64
  %v2004 = vpop.permute.xlu0 %2003
  %2005 = vrot.lane.b32.xlu0 %v1999, 64
  %v2006 = vpop.permute.xlu0 %2005
  %v2009 = vsel %vm843, %v1680, %v2004
  %v2010 = vsel %vm843, %v1682, %v2006
  %v2011 = vadd.f32 %v2009, %v1369
  %v2012 = vadd.f32 %v2010, %v1371
  %v2013 = vadd.f32 %v2011, %v2012
  %v2014 = vrot.slane %v2013, 4
  %v2015 = vadd.f32 %v2013, %v2014
  %v2016 = vrot.slane %v2015, 2
  %v2017 = vadd.f32 %v2015, %v2016
  %v2018 = vrot.slane %v2017, 1
  %v2019 = vadd.f32 %v2017, %v2018
  %v2020 = vmul.f32 %v2019, 0.0625
  %v2021 = vmul.f32 %v2011, %v2011
  %v2022 = vmul.f32 %v2012, %v2012
  %v2023 = vadd.f32 %v2021, %v2022
  %v2024 = vrot.slane %v2023, 4
  %v2025 = vadd.f32 %v2023, %v2024
  %v2026 = vrot.slane %v2025, 2
  %v2027 = vadd.f32 %v2025, %v2026
  %v2028 = vrot.slane %v2027, 1
  %v2029 = vadd.f32 %v2027, %v2028
  %v2030 = vmul.f32 %v2029, 0.0625
  %v2031 = vmul.f32 %v2020, %v2020
  %v2032 = vsub.f32 %v2030, %v2031
  %v2033 = vmax.f32 %v2032, 0.0
  %v2034 = vsub.f32 %v2011, %v2020
  %v2035 = vsub.f32 %v2012, %v2020
  %v2036 = vadd.f32 %v2033, 1e-05
  %v2037 = vrsqrt.pop %v2036
  %v2038 = vmul.f32 %v2037, %v2036
  %v2039 = vmul.f32 %v2038, %v2037
  %v2040 = vmul.f32 0.5, %v2039
  %v2041 = vsub.f32 1.5, %v2040
  %v2042 = vmul.f32 %v2037, %v2041
  %vm2043 = vweird.f32 %v2036
  %vm2044 = vweird.f32 %v2037
  %vm2045 = vmor %vm2043, %vm2044
  %v2046 = vsel %vm2045, %v2037, %v2042
  %v2047 = vmul.f32 %v2034, %v2046
  %v2048 = vmul.f32 %v2035, %v2046
  %v2049 = vld [vmem:[%s59] sm:$0x1]
  %v2051 = vperm.slane %v2049, 0
  %v2053 = vmul.f32 %v2047, %v2051
  %v2054 = vmul.f32 %v2048, %v2051
  %v2055 = vld [vmem:[%s61] sm:$0x1]
  %v2057 = vperm.slane %v2055, 0
  %v2059 = vadd.f32 %v2053, %v2057
  %v2060 = vadd.f32 %v2054, %v2057
  %vm2061 = vcmp.gt.f32.partialorder %v2059, 0.0
  %vm2062 = vcmp.gt.f32.partialorder %v2060, 0.0
  %v2063 = vmul.f32 %v2059, 0.1
  %v2064 = vmul.f32 %v2060, 0.1
  %v2065 = vsel %vm2061, %v2059, %v2063
  %v2066 = vsel %vm2062, %v2060, %v2064
  %v2067 = vpack.c.bf16 %v2066, %v2065
  %v2068 = vld [vmem:[%s75] sm:$0xf]
  %v2069 = vld [vmem:[%s75 + $0x4] sm:$0xf]
  %v2070 = vld [vmem:[%s75 + $0x8] sm:$0xf]
  %v2071 = vld [vmem:[%s75 + $0xc] sm:$0xf]
  %v2072 = vld [vmem:[%s75 + $0x10] sm:$0xf]
  %v2073 = vld [vmem:[%s75 + $0x14] sm:$0xf]
  %v2074 = vld [vmem:[%s75 + $0x18] sm:$0xf]
  %v2075 = vld [vmem:[%s75 + $0x1c] sm:$0xf]
  %v2076 = vld [vmem:[%s75 + $0x20] sm:$0xf]
  %v2077 = vld [vmem:[%s75 + $0x24] sm:$0xf]
  %v2078 = vld [vmem:[%s75 + $0x28] sm:$0xf]
  %v2079 = vld [vmem:[%s75 + $0x2c] sm:$0xf]
  %v2080 = vld [vmem:[%s75 + $0x30] sm:$0xf]
  %v2081 = vld [vmem:[%s75 + $0x34] sm:$0xf]
  %v2082 = vld [vmem:[%s75 + $0x38] sm:$0xf]
  %v2083 = vld [vmem:[%s75 + $0x3c] sm:$0xf]
  %v2084 = vld [vmem:[%s77] sm:$0x1]
  %v2086 = vperm.slane %v2084, 0
  %v2104 = vunpack.c.l.b16 %v2068
  %v2105 = vunpack.c.l.b16 %v2069
  %v2106 = vunpack.c.l.b16 %v2070
  %v2107 = vunpack.c.l.b16 %v2071
  %v2108 = vunpack.c.l.b16 %v2072
  %v2109 = vunpack.c.l.b16 %v2073
  %v2110 = vunpack.c.l.b16 %v2074
  %v2111 = vunpack.c.l.b16 %v2075
  %v2112 = vunpack.c.l.b16 %v2076
  %v2113 = vunpack.c.l.b16 %v2077
  %v2114 = vunpack.c.l.b16 %v2078
  %v2115 = vunpack.c.l.b16 %v2079
  %v2116 = vunpack.c.l.b16 %v2080
  %v2117 = vunpack.c.l.b16 %v2081
  %v2118 = vunpack.c.l.b16 %v2082
  %v2119 = vunpack.c.l.b16 %v2083
  %v2120 = vpack.c.b16 %v2105, %v2104
  %v2121 = vpack.c.b16 %v2107, %v2106
  %v2122 = vpack.c.b16 %v2109, %v2108
  %v2123 = vpack.c.b16 %v2111, %v2110
  %v2124 = vpack.c.b16 %v2113, %v2112
  %v2125 = vpack.c.b16 %v2115, %v2114
  %v2126 = vpack.c.b16 %v2117, %v2116
  %v2127 = vpack.c.b16 %v2119, %v2118
  %2136 = vmatpush.bf16.msra.mxu0 %v2127
  %2137 = vmatpush.bf16.msra.mxu0 %v2126
  %2138 = vmatpush.bf16.msra.mxu0 %v2125
  %2139 = vmatpush.bf16.msra.mxu0 %v2124
  %2140 = vmatpush.bf16.msra.mxu0 %v2123
  %2141 = vmatpush.bf16.msra.mxu0 %v2122
  %2142 = vmatpush.bf16.msra.mxu0 %v2121
  %2143 = vmatpush.bf16.msra.mxu0 %v2120
  %2144 = vmatmul.bf16.gmra.mxu0 %v2067
  %v2145 = vpop.f32.mrf.mxu0
  %v2146 = vadd.f32 %v2086, %v2145
  %v2147 = vpop.f32.mrf.mxu0
  %v2148 = vadd.f32 %v2086, %v2147
  %2149 = vdwg.mxu0
  %v2150 = vld [vmem:[%s63] sm:$0xf]
  %v2151 = vld [vmem:[%s63 + $0x4] sm:$0xf]
  %v2152 = vld [vmem:[%s63 + $0x8] sm:$0xf]
  %v2153 = vld [vmem:[%s63 + $0xc] sm:$0xf]
  %v2154 = vld [vmem:[%s63 + $0x10] sm:$0xf]
  %v2155 = vld [vmem:[%s63 + $0x14] sm:$0xf]
  %v2156 = vld [vmem:[%s63 + $0x18] sm:$0xf]
  %v2157 = vld [vmem:[%s63 + $0x1c] sm:$0xf]
  %v2158 = vld [vmem:[%s63 + $0x20] sm:$0xf]
  %v2159 = vld [vmem:[%s63 + $0x24] sm:$0xf]
  %v2160 = vld [vmem:[%s63 + $0x28] sm:$0xf]
  %v2161 = vld [vmem:[%s63 + $0x2c] sm:$0xf]
  %v2162 = vld [vmem:[%s63 + $0x30] sm:$0xf]
  %v2163 = vld [vmem:[%s63 + $0x34] sm:$0xf]
  %v2164 = vld [vmem:[%s63 + $0x38] sm:$0xf]
  %v2165 = vld [vmem:[%s63 + $0x3c] sm:$0xf]
  %v2166 = vld [vmem:[%s65] sm:$0x1]
  %v2168 = vperm.slane %v2166, 0
  %v2186 = vunpack.c.l.b16 %v2150
  %v2187 = vunpack.c.l.b16 %v2151
  %v2188 = vunpack.c.l.b16 %v2152
  %v2189 = vunpack.c.l.b16 %v2153
  %v2190 = vunpack.c.l.b16 %v2154
  %v2191 = vunpack.c.l.b16 %v2155
  %v2192 = vunpack.c.l.b16 %v2156
  %v2193 = vunpack.c.l.b16 %v2157
  %v2194 = vunpack.c.l.b16 %v2158
  %v2195 = vunpack.c.l.b16 %v2159
  %v2196 = vunpack.c.l.b16 %v2160
  %v2197 = vunpack.c.l.b16 %v2161
  %v2198 = vunpack.c.l.b16 %v2162
  %v2199 = vunpack.c.l.b16 %v2163
  %v2200 = vunpack.c.l.b16 %v2164
  %v2201 = vunpack.c.l.b16 %v2165
  %v2202 = vpack.c.b16 %v2187, %v2186
  %v2203 = vpack.c.b16 %v2189, %v2188
  %v2204 = vpack.c.b16 %v2191, %v2190
  %v2205 = vpack.c.b16 %v2193, %v2192
  %v2206 = vpack.c.b16 %v2195, %v2194
  %v2207 = vpack.c.b16 %v2197, %v2196
  %v2208 = vpack.c.b16 %v2199, %v2198
  %v2209 = vpack.c.b16 %v2201, %v2200
  %2218 = vmatpush.bf16.msra.mxu0 %v2209
  %2219 = vmatpush.bf16.msra.mxu0 %v2208
  %2220 = vmatpush.bf16.msra.mxu0 %v2207
  %2221 = vmatpush.bf16.msra.mxu0 %v2206
  %2222 = vmatpush.bf16.msra.mxu0 %v2205
  %2223 = vmatpush.bf16.msra.mxu0 %v2204
  %2224 = vmatpush.bf16.msra.mxu0 %v2203
  %2225 = vmatpush.bf16.msra.mxu0 %v2202
  %2226 = vmatmul.bf16.gmra.mxu0 %v2067
  %v2227 = vpop.f32.mrf.mxu0
  %v2228 = vadd.f32 %v2168, %v2227
  %v2229 = vpop.f32.mrf.mxu0
  %v2230 = vadd.f32 %v2168, %v2229
  %2231 = vdwg.mxu0
  %v2232 = vld [vmem:[%s67] sm:$0xf]
  %v2233 = vld [vmem:[%s67 + $0x4] sm:$0xf]
  %v2234 = vld [vmem:[%s67 + $0x8] sm:$0xf]
  %v2235 = vld [vmem:[%s67 + $0xc] sm:$0xf]
  %v2236 = vld [vmem:[%s67 + $0x10] sm:$0xf]
  %v2237 = vld [vmem:[%s67 + $0x14] sm:$0xf]
  %v2238 = vld [vmem:[%s67 + $0x18] sm:$0xf]
  %v2239 = vld [vmem:[%s67 + $0x1c] sm:$0xf]
  %v2240 = vld [vmem:[%s67 + $0x20] sm:$0xf]
  %v2241 = vld [vmem:[%s67 + $0x24] sm:$0xf]
  %v2242 = vld [vmem:[%s67 + $0x28] sm:$0xf]
  %v2243 = vld [vmem:[%s67 + $0x2c] sm:$0xf]
  %v2244 = vld [vmem:[%s67 + $0x30] sm:$0xf]
  %v2245 = vld [vmem:[%s67 + $0x34] sm:$0xf]
  %v2246 = vld [vmem:[%s67 + $0x38] sm:$0xf]
  %v2247 = vld [vmem:[%s67 + $0x3c] sm:$0xf]
  %v2248 = vld [vmem:[%s69] sm:$0x1]
  %v2250 = vperm.slane %v2248, 0
  %v2268 = vunpack.c.l.b16 %v2232
  %v2269 = vunpack.c.l.b16 %v2233
  %v2270 = vunpack.c.l.b16 %v2234
  %v2271 = vunpack.c.l.b16 %v2235
  %v2272 = vunpack.c.l.b16 %v2236
  %v2273 = vunpack.c.l.b16 %v2237
  %v2274 = vunpack.c.l.b16 %v2238
  %v2275 = vunpack.c.l.b16 %v2239
  %v2276 = vunpack.c.l.b16 %v2240
  %v2277 = vunpack.c.l.b16 %v2241
  %v2278 = vunpack.c.l.b16 %v2242
  %v2279 = vunpack.c.l.b16 %v2243
  %v2280 = vunpack.c.l.b16 %v2244
  %v2281 = vunpack.c.l.b16 %v2245
  %v2282 = vunpack.c.l.b16 %v2246
  %v2283 = vunpack.c.l.b16 %v2247
  %v2284 = vpack.c.b16 %v2269, %v2268
  %v2285 = vpack.c.b16 %v2271, %v2270
  %v2286 = vpack.c.b16 %v2273, %v2272
  %v2287 = vpack.c.b16 %v2275, %v2274
  %v2288 = vpack.c.b16 %v2277, %v2276
  %v2289 = vpack.c.b16 %v2279, %v2278
  %v2290 = vpack.c.b16 %v2281, %v2280
  %v2291 = vpack.c.b16 %v2283, %v2282
  %2300 = vmatpush.bf16.msra.mxu0 %v2291
  %2301 = vmatpush.bf16.msra.mxu0 %v2290
  %2302 = vmatpush.bf16.msra.mxu0 %v2289
  %2303 = vmatpush.bf16.msra.mxu0 %v2288
  %2304 = vmatpush.bf16.msra.mxu0 %v2287
  %2305 = vmatpush.bf16.msra.mxu0 %v2286
  %2306 = vmatpush.bf16.msra.mxu0 %v2285
  %2307 = vmatpush.bf16.msra.mxu0 %v2284
  %2308 = vmatmul.bf16.gmra.mxu0 %v2067
  %v2309 = vpop.f32.mrf.mxu0
  %v2310 = vadd.f32 %v2250, %v2309
  %v2311 = vpop.f32.mrf.mxu0
  %v2312 = vadd.f32 %v2250, %v2311
  %2313 = vdwg.mxu0
  %v2314 = vld [vmem:[%s71] sm:$0xf]
  %v2315 = vld [vmem:[%s71 + $0x4] sm:$0xf]
  %v2316 = vld [vmem:[%s71 + $0x8] sm:$0xf]
  %v2317 = vld [vmem:[%s71 + $0xc] sm:$0xf]
  %v2318 = vld [vmem:[%s71 + $0x10] sm:$0xf]
  %v2319 = vld [vmem:[%s71 + $0x14] sm:$0xf]
  %v2320 = vld [vmem:[%s71 + $0x18] sm:$0xf]
  %v2321 = vld [vmem:[%s71 + $0x1c] sm:$0xf]
  %v2322 = vld [vmem:[%s71 + $0x20] sm:$0xf]
  %v2323 = vld [vmem:[%s71 + $0x24] sm:$0xf]
  %v2324 = vld [vmem:[%s71 + $0x28] sm:$0xf]
  %v2325 = vld [vmem:[%s71 + $0x2c] sm:$0xf]
  %v2326 = vld [vmem:[%s71 + $0x30] sm:$0xf]
  %v2327 = vld [vmem:[%s71 + $0x34] sm:$0xf]
  %v2328 = vld [vmem:[%s71 + $0x38] sm:$0xf]
  %v2329 = vld [vmem:[%s71 + $0x3c] sm:$0xf]
  %v2330 = vld [vmem:[%s73] sm:$0x1]
  %v2332 = vperm.slane %v2330, 0
  %v2350 = vunpack.c.l.b16 %v2314
  %v2351 = vunpack.c.l.b16 %v2315
  %v2352 = vunpack.c.l.b16 %v2316
  %v2353 = vunpack.c.l.b16 %v2317
  %v2354 = vunpack.c.l.b16 %v2318
  %v2355 = vunpack.c.l.b16 %v2319
  %v2356 = vunpack.c.l.b16 %v2320
  %v2357 = vunpack.c.l.b16 %v2321
  %v2358 = vunpack.c.l.b16 %v2322
  %v2359 = vunpack.c.l.b16 %v2323
  %v2360 = vunpack.c.l.b16 %v2324
  %v2361 = vunpack.c.l.b16 %v2325
  %v2362 = vunpack.c.l.b16 %v2326
  %v2363 = vunpack.c.l.b16 %v2327
  %v2364 = vunpack.c.l.b16 %v2328
  %v2365 = vunpack.c.l.b16 %v2329
  %v2366 = vpack.c.b16 %v2351, %v2350
  %v2367 = vpack.c.b16 %v2353, %v2352
  %v2368 = vpack.c.b16 %v2355, %v2354
  %v2369 = vpack.c.b16 %v2357, %v2356
  %v2370 = vpack.c.b16 %v2359, %v2358
  %v2371 = vpack.c.b16 %v2361, %v2360
  %v2372 = vpack.c.b16 %v2363, %v2362
  %v2373 = vpack.c.b16 %v2365, %v2364
  %2382 = vmatpush.bf16.msra.mxu0 %v2373
  %2383 = vmatpush.bf16.msra.mxu0 %v2372
  %2384 = vmatpush.bf16.msra.mxu0 %v2371
  %2385 = vmatpush.bf16.msra.mxu0 %v2370
  %2386 = vmatpush.bf16.msra.mxu0 %v2369
  %2387 = vmatpush.bf16.msra.mxu0 %v2368
  %2388 = vmatpush.bf16.msra.mxu0 %v2367
  %2389 = vmatpush.bf16.msra.mxu0 %v2366
  %2390 = vmatmul.bf16.gmra.mxu0 %v2067
  %v2391 = vpop.f32.mrf.mxu0
  %v2392 = vadd.f32 %v2332, %v2391
  %v2393 = vpop.f32.mrf.mxu0
  %v2394 = vadd.f32 %v2332, %v2393
  %2395 = vdwg.mxu0
  %v2396 = vpack.c.bf16 %v2230, %v2228
  %v2397 = vpack.c.bf16 %v2312, %v2310
  %v2399 = vsel %vm843, %v2396, 0
  %v2402 = vsel %vm843, %v2397, 0
  %2404 = vmatpush.bf16.xpose.msra.mxu0 0
  %2405 = vmatpush.bf16.xpose.msra.mxu0 0
  %2406 = vmatpush.bf16.xpose.msra.mxu0 0
  %2407 = vmatpush.bf16.xpose.msra.mxu0 0
  %2408 = vmatpush.bf16.xpose.msra.mxu0 0
  %2409 = vmatpush.bf16.xpose.msra.mxu0 0
  %2410 = vmatpush.bf16.xpose.msra.mxu0 0
  %2411 = vmatpush.bf16.xpose.msra.mxu0 %v2402
  %2412 = vmatmul.bf16.gmra.mxu0 %v2399
  %v2413 = vpop.f32.mrf.mxu0
  %v2414 = vadd.f32 %v191, %v2413
  %v2415 = vpop.f32.mrf.mxu0
  %v2416 = vadd.f32 %v192, %v2415
  %2417 = vdwg.mxu0
  %v2418 = vsel %vm193, %v2414, -inf
  %2419 = vmax.xlane.f32.xlu0 %v2418
  %v2420 = vpop.xlane.xlu0 %2419
  %v2421 = vsel %vm193, %v2416, -inf
  %2422 = vmax.xlane.f32.xlu0 %v2421
  %v2423 = vpop.xlane.xlu0 %2422
  %v2424 = vsub.f32 %v2414, %v2420
  %v2425 = vsub.f32 %v2416, %v2423
  %v2426 = vmul.f32 %v2424, 1.442695
  %v2427 = vpow.pop %v2426
  %v2428 = vmul.f32 %v2425, 1.442695
  %v2429 = vpow.pop %v2428
  %v2430 = vsel %vm193, %v2427, 0.0
  %2431 = vadd.xlane.f32.xlu0 %v2430
  %v2432 = vpop.xlane.xlu0 %2431
  %v2433 = vsel %vm193, %v2429, 0.0
  %2434 = vadd.xlane.f32.xlu0 %v2433
  %v2435 = vpop.xlane.xlu0 %2434
  %v2436 = vrcp.pop %v2432
  %v2437 = vrcp.pop %v2435
  %v2438 = vmul.f32 %v2436, %v196
  %v2439 = vmul.f32 %v2437, %v199
  %v2440 = vmul.f32 %v2427, %v2438
  %v2441 = vmul.f32 %v2429, %v2439
  %v2442 = vpack.c.bf16 %v2441, %v2440
  %v2443 = vpack.c.bf16 %v2394, %v2392
  %v2445 = vsel %vm193, %v2442, 0
  %2447 = vmatpush.bf16.msra.mxu0 0
  %2448 = vmatpush.bf16.msra.mxu0 0
  %2449 = vmatpush.bf16.msra.mxu0 0
  %2450 = vmatpush.bf16.msra.mxu0 0
  %2451 = vmatpush.bf16.msra.mxu0 0
  %2452 = vmatpush.bf16.msra.mxu0 0
  %2453 = vmatpush.bf16.msra.mxu0 0
  %2454 = vmatpush.bf16.msra.mxu0 %v2443
  %2455 = vmatmul.bf16.gmra.mxu0 %v2445
  %v2456 = vpop.f32.mrf.mxu0
  %v2457 = vadd.f32 0.0, %v2456
  %v2458 = vpop.f32.mrf.mxu0
  %v2459 = vadd.f32 0.0, %v2458
  %2460 = vdwg.mxu0
  %s2461 = scalar_lea.vmem %s63, 64
  %v2462 = vld [vmem:[%s2461] sm:$0xf]
  %v2463 = vld [vmem:[%s2461 + $0x4] sm:$0xf]
  %v2464 = vld [vmem:[%s2461 + $0x8] sm:$0xf]
  %v2465 = vld [vmem:[%s2461 + $0xc] sm:$0xf]
  %v2466 = vld [vmem:[%s2461 + $0x10] sm:$0xf]
  %v2467 = vld [vmem:[%s2461 + $0x14] sm:$0xf]
  %v2468 = vld [vmem:[%s2461 + $0x18] sm:$0xf]
  %v2469 = vld [vmem:[%s2461 + $0x1c] sm:$0xf]
  %v2470 = vld [vmem:[%s2461 + $0x20] sm:$0xf]
  %v2471 = vld [vmem:[%s2461 + $0x24] sm:$0xf]
  %v2472 = vld [vmem:[%s2461 + $0x28] sm:$0xf]
  %v2473 = vld [vmem:[%s2461 + $0x2c] sm:$0xf]
  %v2474 = vld [vmem:[%s2461 + $0x30] sm:$0xf]
  %v2475 = vld [vmem:[%s2461 + $0x34] sm:$0xf]
  %v2476 = vld [vmem:[%s2461 + $0x38] sm:$0xf]
  %v2477 = vld [vmem:[%s2461 + $0x3c] sm:$0xf]
  %s2478 = scalar_lea.vmem %s65, 1
  %v2479 = vld [vmem:[%s2478] sm:$0x1]
  %v2481 = vperm.slane %v2479, 0
  %v2499 = vunpack.c.l.b16 %v2462
  %v2500 = vunpack.c.l.b16 %v2463
  %v2501 = vunpack.c.l.b16 %v2464
  %v2502 = vunpack.c.l.b16 %v2465
  %v2503 = vunpack.c.l.b16 %v2466
  %v2504 = vunpack.c.l.b16 %v2467
  %v2505 = vunpack.c.l.b16 %v2468
  %v2506 = vunpack.c.l.b16 %v2469
  %v2507 = vunpack.c.l.b16 %v2470
  %v2508 = vunpack.c.l.b16 %v2471
  %v2509 = vunpack.c.l.b16 %v2472
  %v2510 = vunpack.c.l.b16 %v2473
  %v2511 = vunpack.c.l.b16 %v2474
  %v2512 = vunpack.c.l.b16 %v2475
  %v2513 = vunpack.c.l.b16 %v2476
  %v2514 = vunpack.c.l.b16 %v2477
  %v2515 = vpack.c.b16 %v2500, %v2499
  %v2516 = vpack.c.b16 %v2502, %v2501
  %v2517 = vpack.c.b16 %v2504, %v2503
  %v2518 = vpack.c.b16 %v2506, %v2505
  %v2519 = vpack.c.b16 %v2508, %v2507
  %v2520 = vpack.c.b16 %v2510, %v2509
  %v2521 = vpack.c.b16 %v2512, %v2511
  %v2522 = vpack.c.b16 %v2514, %v2513
  %2531 = vmatpush.bf16.msra.mxu0 %v2522
  %2532 = vmatpush.bf16.msra.mxu0 %v2521
  %2533 = vmatpush.bf16.msra.mxu0 %v2520
  %2534 = vmatpush.bf16.msra.mxu0 %v2519
  %2535 = vmatpush.bf16.msra.mxu0 %v2518
  %2536 = vmatpush.bf16.msra.mxu0 %v2517
  %2537 = vmatpush.bf16.msra.mxu0 %v2516
  %2538 = vmatpush.bf16.msra.mxu0 %v2515
  %2539 = vmatmul.bf16.gmra.mxu0 %v2067
  %v2540 = vpop.f32.mrf.mxu0
  %v2541 = vadd.f32 %v2481, %v2540
  %v2542 = vpop.f32.mrf.mxu0
  %v2543 = vadd.f32 %v2481, %v2542
  %2544 = vdwg.mxu0
  %s2545 = scalar_lea.vmem %s67, 64
  %v2546 = vld [vmem:[%s2545] sm:$0xf]
  %v2547 = vld [vmem:[%s2545 + $0x4] sm:$0xf]
  %v2548 = vld [vmem:[%s2545 + $0x8] sm:$0xf]
  %v2549 = vld [vmem:[%s2545 + $0xc] sm:$0xf]
  %v2550 = vld [vmem:[%s2545 + $0x10] sm:$0xf]
  %v2551 = vld [vmem:[%s2545 + $0x14] sm:$0xf]
  %v2552 = vld [vmem:[%s2545 + $0x18] sm:$0xf]
  %v2553 = vld [vmem:[%s2545 + $0x1c] sm:$0xf]
  %v2554 = vld [vmem:[%s2545 + $0x20] sm:$0xf]
  %v2555 = vld [vmem:[%s2545 + $0x24] sm:$0xf]
  %v2556 = vld [vmem:[%s2545 + $0x28] sm:$0xf]
  %v2557 = vld [vmem:[%s2545 + $0x2c] sm:$0xf]
  %v2558 = vld [vmem:[%s2545 + $0x30] sm:$0xf]
  %v2559 = vld [vmem:[%s2545 + $0x34] sm:$0xf]
  %v2560 = vld [vmem:[%s2545 + $0x38] sm:$0xf]
  %v2561 = vld [vmem:[%s2545 + $0x3c] sm:$0xf]
  %s2562 = scalar_lea.vmem %s69, 1
  %v2563 = vld [vmem:[%s2562] sm:$0x1]
  %v2565 = vperm.slane %v2563, 0
  %v2583 = vunpack.c.l.b16 %v2546
  %v2584 = vunpack.c.l.b16 %v2547
  %v2585 = vunpack.c.l.b16 %v2548
  %v2586 = vunpack.c.l.b16 %v2549
  %v2587 = vunpack.c.l.b16 %v2550
  %v2588 = vunpack.c.l.b16 %v2551
  %v2589 = vunpack.c.l.b16 %v2552
  %v2590 = vunpack.c.l.b16 %v2553
  %v2591 = vunpack.c.l.b16 %v2554
  %v2592 = vunpack.c.l.b16 %v2555
  %v2593 = vunpack.c.l.b16 %v2556
  %v2594 = vunpack.c.l.b16 %v2557
  %v2595 = vunpack.c.l.b16 %v2558
  %v2596 = vunpack.c.l.b16 %v2559
  %v2597 = vunpack.c.l.b16 %v2560
  %v2598 = vunpack.c.l.b16 %v2561
  %v2599 = vpack.c.b16 %v2584, %v2583
  %v2600 = vpack.c.b16 %v2586, %v2585
  %v2601 = vpack.c.b16 %v2588, %v2587
  %v2602 = vpack.c.b16 %v2590, %v2589
  %v2603 = vpack.c.b16 %v2592, %v2591
  %v2604 = vpack.c.b16 %v2594, %v2593
  %v2605 = vpack.c.b16 %v2596, %v2595
  %v2606 = vpack.c.b16 %v2598, %v2597
  %2615 = vmatpush.bf16.msra.mxu0 %v2606
  %2616 = vmatpush.bf16.msra.mxu0 %v2605
  %2617 = vmatpush.bf16.msra.mxu0 %v2604
  %2618 = vmatpush.bf16.msra.mxu0 %v2603
  %2619 = vmatpush.bf16.msra.mxu0 %v2602
  %2620 = vmatpush.bf16.msra.mxu0 %v2601
  %2621 = vmatpush.bf16.msra.mxu0 %v2600
  %2622 = vmatpush.bf16.msra.mxu0 %v2599
  %2623 = vmatmul.bf16.gmra.mxu0 %v2067
  %v2624 = vpop.f32.mrf.mxu0
  %v2625 = vadd.f32 %v2565, %v2624
  %v2626 = vpop.f32.mrf.mxu0
  %v2627 = vadd.f32 %v2565, %v2626
  %2628 = vdwg.mxu0
  %s2629 = scalar_lea.vmem %s71, 64
  %v2630 = vld [vmem:[%s2629] sm:$0xf]
  %v2631 = vld [vmem:[%s2629 + $0x4] sm:$0xf]
  %v2632 = vld [vmem:[%s2629 + $0x8] sm:$0xf]
  %v2633 = vld [vmem:[%s2629 + $0xc] sm:$0xf]
  %v2634 = vld [vmem:[%s2629 + $0x10] sm:$0xf]
  %v2635 = vld [vmem:[%s2629 + $0x14] sm:$0xf]
  %v2636 = vld [vmem:[%s2629 + $0x18] sm:$0xf]
  %v2637 = vld [vmem:[%s2629 + $0x1c] sm:$0xf]
  %v2638 = vld [vmem:[%s2629 + $0x20] sm:$0xf]
  %v2639 = vld [vmem:[%s2629 + $0x24] sm:$0xf]
  %v2640 = vld [vmem:[%s2629 + $0x28] sm:$0xf]
  %v2641 = vld [vmem:[%s2629 + $0x2c] sm:$0xf]
  %v2642 = vld [vmem:[%s2629 + $0x30] sm:$0xf]
  %v2643 = vld [vmem:[%s2629 + $0x34] sm:$0xf]
  %v2644 = vld [vmem:[%s2629 + $0x38] sm:$0xf]
  %v2645 = vld [vmem:[%s2629 + $0x3c] sm:$0xf]
  %s2646 = scalar_lea.vmem %s73, 1
  %v2647 = vld [vmem:[%s2646] sm:$0x1]
  %v2649 = vperm.slane %v2647, 0
  %v2667 = vunpack.c.l.b16 %v2630
  %v2668 = vunpack.c.l.b16 %v2631
  %v2669 = vunpack.c.l.b16 %v2632
  %v2670 = vunpack.c.l.b16 %v2633
  %v2671 = vunpack.c.l.b16 %v2634
  %v2672 = vunpack.c.l.b16 %v2635
  %v2673 = vunpack.c.l.b16 %v2636
  %v2674 = vunpack.c.l.b16 %v2637
  %v2675 = vunpack.c.l.b16 %v2638
  %v2676 = vunpack.c.l.b16 %v2639
  %v2677 = vunpack.c.l.b16 %v2640
  %v2678 = vunpack.c.l.b16 %v2641
  %v2679 = vunpack.c.l.b16 %v2642
  %v2680 = vunpack.c.l.b16 %v2643
  %v2681 = vunpack.c.l.b16 %v2644
  %v2682 = vunpack.c.l.b16 %v2645
  %v2683 = vpack.c.b16 %v2668, %v2667
  %v2684 = vpack.c.b16 %v2670, %v2669
  %v2685 = vpack.c.b16 %v2672, %v2671
  %v2686 = vpack.c.b16 %v2674, %v2673
  %v2687 = vpack.c.b16 %v2676, %v2675
  %v2688 = vpack.c.b16 %v2678, %v2677
  %v2689 = vpack.c.b16 %v2680, %v2679
  %v2690 = vpack.c.b16 %v2682, %v2681
  %2699 = vmatpush.bf16.msra.mxu0 %v2690
  %2700 = vmatpush.bf16.msra.mxu0 %v2689
  %2701 = vmatpush.bf16.msra.mxu0 %v2688
  %2702 = vmatpush.bf16.msra.mxu0 %v2687
  %2703 = vmatpush.bf16.msra.mxu0 %v2686
  %2704 = vmatpush.bf16.msra.mxu0 %v2685
  %2705 = vmatpush.bf16.msra.mxu0 %v2684
  %2706 = vmatpush.bf16.msra.mxu0 %v2683
  %2707 = vmatmul.bf16.gmra.mxu0 %v2067
  %v2708 = vpop.f32.mrf.mxu0
  %v2709 = vadd.f32 %v2649, %v2708
  %v2710 = vpop.f32.mrf.mxu0
  %v2711 = vadd.f32 %v2649, %v2710
  %2712 = vdwg.mxu0
  %v2713 = vpack.c.bf16 %v2543, %v2541
  %v2714 = vpack.c.bf16 %v2627, %v2625
  %v2716 = vsel %vm843, %v2713, 0
  %v2719 = vsel %vm843, %v2714, 0
  %2721 = vmatpush.bf16.xpose.msra.mxu0 0
  %2722 = vmatpush.bf16.xpose.msra.mxu0 0
  %2723 = vmatpush.bf16.xpose.msra.mxu0 0
  %2724 = vmatpush.bf16.xpose.msra.mxu0 0
  %2725 = vmatpush.bf16.xpose.msra.mxu0 0
  %2726 = vmatpush.bf16.xpose.msra.mxu0 0
  %2727 = vmatpush.bf16.xpose.msra.mxu0 0
  %2728 = vmatpush.bf16.xpose.msra.mxu0 %v2719
  %2729 = vmatmul.bf16.gmra.mxu0 %v2716
  %v2730 = vpop.f32.mrf.mxu0
  %v2731 = vadd.f32 %v191, %v2730
  %v2732 = vpop.f32.mrf.mxu0
  %v2733 = vadd.f32 %v192, %v2732
  %2734 = vdwg.mxu0
  %v2735 = vsel %vm193, %v2731, -inf
  %2736 = vmax.xlane.f32.xlu0 %v2735
  %v2737 = vpop.xlane.xlu0 %2736
  %v2738 = vsel %vm193, %v2733, -inf
  %2739 = vmax.xlane.f32.xlu0 %v2738
  %v2740 = vpop.xlane.xlu0 %2739
  %v2741 = vsub.f32 %v2731, %v2737
  %v2742 = vsub.f32 %v2733, %v2740
  %v2743 = vmul.f32 %v2741, 1.442695
  %v2744 = vpow.pop %v2743
  %v2745 = vmul.f32 %v2742, 1.442695
  %v2746 = vpow.pop %v2745
  %v2747 = vsel %vm193, %v2744, 0.0
  %2748 = vadd.xlane.f32.xlu0 %v2747
  %v2749 = vpop.xlane.xlu0 %2748
  %v2750 = vsel %vm193, %v2746, 0.0
  %2751 = vadd.xlane.f32.xlu0 %v2750
  %v2752 = vpop.xlane.xlu0 %2751
  %v2753 = vrcp.pop %v2749
  %v2754 = vrcp.pop %v2752
  %v2755 = vmul.f32 %v2753, %v196
  %v2756 = vmul.f32 %v2754, %v199
  %v2757 = vmul.f32 %v2744, %v2755
  %v2758 = vmul.f32 %v2746, %v2756
  %v2759 = vpack.c.bf16 %v2758, %v2757
  %v2760 = vpack.c.bf16 %v2711, %v2709
  %v2762 = vsel %vm193, %v2759, 0
  %2764 = vmatpush.bf16.msra.mxu0 0
  %2765 = vmatpush.bf16.msra.mxu0 0
  %2766 = vmatpush.bf16.msra.mxu0 0
  %2767 = vmatpush.bf16.msra.mxu0 0
  %2768 = vmatpush.bf16.msra.mxu0 0
  %2769 = vmatpush.bf16.msra.mxu0 0
  %2770 = vmatpush.bf16.msra.mxu0 0
  %2771 = vmatpush.bf16.msra.mxu0 %v2760
  %2772 = vmatmul.bf16.gmra.mxu0 %v2762
  %v2773 = vpop.f32.mrf.mxu0
  %v2774 = vadd.f32 0.0, %v2773
  %v2775 = vpop.f32.mrf.mxu0
  %v2776 = vadd.f32 0.0, %v2775
  %2777 = vdwg.mxu0
  %2780 = vrot.lane.b32.xlu0 %v2774, 64
  %v2781 = vpop.permute.xlu0 %2780
  %2782 = vrot.lane.b32.xlu0 %v2776, 64
  %v2783 = vpop.permute.xlu0 %2782
  %v2786 = vsel %vm843, %v2457, %v2781
  %v2787 = vsel %vm843, %v2459, %v2783
  %v2788 = vadd.f32 %v2786, %v2146
  %v2789 = vadd.f32 %v2787, %v2148
  %v2790 = vadd.f32 %v2788, %v2789
  %v2791 = vrot.slane %v2790, 4
  %v2792 = vadd.f32 %v2790, %v2791
  %v2793 = vrot.slane %v2792, 2
  %v2794 = vadd.f32 %v2792, %v2793
  %v2795 = vrot.slane %v2794, 1
  %v2796 = vadd.f32 %v2794, %v2795
  %v2797 = vmul.f32 %v2796, 0.0625
  %v2798 = vmul.f32 %v2788, %v2788
  %v2799 = vmul.f32 %v2789, %v2789
  %v2800 = vadd.f32 %v2798, %v2799
  %v2801 = vrot.slane %v2800, 4
  %v2802 = vadd.f32 %v2800, %v2801
  %v2803 = vrot.slane %v2802, 2
  %v2804 = vadd.f32 %v2802, %v2803
  %v2805 = vrot.slane %v2804, 1
  %v2806 = vadd.f32 %v2804, %v2805
  %v2807 = vmul.f32 %v2806, 0.0625
  %v2808 = vmul.f32 %v2797, %v2797
  %v2809 = vsub.f32 %v2807, %v2808
  %v2810 = vmax.f32 %v2809, 0.0
  %v2811 = vsub.f32 %v2788, %v2797
  %v2812 = vsub.f32 %v2789, %v2797
  %v2813 = vadd.f32 %v2810, 1e-05
  %v2814 = vrsqrt.pop %v2813
  %v2815 = vmul.f32 %v2814, %v2813
  %v2816 = vmul.f32 %v2815, %v2814
  %v2817 = vmul.f32 0.5, %v2816
  %v2818 = vsub.f32 1.5, %v2817
  %v2819 = vmul.f32 %v2814, %v2818
  %vm2820 = vweird.f32 %v2813
  %vm2821 = vweird.f32 %v2814
  %vm2822 = vmor %vm2820, %vm2821
  %v2823 = vsel %vm2822, %v2814, %v2819
  %v2824 = vmul.f32 %v2811, %v2823
  %v2825 = vmul.f32 %v2812, %v2823
  %v2826 = vld [vmem:[%s79] sm:$0x1]
  %v2828 = vperm.slane %v2826, 0
  %v2830 = vmul.f32 %v2824, %v2828
  %v2831 = vmul.f32 %v2825, %v2828
  %v2832 = vld [vmem:[%s81] sm:$0x1]
  %v2834 = vperm.slane %v2832, 0
  %v2836 = vadd.f32 %v2830, %v2834
  %v2837 = vadd.f32 %v2831, %v2834
  %vm2838 = vcmp.gt.f32.partialorder %v2836, 0.0
  %vm2839 = vcmp.gt.f32.partialorder %v2837, 0.0
  %v2840 = vmul.f32 %v2836, 0.1
  %v2841 = vmul.f32 %v2837, 0.1
  %v2842 = vsel %vm2838, %v2836, %v2840
  %v2843 = vsel %vm2839, %v2837, %v2841
  %v2844 = vmax.f32 %v2842, 0.0
  %v2845 = vmax.f32 %v2843, 0.0
  %v2846 = vmin.f32 %v2844, 100.0
  %v2847 = vmin.f32 %v2845, 100.0
  %v2848 = vrot.slane %v2846, 4
  %v2849 = vadd.f32 %v2846, %v2848
  %v2850 = vrot.slane %v2849, 2
  %v2851 = vadd.f32 %v2849, %v2850
  %v2852 = vrot.slane %v2851, 1
  %v2853 = vadd.f32 %v2851, %v2852
  %v2854 = vrot.slane %v2847, 4
  %v2855 = vadd.f32 %v2847, %v2854
  %v2856 = vrot.slane %v2855, 2
  %v2857 = vadd.f32 %v2855, %v2856
  %v2858 = vrot.slane %v2857, 1
  %v2859 = vadd.f32 %v2857, %v2858
  %v2860 = vrcp.pop 8.0
  %v2861 = vmul.f32 8.0, %v2860
  %v2862 = vsub.f32 1.0, %v2861
  %v2863 = vmul.f32 %v2860, %v2862
  %v2864 = vadd.f32 %v2860, %v2863
  %vm2865 = vweird.f32 %v2860
  %v2866 = vsel %vm2865, %v2860, %v2864
  %v2867 = vmul.f32 %v2853, %v2866
  %v2868 = vmul.f32 %v2859, %v2866
  %v2869 = vmax.f32 %v2867, 0.0
  %v2870 = vmax.f32 %v2868, 0.0
  %v2871 = vmin.f32 %v2869, 100.0
  %v2872 = vmin.f32 %v2870, 100.0
  %v2873 = vpack.c.bf16 %v2871, %v2871
  %v2874 = vpack.c.bf16 %v2872, %v2872
  %v2875 = vld [vmem:[%s83] sm:$0xf]
  %v2876 = vld [vmem:[%s83 + $0x4] sm:$0xf]
  %v2877 = vld [vmem:[%s83 + $0x8] sm:$0xf]
  %v2878 = vld [vmem:[%s83 + $0xc] sm:$0xf]
  %v2879 = vld [vmem:[%s83 + $0x10] sm:$0xf]
  %v2880 = vld [vmem:[%s83 + $0x14] sm:$0xf]
  %v2881 = vld [vmem:[%s83 + $0x18] sm:$0xf]
  %v2882 = vld [vmem:[%s83 + $0x1c] sm:$0xf]
  %v2883 = vld [vmem:[%s83 + $0x20] sm:$0xf]
  %v2884 = vld [vmem:[%s83 + $0x24] sm:$0xf]
  %v2885 = vld [vmem:[%s83 + $0x28] sm:$0xf]
  %v2886 = vld [vmem:[%s83 + $0x2c] sm:$0xf]
  %v2887 = vld [vmem:[%s83 + $0x30] sm:$0xf]
  %v2888 = vld [vmem:[%s83 + $0x34] sm:$0xf]
  %v2889 = vld [vmem:[%s83 + $0x38] sm:$0xf]
  %v2890 = vld [vmem:[%s83 + $0x3c] sm:$0xf]
  %v2891 = vld [vmem:[%s85] sm:$0x1]
  %v2893 = vperm.slane %v2891, 0
  %v2897 = vunpack.c.l.b16 %v2873
  %v2898 = vunpack.c.l.b16 %v2874
  %vm2899 = vcmask 1041409
  %v2900 = vsel %vm2899, %v2898, %v2897
  %v2901 = vpack.c.b16 %v2900, %v2900
  %v2919 = vunpack.c.l.b16 %v2875
  %v2920 = vunpack.c.l.b16 %v2876
  %v2921 = vunpack.c.l.b16 %v2877
  %v2922 = vunpack.c.l.b16 %v2878
  %v2923 = vunpack.c.l.b16 %v2879
  %v2924 = vunpack.c.l.b16 %v2880
  %v2925 = vunpack.c.l.b16 %v2881
  %v2926 = vunpack.c.l.b16 %v2882
  %v2927 = vunpack.c.l.b16 %v2883
  %v2928 = vunpack.c.l.b16 %v2884
  %v2929 = vunpack.c.l.b16 %v2885
  %v2930 = vunpack.c.l.b16 %v2886
  %v2931 = vunpack.c.l.b16 %v2887
  %v2932 = vunpack.c.l.b16 %v2888
  %v2933 = vunpack.c.l.b16 %v2889
  %v2934 = vunpack.c.l.b16 %v2890
  %v2935 = vpack.c.b16 %v2920, %v2919
  %v2936 = vpack.c.b16 %v2922, %v2921
  %v2937 = vpack.c.b16 %v2924, %v2923
  %v2938 = vpack.c.b16 %v2926, %v2925
  %v2939 = vpack.c.b16 %v2928, %v2927
  %v2940 = vpack.c.b16 %v2930, %v2929
  %v2941 = vpack.c.b16 %v2932, %v2931
  %v2942 = vpack.c.b16 %v2934, %v2933
  %2951 = vmatpush.bf16.msra.mxu0 %v2942
  %2952 = vmatpush.bf16.msra.mxu0 %v2941
  %2953 = vmatpush.bf16.msra.mxu0 %v2940
  %2954 = vmatpush.bf16.msra.mxu0 %v2939
  %2955 = vmatpush.bf16.msra.mxu0 %v2938
  %2956 = vmatpush.bf16.msra.mxu0 %v2937
  %2957 = vmatpush.bf16.msra.mxu0 %v2936
  %2958 = vmatpush.bf16.msra.mxu0 %v2935
  %2959 = vmatmul.bf16.gmra.mxu0 %v2901
  %v2960 = vpop.f32.mrf.mxu0
  %v2961 = vadd.f32 %v2893, %v2960
  %v2962 = vpop.f32.mrf.mxu0
  %2963 = vdwg.mxu0
  %2964 = vst [vmem:[%s87] sm:$0x3] %v2961
  // Predicated region
  $region174: #{graphformer_decoder_forward.1} parent=0 // pred_check
    _
  $region175: #{graphformer_decoder_forward.1} parent=0 // pred_check_branch
    %2966 = sbr.rel (0) target = $region177
  $region176: #{graphformer_decoder_forward.1} parent=0 // pred_region
    _
  $region177: #{graphformer_decoder_forward.1} parent=0 // pred_fallthru
    _
  // Predicated region
  $region178: #{graphformer_decoder_forward.1} parent=0 // pred_check
    _
  $region179: #{graphformer_decoder_forward.1} parent=0 // pred_check_branch
    %2968 = sbr.rel (0) target = $region181
  $region180: #{graphformer_decoder_forward.1} parent=0 // pred_region
    _
  $region181: #{graphformer_decoder_forward.1} parent=0 // pred_fallthru
    _

</llo_original>
